<compile_context>
chip_gen: v5e
topology: v5e:2x2
jax: 0.10.0
libtpu: 0.0.40
codegen_flags: <defaults>
</compile_context>

<pallas_src>
import math

import jax
import jax.numpy as jnp
from jax.experimental import pallas as pl
from jax.experimental.pallas import tpu as pltpu


def make_decoder_kernel(num_layers, hidden, seq, batch_tile, embed, c_out):
    H = hidden
    H3 = 3 * H
    Bt = batch_tile

    def gru_cell(gx, gh, h_prev):
        # PyTorch GRU gate order: r, z, n.
        r = jax.nn.sigmoid(gx[:, :H] + gh[:, :H])
        z = jax.nn.sigmoid(gx[:, H:2 * H] + gh[:, H:2 * H])
        n = jnp.tanh(gx[:, 2 * H:] + r * gh[:, 2 * H:])
        return (1.0 - z) * n + z * h_prev

    def mm(a, w):
        # bf16 (or f32) operands at the MXU, f32 accumulation.
        return jnp.dot(a.astype(w.dtype), w, preferred_element_type=jnp.float32)

    def kernel(*refs):
        n_mid = 3 * (num_layers - 1)
        x_ref = refs[0]                          # (Bt, S, E)
        h0_ref = refs[1]                         # (L, Bt, H)
        wih0e_ref, wih0c_ref, bih0_ref, whh0_ref, bhh0_ref = refs[2:7]
        layer_refs = refs[7:7 + n_mid]           # per layer>=1: [Wih^T|Whh^T], b_ih, b_hh
        wd_ref = refs[7 + n_mid]                 # (H, c_out)
        bd_ref = refs[8 + n_mid]                 # (1, c_out)
        out_ref = refs[9 + n_mid]                # (Bt, S, c_out)
        state_out_ref = refs[10 + n_mid]         # (L, Bt, H)
        tops_ref = refs[11 + n_mid]              # VMEM scratch (S, Bt, H), time-major

        # ---- phase 0: hoist ALL loop-invariant loads / bias broadcasts ------
        W_hh0 = whh0_ref[...]                                    # (H, 3H)
        b_hh0 = jnp.broadcast_to(bhh0_ref[...], (Bt, H3))        # hoisted broadcast
        Ws, b_ihs, b_hhs = [], [], []
        for l in range(1, num_layers):
            wcat_ref, bih_ref, bhh_ref = layer_refs[3 * (l - 1):3 * l]
            Ws.append(wcat_ref[...])                             # (H, 6H)
            b_ihs.append(jnp.broadcast_to(bih_ref[...], (Bt, H3)))
            b_hhs.append(jnp.broadcast_to(bhh_ref[...], (Bt, H3)))
        W_d = wd_ref[...]
        b_d = bd_ref[...]

        # ---- phase 1: hoisted, time-batched, TIME-MAJOR layer-0 projection --
        ctx = h0_ref[num_layers - 1].astype(jnp.float32)         # state[-1], time-invariant
        bias0 = mm(ctx, wih0c_ref[...]) + bih0_ref[...]          # (Bt, 3H), once
        x_tm = pltpu.einshape("bse->sbe", x_ref[...])            # (S, Bt, E) one-time transpose
        gx0 = mm(x_tm.reshape(seq * Bt, embed), wih0e_ref[...])  # (S*Bt, 3H)
        gx0 = gx0.reshape(seq, Bt, H3) + bias0[None]             # time-major, bias folded once

        # ---- phase 2: sequential GRU recurrence (hidden state in vregs) -----
        h = [h0_ref[l].astype(jnp.float32) for l in range(num_layers)]
        for t in range(seq):                                     # short decoder seq: unrolled
            gh0 = mm(h[0], W_hh0) + b_hh0
            h[0] = gru_cell(gx0[t], gh0, h[0])
            inp = h[0]
            for li in range(num_layers - 1):
                l = li + 1
                # Fused gx/gh: one (2*Bt, H) x (H, 6H) MXU push per layer/step.
                both = jnp.concatenate([inp, h[l]], axis=0)      # (2Bt, H)
                fused = mm(both, Ws[li])                         # (2Bt, 6H)
                gx = fused[:Bt, :H3] + b_ihs[li]
                gh = fused[Bt:, H3:] + b_hhs[li]
                h[l] = gru_cell(gx, gh, h[l])
                inp = h[l]
            tops_ref[t] = inp.astype(tops_ref.dtype)             # dense (Bt, H) slab store

        # ---- phase 3: batched dense head + single block store ---------------
        top2d = tops_ref[...].reshape(seq * Bt, H)               # time-major rows
        out2d = mm(top2d, W_d) + b_d                             # (S*Bt, c_out)
        out_tm = out2d.reshape(seq, Bt, c_out)
        out_ref[...] = pltpu.einshape("sbc->bsc", out_tm).astype(out_ref.dtype)
        for l in range(num_layers):
            state_out_ref[l] = h[l].astype(state_out_ref.dtype)

    return kernel


def seq2seq_decoder_forward(X, state, params, *, batch_tile=None,
                            matmul_dtype=jnp.bfloat16,
                            vmem_limit_bytes=None,
                            core_parallel=False,
                            single_buffer_weights=False):
    """Pallas implementation of Seq2SeqDecoder.forward.

    X:      (batch, seq, embed_size)          float32
    state:  (num_layers, batch, num_hiddens)  float32
    Returns (output, new_state): output (batch, seq, c_out), state (L, batch, H).

    matmul_dtype:           bf16 default (f32 accum, f32 gate math); f32 for exactness.
    core_parallel:          use pltpu.CORE_PARALLEL on the batch-tile axis (v7x 2nd TC).
    single_buffer_weights:  pl.Buffered(1) on time-invariant weights (VMEM fit on v7x).
    """
    batch, seq, embed = X.shape
    num_layers, _, hidden = state.shape
    c_out = params["dense_w"].shape[0]
    H3, H6 = 3 * hidden, 6 * hidden
    f32 = jnp.float32

    if batch_tile is None:
        # Fill the MXU M dimension (row-stacking gives 2*Bt rows for layers>=1).
        batch_tile = batch
        for cand in (256, 128, 64):
            if batch > cand and batch % cand == 0:
                batch_tile = cand
                break
    assert batch % batch_tile == 0
    n_tiles = batch // batch_tile

    def w(a):
        return a.astype(matmul_dtype)

    def const_spec(shape):
        idx = lambda b, n=len(shape): (0,) * n
        if single_buffer_weights:
            return pl.BlockSpec(shape, idx, pipeline_mode=pl.Buffered(1))
        return pl.BlockSpec(shape, idx)

    # Layer-0 W_ih acts on cat([x, context]); split it so the concat never
    # materializes and the context projection is computed once per sequence.
    wih0 = params["w_ih_l0"]                                   # (3H, embed + H)
    inputs = [
        X,                                                     # (batch, seq, embed)
        state,                                                 # (L, batch, H)
        w(wih0[:, :embed].T),                                  # (embed, 3H)
        w(wih0[:, embed:].T),                                  # (H, 3H)
        params["b_ih_l0"].reshape(1, H3).astype(f32),
        w(params["w_hh_l0"].T),                                # (H, 3H)
        params["b_hh_l0"].reshape(1, H3).astype(f32),
    ]
    in_specs = [
        pl.BlockSpec((batch_tile, seq, embed), lambda b: (b, 0, 0)),
        pl.BlockSpec((num_layers, batch_tile, hidden), lambda b: (0, b, 0)),
        const_spec((embed, H3)),
        const_spec((hidden, H3)),
        const_spec((1, H3)),
        const_spec((hidden, H3)),
        const_spec((1, H3)),
    ]
    for l in range(1, num_layers):
        # Concatenated [W_ih^T | W_hh^T] for the fused row-stacked matmul.
        w_cat = jnp.concatenate(
            [params[f"w_ih_l{l}"].T, params[f"w_hh_l{l}"].T], axis=1)  # (H, 6H)
        inputs += [
            w(w_cat),
            params[f"b_ih_l{l}"].reshape(1, H3).astype(f32),
            params[f"b_hh_l{l}"].reshape(1, H3).astype(f32),
        ]
        in_specs += [const_spec((hidden, H6)), const_spec((1, H3)), const_spec((1, H3))]
    inputs += [
        w(params["dense_w"].T),                                # (H, c_out)
        params["dense_b"].reshape(1, c_out).astype(f32),
    ]
    in_specs += [const_spec((hidden, c_out)), const_spec((1, c_out))]

    out_shape = (
        jax.ShapeDtypeStruct((batch, seq, c_out), f32),
        jax.ShapeDtypeStruct((num_layers, batch, hidden), f32),
    )
    out_specs = (
        pl.BlockSpec((batch_tile, seq, c_out), lambda b: (b, 0, 0)),
        pl.BlockSpec((num_layers, batch_tile, hidden), lambda b: (0, b, 0)),
    )

    kernel = make_decoder_kernel(num_layers, hidden, seq, batch_tile, embed, c_out)
    dims = (pltpu.CORE_PARALLEL,) if core_parallel else ("parallel",)

    out, new_state = pl.pallas_call(
        kernel,
        out_shape=out_shape,
        grid_spec=pltpu.PrefetchScalarGridSpec(
            num_scalar_prefetch=0,
            grid=(n_tiles,),                       # batch tiles only; time loop is in-kernel
            in_specs=in_specs,
            out_specs=out_specs,
            scratch_shapes=[pltpu.VMEM((seq, batch_tile, hidden), matmul_dtype)],
        ),
        compiler_params=pltpu.CompilerParams(
            dimension_semantics=dims,
            vmem_limit_bytes=vmem_limit_bytes,
        ),
    )(*inputs)
    return out, new_state


# ------------------------- pure-JAX reference ------------------------------ #
def seq2seq_decoder_reference(X, state, params):
    batch, seq, embed = X.shape
    num_layers, _, hidden = state.shape
    Xp = jnp.transpose(X, (1, 0, 2))
    context = jnp.broadcast_to(state[-1], (seq, batch, hidden))
    Xc = jnp.concatenate([Xp, context], axis=2)

    def step(h_all, x_t):
        new_h = []
        inp = x_t
        for layer in range(num_layers):
            wih = params[f"w_ih_l{layer}"]
            whh = params[f"w_hh_l{layer}"]
            bih = params[f"b_ih_l{layer}"]
            bhh = params[f"b_hh_l{layer}"]
            h_prev = h_all[layer]
            gx = inp @ wih.T + bih
            gh = h_prev @ whh.T + bhh
            r = jax.nn.sigmoid(gx[:, :hidden] + gh[:, :hidden])
            z = jax.nn.sigmoid(gx[:, hidden:2 * hidden] + gh[:, hidden:2 * hidden])
            n = jnp.tanh(gx[:, 2 * hidden:] + r * gh[:, 2 * hidden:])
            h_new = (1.0 - z) * n + z * h_prev
            new_h.append(h_new)
            inp = h_new
        return jnp.stack(new_h), inp

    h = state
    outs = []
    for t in range(seq):
        h, top = step(h, Xc[t])
        outs.append(top @ params["dense_w"].T + params["dense_b"])
    out = jnp.stack(outs)  # (seq, batch, c_out)
    return jnp.transpose(out, (1, 0, 2)), h


# ------------------------------- main --------------------------------------- #
if __name__ == "__main__":
    embed_size = 16
    num_hiddens = 32
    num_layers = 2
    c_out = 8
    batch = 4
    seq = 8

    key = jax.random.PRNGKey(0)
    keys = iter(jax.random.split(key, 32))

    def uniform(shape, bound):
        return jax.random.uniform(next(keys), shape, jnp.float32, -bound, bound)

    params = {}
    k = 1.0 / math.sqrt(num_hiddens)
    for layer in range(num_layers):
        in_l = (embed_size + num_hiddens) if layer == 0 else num_hiddens
        params[f"w_ih_l{layer}"] = uniform((3 * num_hiddens, in_l), k)
        params[f"w_hh_l{layer}"] = uniform((3 * num_hiddens, num_hiddens), k)
        params[f"b_ih_l{layer}"] = uniform((3 * num_hiddens,), k)
        params[f"b_hh_l{layer}"] = uniform((3 * num_hiddens,), k)
    params["dense_w"] = uniform((c_out, num_hiddens), k)
    params["dense_b"] = uniform((c_out,), k)

    X = jax.random.normal(next(keys), (batch, seq, embed_size), jnp.float32)
    state = jax.random.normal(next(keys), (num_layers, batch, num_hiddens), jnp.float32)

    ref_out, ref_state = seq2seq_decoder_reference(X, state, params)

    # 1) f32 path (exact semantics), single batch tile.
    out, new_state = seq2seq_decoder_forward(X, state, params,
                                             matmul_dtype=jnp.float32)
    out = jax.block_until_ready(out)
    new_state = jax.block_until_ready(new_state)
    assert out.shape == (batch, seq, c_out)
    assert new_state.shape == (num_layers, batch, num_hiddens)
    assert jnp.allclose(out, ref_out, atol=1e-2, rtol=1e-2)
    assert jnp.allclose(new_state, ref_state, atol=1e-2, rtol=1e-2)

    # 2) f32 path, 2 grid steps (batch_tile=2) -> exercises the batch-tile grid.
    out2, state2 = seq2seq_decoder_forward(X, state, params, batch_tile=2,
                                           matmul_dtype=jnp.float32)
    out2 = jax.block_until_ready(out2)
    state2 = jax.block_until_ready(state2)
    assert jnp.allclose(out2, ref_out, atol=1e-2, rtol=1e-2)
    assert jnp.allclose(state2, ref_state, atol=1e-2, rtol=1e-2)

    # 3) default bf16-at-the-MXU fast path: bf16 operands/tops, f32 accum,
    #    f32 gate nonlinearities.  Looser tolerance.
    out_bf, state_bf = seq2seq_decoder_forward(X, state, params)
    out_bf = jax.block_until_ready(out_bf)
    state_bf = jax.block_until_ready(state_bf)
    assert jnp.allclose(out_bf, ref_out, atol=1e-1, rtol=1e-1)
    assert jnp.allclose(state_bf, ref_state, atol=1e-1, rtol=1e-1)

    print("KERNEL_OK")
</pallas_src>

<mosaic_0001>
module attributes {stable_mosaic.version = 11 : i64} {
  func.func @kernel(%arg0: i32, %arg1: memref<4x8x16xf32, #tpu.memory_space<vmem>>, %arg2: memref<2x4x32xf32, #tpu.memory_space<vmem>>, %arg3: memref<16x96xf32, #tpu.memory_space<vmem>>, %arg4: memref<32x96xf32, #tpu.memory_space<vmem>>, %arg5: memref<1x96xf32, #tpu.memory_space<vmem>>, %arg6: memref<32x96xf32, #tpu.memory_space<vmem>>, %arg7: memref<1x96xf32, #tpu.memory_space<vmem>>, %arg8: memref<32x192xf32, #tpu.memory_space<vmem>>, %arg9: memref<1x96xf32, #tpu.memory_space<vmem>>, %arg10: memref<1x96xf32, #tpu.memory_space<vmem>>, %arg11: memref<32x8xf32, #tpu.memory_space<vmem>>, %arg12: memref<1x8xf32, #tpu.memory_space<vmem>>, %arg13: memref<4x8x8xf32, #tpu.memory_space<vmem>>, %arg14: memref<2x4x32xf32, #tpu.memory_space<vmem>>, %arg15: memref<8x4x32xf32, #tpu.memory_space<vmem>>) attributes {dimension_semantics = [#tpu.dimension_semantics<parallel>], iteration_bounds = array<i64: 1>, scalar_prefetch = 0 : i64, scratch_operands = 1 : i64, tpu.core_type = #tpu.core_type<tc>, window_params = [{transform_indices = @transform_0, window_bounds = array<i64: 4, 8, 16>}, {transform_indices = @transform_1, window_bounds = array<i64: 2, 4, 32>}, {pipeline_mode = #tpu.pipeline_mode<synchronous>, transform_indices = @transform_2, window_bounds = array<i64: 16, 96>}, {pipeline_mode = #tpu.pipeline_mode<synchronous>, transform_indices = @transform_3, window_bounds = array<i64: 32, 96>}, {pipeline_mode = #tpu.pipeline_mode<synchronous>, transform_indices = @transform_4, window_bounds = array<i64: 1, 96>}, {pipeline_mode = #tpu.pipeline_mode<synchronous>, transform_indices = @transform_5, window_bounds = array<i64: 32, 96>}, {pipeline_mode = #tpu.pipeline_mode<synchronous>, transform_indices = @transform_6, window_bounds = array<i64: 1, 96>}, {pipeline_mode = #tpu.pipeline_mode<synchronous>, transform_indices = @transform_7, window_bounds = array<i64: 32, 192>}, {pipeline_mode = #tpu.pipeline_mode<synchronous>, transform_indices = @transform_8, window_bounds = array<i64: 1, 96>}, {pipeline_mode = #tpu.pipeline_mode<synchronous>, transform_indices = @transform_9, window_bounds = array<i64: 1, 96>}, {pipeline_mode = #tpu.pipeline_mode<synchronous>, transform_indices = @transform_10, window_bounds = array<i64: 32, 8>}, {pipeline_mode = #tpu.pipeline_mode<synchronous>, transform_indices = @transform_11, window_bounds = array<i64: 1, 8>}, {transform_indices = @transform_12, window_bounds = array<i64: 4, 8, 8>}, {transform_indices = @transform_13, window_bounds = array<i64: 2, 4, 32>}]} {
    %c0 = arith.constant 0 : index
    %c0_0 = arith.constant 0 : index
    %0 = vector.load %arg6[%c0, %c0_0] : memref<32x96xf32, #tpu.memory_space<vmem>>, vector<32x96xf32>
    %c0_1 = arith.constant 0 : index
    %c0_2 = arith.constant 0 : index
    %1 = vector.load %arg7[%c0_1, %c0_2] : memref<1x96xf32, #tpu.memory_space<vmem>>, vector<1x96xf32>
    %2 = vector.shape_cast %1 : vector<1x96xf32> to vector<1x96xf32>
    %3 = vector.broadcast %2 : vector<1x96xf32> to vector<4x96xf32>
    %c0_3 = arith.constant 0 : index
    %c0_4 = arith.constant 0 : index
    %4 = vector.load %arg8[%c0_3, %c0_4] : memref<32x192xf32, #tpu.memory_space<vmem>>, vector<32x192xf32>
    %c0_5 = arith.constant 0 : index
    %c0_6 = arith.constant 0 : index
    %5 = vector.load %arg9[%c0_5, %c0_6] : memref<1x96xf32, #tpu.memory_space<vmem>>, vector<1x96xf32>
    %6 = vector.shape_cast %5 : vector<1x96xf32> to vector<1x96xf32>
    %7 = vector.broadcast %6 : vector<1x96xf32> to vector<4x96xf32>
    %c0_7 = arith.constant 0 : index
    %c0_8 = arith.constant 0 : index
    %8 = vector.load %arg10[%c0_7, %c0_8] : memref<1x96xf32, #tpu.memory_space<vmem>>, vector<1x96xf32>
    %9 = vector.shape_cast %8 : vector<1x96xf32> to vector<1x96xf32>
    %10 = vector.broadcast %9 : vector<1x96xf32> to vector<4x96xf32>
    %c0_9 = arith.constant 0 : index
    %c0_10 = arith.constant 0 : index
    %11 = vector.load %arg11[%c0_9, %c0_10] : memref<32x8xf32, #tpu.memory_space<vmem>>, vector<32x8xf32>
    %c0_11 = arith.constant 0 : index
    %c0_12 = arith.constant 0 : index
    %12 = vector.load %arg12[%c0_11, %c0_12] : memref<1x8xf32, #tpu.memory_space<vmem>>, vector<1x8xf32>
    %c1 = arith.constant 1 : index
    %c0_13 = arith.constant 0 : index
    %c0_14 = arith.constant 0 : index
    %13 = vector.load %arg2[%c1, %c0_13, %c0_14] : memref<2x4x32xf32, #tpu.memory_space<vmem>>, vector<1x4x32xf32>
    %14 = vector.shape_cast %13 : vector<1x4x32xf32> to vector<4x32xf32>
    %c0_15 = arith.constant 0 : index
    %c0_16 = arith.constant 0 : index
    %15 = vector.load %arg4[%c0_15, %c0_16] : memref<32x96xf32, #tpu.memory_space<vmem>>, vector<32x96xf32>
    %cst = arith.constant dense<0.000000e+00> : vector<4x96xf32>
    %16 = tpu.matmul %14, %15, %cst {dimension_numbers = #tpu.dot_dimension_numbers<[1], [0], [0], [1], [0, 0, 1, 1], [], []>} : vector<4x32xf32>, vector<32x96xf32>, vector<4x96xf32> -> vector<4x96xf32>
    %c0_17 = arith.constant 0 : index
    %c0_18 = arith.constant 0 : index
    %17 = vector.load %arg5[%c0_17, %c0_18] : memref<1x96xf32, #tpu.memory_space<vmem>>, vector<1x96xf32>
    %18 = vector.broadcast %17 : vector<1x96xf32> to vector<4x96xf32>
    %19 = arith.addf %16, %18 : vector<4x96xf32>
    %c0_19 = arith.constant 0 : index
    %c0_20 = arith.constant 0 : index
    %c0_21 = arith.constant 0 : index
    %20 = vector.load %arg1[%c0_19, %c0_20, %c0_21] : memref<4x8x16xf32, #tpu.memory_space<vmem>>, vector<4x8x16xf32>
    %21 = tpu.transpose %20, [1, 0, 2] : vector<4x8x16xf32> -> vector<8x4x16xf32>
    %22 = vector.shape_cast %21 : vector<8x4x16xf32> to vector<32x16xf32>
    %c0_22 = arith.constant 0 : index
    %c0_23 = arith.constant 0 : index
    %23 = vector.load %arg3[%c0_22, %c0_23] : memref<16x96xf32, #tpu.memory_space<vmem>>, vector<16x96xf32>
    %cst_24 = arith.constant dense<0.000000e+00> : vector<32x96xf32>
    %24 = tpu.matmul %22, %23, %cst_24 {dimension_numbers = #tpu.dot_dimension_numbers<[1], [0], [0], [1], [0, 0, 1, 1], [], []>} : vector<32x16xf32>, vector<16x96xf32>, vector<32x96xf32> -> vector<32x96xf32>
    %25 = vector.shape_cast %24 : vector<32x96xf32> to vector<8x4x96xf32>
    %26 = vector.shape_cast %19 : vector<4x96xf32> to vector<1x4x96xf32>
    %27 = vector.broadcast %26 : vector<1x4x96xf32> to vector<8x4x96xf32>
    %28 = arith.addf %25, %27 : vector<8x4x96xf32>
    %c0_25 = arith.constant 0 : index
    %c0_26 = arith.constant 0 : index
    %c0_27 = arith.constant 0 : index
    %29 = vector.load %arg2[%c0_25, %c0_26, %c0_27] : memref<2x4x32xf32, #tpu.memory_space<vmem>>, vector<1x4x32xf32>
    %30 = vector.shape_cast %29 : vector<1x4x32xf32> to vector<4x32xf32>
    %c1_28 = arith.constant 1 : index
    %c0_29 = arith.constant 0 : index
    %c0_30 = arith.constant 0 : index
    %31 = vector.load %arg2[%c1_28, %c0_29, %c0_30] : memref<2x4x32xf32, #tpu.memory_space<vmem>>, vector<1x4x32xf32>
    %32 = vector.shape_cast %31 : vector<1x4x32xf32> to vector<4x32xf32>
    %cst_31 = arith.constant dense<0.000000e+00> : vector<4x96xf32>
    %33 = tpu.matmul %30, %0, %cst_31 {dimension_numbers = #tpu.dot_dimension_numbers<[1], [0], [0], [1], [0, 0, 1, 1], [], []>} : vector<4x32xf32>, vector<32x96xf32>, vector<4x96xf32> -> vector<4x96xf32>
    %34 = arith.addf %33, %3 : vector<4x96xf32>
    %35 = vector.extract_strided_slice %28 {offsets = [0, 0, 0], sizes = [1, 4, 96], strides = [1, 1, 1]} : vector<8x4x96xf32> to vector<1x4x96xf32>
    %36 = vector.shape_cast %35 : vector<1x4x96xf32> to vector<4x96xf32>
    %37 = vector.extract_strided_slice %36 {offsets = [0, 0], sizes = [4, 32], strides = [1, 1]} : vector<4x96xf32> to vector<4x32xf32>
    %38 = vector.extract_strided_slice %34 {offsets = [0, 0], sizes = [4, 32], strides = [1, 1]} : vector<4x96xf32> to vector<4x32xf32>
    %39 = arith.addf %37, %38 : vector<4x32xf32>
    %40 = arith.negf %39 : vector<4x32xf32>
    %41 = math.exp %40 : vector<4x32xf32>
    %cst_32 = arith.constant 1.000000e+00 : f32
    %42 = vector.broadcast %cst_32 : f32 to vector<4x32xf32>
    %43 = arith.addf %42, %41 : vector<4x32xf32>
    %44 = arith.divf %42, %43 : vector<4x32xf32>
    %45 = vector.extract_strided_slice %36 {offsets = [0, 32], sizes = [4, 32], strides = [1, 1]} : vector<4x96xf32> to vector<4x32xf32>
    %46 = vector.extract_strided_slice %34 {offsets = [0, 32], sizes = [4, 32], strides = [1, 1]} : vector<4x96xf32> to vector<4x32xf32>
    %47 = arith.addf %45, %46 : vector<4x32xf32>
    %48 = arith.negf %47 : vector<4x32xf32>
    %49 = math.exp %48 : vector<4x32xf32>
    %cst_33 = arith.constant 1.000000e+00 : f32
    %50 = vector.broadcast %cst_33 : f32 to vector<4x32xf32>
    %51 = arith.addf %50, %49 : vector<4x32xf32>
    %52 = arith.divf %50, %51 : vector<4x32xf32>
    %53 = vector.extract_strided_slice %36 {offsets = [0, 64], sizes = [4, 32], strides = [1, 1]} : vector<4x96xf32> to vector<4x32xf32>
    %54 = vector.extract_strided_slice %34 {offsets = [0, 64], sizes = [4, 32], strides = [1, 1]} : vector<4x96xf32> to vector<4x32xf32>
    %55 = arith.mulf %44, %54 : vector<4x32xf32>
    %56 = arith.addf %53, %55 : vector<4x32xf32>
    %57 = math.tanh %56 : vector<4x32xf32>
    %cst_34 = arith.constant 1.000000e+00 : f32
    %58 = vector.broadcast %cst_34 : f32 to vector<4x32xf32>
    %59 = arith.subf %58, %52 : vector<4x32xf32>
    %60 = arith.mulf %59, %57 : vector<4x32xf32>
    %61 = arith.mulf %52, %30 : vector<4x32xf32>
    %62 = arith.addf %60, %61 : vector<4x32xf32>
    %63 = tpu.concatenate %62, %32 in 0 : vector<4x32xf32>, vector<4x32xf32> -> vector<8x32xf32>
    %cst_35 = arith.constant dense<0.000000e+00> : vector<8x192xf32>
    %64 = tpu.matmul %63, %4, %cst_35 {dimension_numbers = #tpu.dot_dimension_numbers<[1], [0], [0], [1], [0, 0, 1, 1], [], []>} : vector<8x32xf32>, vector<32x192xf32>, vector<8x192xf32> -> vector<8x192xf32>
    %65 = vector.extract_strided_slice %64 {offsets = [0, 0], sizes = [4, 96], strides = [1, 1]} : vector<8x192xf32> to vector<4x96xf32>
    %66 = arith.addf %65, %7 : vector<4x96xf32>
    %67 = vector.extract_strided_slice %64 {offsets = [4, 96], sizes = [4, 96], strides = [1, 1]} : vector<8x192xf32> to vector<4x96xf32>
    %68 = arith.addf %67, %10 : vector<4x96xf32>
    %69 = vector.extract_strided_slice %66 {offsets = [0, 0], sizes = [4, 32], strides = [1, 1]} : vector<4x96xf32> to vector<4x32xf32>
    %70 = vector.extract_strided_slice %68 {offsets = [0, 0], sizes = [4, 32], strides = [1, 1]} : vector<4x96xf32> to vector<4x32xf32>
    %71 = arith.addf %69, %70 : vector<4x32xf32>
    %72 = arith.negf %71 : vector<4x32xf32>
    %73 = math.exp %72 : vector<4x32xf32>
    %cst_36 = arith.constant 1.000000e+00 : f32
    %74 = vector.broadcast %cst_36 : f32 to vector<4x32xf32>
    %75 = arith.addf %74, %73 : vector<4x32xf32>
    %76 = arith.divf %74, %75 : vector<4x32xf32>
    %77 = vector.extract_strided_slice %66 {offsets = [0, 32], sizes = [4, 32], strides = [1, 1]} : vector<4x96xf32> to vector<4x32xf32>
    %78 = vector.extract_strided_slice %68 {offsets = [0, 32], sizes = [4, 32], strides = [1, 1]} : vector<4x96xf32> to vector<4x32xf32>
    %79 = arith.addf %77, %78 : vector<4x32xf32>
    %80 = arith.negf %79 : vector<4x32xf32>
    %81 = math.exp %80 : vector<4x32xf32>
    %cst_37 = arith.constant 1.000000e+00 : f32
    %82 = vector.broadcast %cst_37 : f32 to vector<4x32xf32>
    %83 = arith.addf %82, %81 : vector<4x32xf32>
    %84 = arith.divf %82, %83 : vector<4x32xf32>
    %85 = vector.extract_strided_slice %66 {offsets = [0, 64], sizes = [4, 32], strides = [1, 1]} : vector<4x96xf32> to vector<4x32xf32>
    %86 = vector.extract_strided_slice %68 {offsets = [0, 64], sizes = [4, 32], strides = [1, 1]} : vector<4x96xf32> to vector<4x32xf32>
    %87 = arith.mulf %76, %86 : vector<4x32xf32>
    %88 = arith.addf %85, %87 : vector<4x32xf32>
    %89 = math.tanh %88 : vector<4x32xf32>
    %cst_38 = arith.constant 1.000000e+00 : f32
    %90 = vector.broadcast %cst_38 : f32 to vector<4x32xf32>
    %91 = arith.subf %90, %84 : vector<4x32xf32>
    %92 = arith.mulf %91, %89 : vector<4x32xf32>
    %93 = arith.mulf %84, %32 : vector<4x32xf32>
    %94 = arith.addf %92, %93 : vector<4x32xf32>
    %c0_39 = arith.constant 0 : index
    %c0_40 = arith.constant 0 : index
    %c0_41 = arith.constant 0 : index
    %95 = vector.load %arg15[%c0_39, %c0_40, %c0_41] : memref<8x4x32xf32, #tpu.memory_space<vmem>>, vector<1x4x32xf32>
    %96 = vector.shape_cast %95 : vector<1x4x32xf32> to vector<4x32xf32>
    %97 = vector.shape_cast %94 : vector<4x32xf32> to vector<1x4x32xf32>
    tpu.vector_store %arg15[%c0_39, %c0_40, %c0_41], %97 {strides = array<i32>} : memref<8x4x32xf32, #tpu.memory_space<vmem>>, vector<1x4x32xf32>,
    %cst_42 = arith.constant dense<0.000000e+00> : vector<4x96xf32>
    %98 = tpu.matmul %62, %0, %cst_42 {dimension_numbers = #tpu.dot_dimension_numbers<[1], [0], [0], [1], [0, 0, 1, 1], [], []>} : vector<4x32xf32>, vector<32x96xf32>, vector<4x96xf32> -> vector<4x96xf32>
    %99 = arith.addf %98, %3 : vector<4x96xf32>
    %100 = vector.extract_strided_slice %28 {offsets = [1, 0, 0], sizes = [1, 4, 96], strides = [1, 1, 1]} : vector<8x4x96xf32> to vector<1x4x96xf32>
    %101 = vector.shape_cast %100 : vector<1x4x96xf32> to vector<4x96xf32>
    %102 = vector.extract_strided_slice %101 {offsets = [0, 0], sizes = [4, 32], strides = [1, 1]} : vector<4x96xf32> to vector<4x32xf32>
    %103 = vector.extract_strided_slice %99 {offsets = [0, 0], sizes = [4, 32], strides = [1, 1]} : vector<4x96xf32> to vector<4x32xf32>
    %104 = arith.addf %102, %103 : vector<4x32xf32>
    %105 = arith.negf %104 : vector<4x32xf32>
    %106 = math.exp %105 : vector<4x32xf32>
    %cst_43 = arith.constant 1.000000e+00 : f32
    %107 = vector.broadcast %cst_43 : f32 to vector<4x32xf32>
    %108 = arith.addf %107, %106 : vector<4x32xf32>
    %109 = arith.divf %107, %108 : vector<4x32xf32>
    %110 = vector.extract_strided_slice %101 {offsets = [0, 32], sizes = [4, 32], strides = [1, 1]} : vector<4x96xf32> to vector<4x32xf32>
    %111 = vector.extract_strided_slice %99 {offsets = [0, 32], sizes = [4, 32], strides = [1, 1]} : vector<4x96xf32> to vector<4x32xf32>
    %112 = arith.addf %110, %111 : vector<4x32xf32>
    %113 = arith.negf %112 : vector<4x32xf32>
    %114 = math.exp %113 : vector<4x32xf32>
    %cst_44 = arith.constant 1.000000e+00 : f32
    %115 = vector.broadcast %cst_44 : f32 to vector<4x32xf32>
    %116 = arith.addf %115, %114 : vector<4x32xf32>
    %117 = arith.divf %115, %116 : vector<4x32xf32>
    %118 = vector.extract_strided_slice %101 {offsets = [0, 64], sizes = [4, 32], strides = [1, 1]} : vector<4x96xf32> to vector<4x32xf32>
    %119 = vector.extract_strided_slice %99 {offsets = [0, 64], sizes = [4, 32], strides = [1, 1]} : vector<4x96xf32> to vector<4x32xf32>
    %120 = arith.mulf %109, %119 : vector<4x32xf32>
    %121 = arith.addf %118, %120 : vector<4x32xf32>
    %122 = math.tanh %121 : vector<4x32xf32>
    %cst_45 = arith.constant 1.000000e+00 : f32
    %123 = vector.broadcast %cst_45 : f32 to vector<4x32xf32>
    %124 = arith.subf %123, %117 : vector<4x32xf32>
    %125 = arith.mulf %124, %122 : vector<4x32xf32>
    %126 = arith.mulf %117, %62 : vector<4x32xf32>
    %127 = arith.addf %125, %126 : vector<4x32xf32>
    %128 = tpu.concatenate %127, %94 in 0 : vector<4x32xf32>, vector<4x32xf32> -> vector<8x32xf32>
    %cst_46 = arith.constant dense<0.000000e+00> : vector<8x192xf32>
    %129 = tpu.matmul %128, %4, %cst_46 {dimension_numbers = #tpu.dot_dimension_numbers<[1], [0], [0], [1], [0, 0, 1, 1], [], []>} : vector<8x32xf32>, vector<32x192xf32>, vector<8x192xf32> -> vector<8x192xf32>
    %130 = vector.extract_strided_slice %129 {offsets = [0, 0], sizes = [4, 96], strides = [1, 1]} : vector<8x192xf32> to vector<4x96xf32>
    %131 = arith.addf %130, %7 : vector<4x96xf32>
    %132 = vector.extract_strided_slice %129 {offsets = [4, 96], sizes = [4, 96], strides = [1, 1]} : vector<8x192xf32> to vector<4x96xf32>
    %133 = arith.addf %132, %10 : vector<4x96xf32>
    %134 = vector.extract_strided_slice %131 {offsets = [0, 0], sizes = [4, 32], strides = [1, 1]} : vector<4x96xf32> to vector<4x32xf32>
    %135 = vector.extract_strided_slice %133 {offsets = [0, 0], sizes = [4, 32], strides = [1, 1]} : vector<4x96xf32> to vector<4x32xf32>
    %136 = arith.addf %134, %135 : vector<4x32xf32>
    %137 = arith.negf %136 : vector<4x32xf32>
    %138 = math.exp %137 : vector<4x32xf32>
    %cst_47 = arith.constant 1.000000e+00 : f32
    %139 = vector.broadcast %cst_47 : f32 to vector<4x32xf32>
    %140 = arith.addf %139, %138 : vector<4x32xf32>
    %141 = arith.divf %139, %140 : vector<4x32xf32>
    %142 = vector.extract_strided_slice %131 {offsets = [0, 32], sizes = [4, 32], strides = [1, 1]} : vector<4x96xf32> to vector<4x32xf32>
    %143 = vector.extract_strided_slice %133 {offsets = [0, 32], sizes = [4, 32], strides = [1, 1]} : vector<4x96xf32> to vector<4x32xf32>
    %144 = arith.addf %142, %143 : vector<4x32xf32>
    %145 = arith.negf %144 : vector<4x32xf32>
    %146 = math.exp %145 : vector<4x32xf32>
    %cst_48 = arith.constant 1.000000e+00 : f32
    %147 = vector.broadcast %cst_48 : f32 to vector<4x32xf32>
    %148 = arith.addf %147, %146 : vector<4x32xf32>
    %149 = arith.divf %147, %148 : vector<4x32xf32>
    %150 = vector.extract_strided_slice %131 {offsets = [0, 64], sizes = [4, 32], strides = [1, 1]} : vector<4x96xf32> to vector<4x32xf32>
    %151 = vector.extract_strided_slice %133 {offsets = [0, 64], sizes = [4, 32], strides = [1, 1]} : vector<4x96xf32> to vector<4x32xf32>
    %152 = arith.mulf %141, %151 : vector<4x32xf32>
    %153 = arith.addf %150, %152 : vector<4x32xf32>
    %154 = math.tanh %153 : vector<4x32xf32>
    %cst_49 = arith.constant 1.000000e+00 : f32
    %155 = vector.broadcast %cst_49 : f32 to vector<4x32xf32>
    %156 = arith.subf %155, %149 : vector<4x32xf32>
    %157 = arith.mulf %156, %154 : vector<4x32xf32>
    %158 = arith.mulf %149, %94 : vector<4x32xf32>
    %159 = arith.addf %157, %158 : vector<4x32xf32>
    %c1_50 = arith.constant 1 : index
    %c0_51 = arith.constant 0 : index
    %c0_52 = arith.constant 0 : index
    %160 = vector.load %arg15[%c1_50, %c0_51, %c0_52] : memref<8x4x32xf32, #tpu.memory_space<vmem>>, vector<1x4x32xf32>
    %161 = vector.shape_cast %160 : vector<1x4x32xf32> to vector<4x32xf32>
    %162 = vector.shape_cast %159 : vector<4x32xf32> to vector<1x4x32xf32>
    tpu.vector_store %arg15[%c1_50, %c0_51, %c0_52], %162 {strides = array<i32>} : memref<8x4x32xf32, #tpu.memory_space<vmem>>, vector<1x4x32xf32>,
    %cst_53 = arith.constant dense<0.000000e+00> : vector<4x96xf32>
    %163 = tpu.matmul %127, %0, %cst_53 {dimension_numbers = #tpu.dot_dimension_numbers<[1], [0], [0], [1], [0, 0, 1, 1], [], []>} : vector<4x32xf32>, vector<32x96xf32>, vector<4x96xf32> -> vector<4x96xf32>
    %164 = arith.addf %163, %3 : vector<4x96xf32>
    %165 = vector.extract_strided_slice %28 {offsets = [2, 0, 0], sizes = [1, 4, 96], strides = [1, 1, 1]} : vector<8x4x96xf32> to vector<1x4x96xf32>
    %166 = vector.shape_cast %165 : vector<1x4x96xf32> to vector<4x96xf32>
    %167 = vector.extract_strided_slice %166 {offsets = [0, 0], sizes = [4, 32], strides = [1, 1]} : vector<4x96xf32> to vector<4x32xf32>
    %168 = vector.extract_strided_slice %164 {offsets = [0, 0], sizes = [4, 32], strides = [1, 1]} : vector<4x96xf32> to vector<4x32xf32>
    %169 = arith.addf %167, %168 : vector<4x32xf32>
    %170 = arith.negf %169 : vector<4x32xf32>
    %171 = math.exp %170 : vector<4x32xf32>
    %cst_54 = arith.constant 1.000000e+00 : f32
    %172 = vector.broadcast %cst_54 : f32 to vector<4x32xf32>
    %173 = arith.addf %172, %171 : vector<4x32xf32>
    %174 = arith.divf %172, %173 : vector<4x32xf32>
    %175 = vector.extract_strided_slice %166 {offsets = [0, 32], sizes = [4, 32], strides = [1, 1]} : vector<4x96xf32> to vector<4x32xf32>
    %176 = vector.extract_strided_slice %164 {offsets = [0, 32], sizes = [4, 32], strides = [1, 1]} : vector<4x96xf32> to vector<4x32xf32>
    %177 = arith.addf %175, %176 : vector<4x32xf32>
    %178 = arith.negf %177 : vector<4x32xf32>
    %179 = math.exp %178 : vector<4x32xf32>
    %cst_55 = arith.constant 1.000000e+00 : f32
    %180 = vector.broadcast %cst_55 : f32 to vector<4x32xf32>
    %181 = arith.addf %180, %179 : vector<4x32xf32>
    %182 = arith.divf %180, %181 : vector<4x32xf32>
    %183 = vector.extract_strided_slice %166 {offsets = [0, 64], sizes = [4, 32], strides = [1, 1]} : vector<4x96xf32> to vector<4x32xf32>
    %184 = vector.extract_strided_slice %164 {offsets = [0, 64], sizes = [4, 32], strides = [1, 1]} : vector<4x96xf32> to vector<4x32xf32>
    %185 = arith.mulf %174, %184 : vector<4x32xf32>
    %186 = arith.addf %183, %185 : vector<4x32xf32>
    %187 = math.tanh %186 : vector<4x32xf32>
    %cst_56 = arith.constant 1.000000e+00 : f32
    %188 = vector.broadcast %cst_56 : f32 to vector<4x32xf32>
    %189 = arith.subf %188, %182 : vector<4x32xf32>
    %190 = arith.mulf %189, %187 : vector<4x32xf32>
    %191 = arith.mulf %182, %127 : vector<4x32xf32>
    %192 = arith.addf %190, %191 : vector<4x32xf32>
    %193 = tpu.concatenate %192, %159 in 0 : vector<4x32xf32>, vector<4x32xf32> -> vector<8x32xf32>
    %cst_57 = arith.constant dense<0.000000e+00> : vector<8x192xf32>
    %194 = tpu.matmul %193, %4, %cst_57 {dimension_numbers = #tpu.dot_dimension_numbers<[1], [0], [0], [1], [0, 0, 1, 1], [], []>} : vector<8x32xf32>, vector<32x192xf32>, vector<8x192xf32> -> vector<8x192xf32>
    %195 = vector.extract_strided_slice %194 {offsets = [0, 0], sizes = [4, 96], strides = [1, 1]} : vector<8x192xf32> to vector<4x96xf32>
    %196 = arith.addf %195, %7 : vector<4x96xf32>
    %197 = vector.extract_strided_slice %194 {offsets = [4, 96], sizes = [4, 96], strides = [1, 1]} : vector<8x192xf32> to vector<4x96xf32>
    %198 = arith.addf %197, %10 : vector<4x96xf32>
    %199 = vector.extract_strided_slice %196 {offsets = [0, 0], sizes = [4, 32], strides = [1, 1]} : vector<4x96xf32> to vector<4x32xf32>
    %200 = vector.extract_strided_slice %198 {offsets = [0, 0], sizes = [4, 32], strides = [1, 1]} : vector<4x96xf32> to vector<4x32xf32>
    %201 = arith.addf %199, %200 : vector<4x32xf32>
    %202 = arith.negf %201 : vector<4x32xf32>
    %203 = math.exp %202 : vector<4x32xf32>
    %cst_58 = arith.constant 1.000000e+00 : f32
    %204 = vector.broadcast %cst_58 : f32 to vector<4x32xf32>
    %205 = arith.addf %204, %203 : vector<4x32xf32>
    %206 = arith.divf %204, %205 : vector<4x32xf32>
    %207 = vector.extract_strided_slice %196 {offsets = [0, 32], sizes = [4, 32], strides = [1, 1]} : vector<4x96xf32> to vector<4x32xf32>
    %208 = vector.extract_strided_slice %198 {offsets = [0, 32], sizes = [4, 32], strides = [1, 1]} : vector<4x96xf32> to vector<4x32xf32>
    %209 = arith.addf %207, %208 : vector<4x32xf32>
    %210 = arith.negf %209 : vector<4x32xf32>
    %211 = math.exp %210 : vector<4x32xf32>
    %cst_59 = arith.constant 1.000000e+00 : f32
    %212 = vector.broadcast %cst_59 : f32 to vector<4x32xf32>
    %213 = arith.addf %212, %211 : vector<4x32xf32>
    %214 = arith.divf %212, %213 : vector<4x32xf32>
    %215 = vector.extract_strided_slice %196 {offsets = [0, 64], sizes = [4, 32], strides = [1, 1]} : vector<4x96xf32> to vector<4x32xf32>
    %216 = vector.extract_strided_slice %198 {offsets = [0, 64], sizes = [4, 32], strides = [1, 1]} : vector<4x96xf32> to vector<4x32xf32>
    %217 = arith.mulf %206, %216 : vector<4x32xf32>
    %218 = arith.addf %215, %217 : vector<4x32xf32>
    %219 = math.tanh %218 : vector<4x32xf32>
    %cst_60 = arith.constant 1.000000e+00 : f32
    %220 = vector.broadcast %cst_60 : f32 to vector<4x32xf32>
    %221 = arith.subf %220, %214 : vector<4x32xf32>
    %222 = arith.mulf %221, %219 : vector<4x32xf32>
    %223 = arith.mulf %214, %159 : vector<4x32xf32>
    %224 = arith.addf %222, %223 : vector<4x32xf32>
    %c2 = arith.constant 2 : index
    %c0_61 = arith.constant 0 : index
    %c0_62 = arith.constant 0 : index
    %225 = vector.load %arg15[%c2, %c0_61, %c0_62] : memref<8x4x32xf32, #tpu.memory_space<vmem>>, vector<1x4x32xf32>
    %226 = vector.shape_cast %225 : vector<1x4x32xf32> to vector<4x32xf32>
    %227 = vector.shape_cast %224 : vector<4x32xf32> to vector<1x4x32xf32>
    tpu.vector_store %arg15[%c2, %c0_61, %c0_62], %227 {strides = array<i32>} : memref<8x4x32xf32, #tpu.memory_space<vmem>>, vector<1x4x32xf32>,
    %cst_63 = arith.constant dense<0.000000e+00> : vector<4x96xf32>
    %228 = tpu.matmul %192, %0, %cst_63 {dimension_numbers = #tpu.dot_dimension_numbers<[1], [0], [0], [1], [0, 0, 1, 1], [], []>} : vector<4x32xf32>, vector<32x96xf32>, vector<4x96xf32> -> vector<4x96xf32>
    %229 = arith.addf %228, %3 : vector<4x96xf32>
    %230 = vector.extract_strided_slice %28 {offsets = [3, 0, 0], sizes = [1, 4, 96], strides = [1, 1, 1]} : vector<8x4x96xf32> to vector<1x4x96xf32>
    %231 = vector.shape_cast %230 : vector<1x4x96xf32> to vector<4x96xf32>
    %232 = vector.extract_strided_slice %231 {offsets = [0, 0], sizes = [4, 32], strides = [1, 1]} : vector<4x96xf32> to vector<4x32xf32>
    %233 = vector.extract_strided_slice %229 {offsets = [0, 0], sizes = [4, 32], strides = [1, 1]} : vector<4x96xf32> to vector<4x32xf32>
    %234 = arith.addf %232, %233 : vector<4x32xf32>
    %235 = arith.negf %234 : vector<4x32xf32>
    %236 = math.exp %235 : vector<4x32xf32>
    %cst_64 = arith.constant 1.000000e+00 : f32
    %237 = vector.broadcast %cst_64 : f32 to vector<4x32xf32>
    %238 = arith.addf %237, %236 : vector<4x32xf32>
    %239 = arith.divf %237, %238 : vector<4x32xf32>
    %240 = vector.extract_strided_slice %231 {offsets = [0, 32], sizes = [4, 32], strides = [1, 1]} : vector<4x96xf32> to vector<4x32xf32>
    %241 = vector.extract_strided_slice %229 {offsets = [0, 32], sizes = [4, 32], strides = [1, 1]} : vector<4x96xf32> to vector<4x32xf32>
    %242 = arith.addf %240, %241 : vector<4x32xf32>
    %243 = arith.negf %242 : vector<4x32xf32>
    %244 = math.exp %243 : vector<4x32xf32>
    %cst_65 = arith.constant 1.000000e+00 : f32
    %245 = vector.broadcast %cst_65 : f32 to vector<4x32xf32>
    %246 = arith.addf %245, %244 : vector<4x32xf32>
    %247 = arith.divf %245, %246 : vector<4x32xf32>
    %248 = vector.extract_strided_slice %231 {offsets = [0, 64], sizes = [4, 32], strides = [1, 1]} : vector<4x96xf32> to vector<4x32xf32>
    %249 = vector.extract_strided_slice %229 {offsets = [0, 64], sizes = [4, 32], strides = [1, 1]} : vector<4x96xf32> to vector<4x32xf32>
    %250 = arith.mulf %239, %249 : vector<4x32xf32>
    %251 = arith.addf %248, %250 : vector<4x32xf32>
    %252 = math.tanh %251 : vector<4x32xf32>
    %cst_66 = arith.constant 1.000000e+00 : f32
    %253 = vector.broadcast %cst_66 : f32 to vector<4x32xf32>
    %254 = arith.subf %253, %247 : vector<4x32xf32>
    %255 = arith.mulf %254, %252 : vector<4x32xf32>
    %256 = arith.mulf %247, %192 : vector<4x32xf32>
    %257 = arith.addf %255, %256 : vector<4x32xf32>
    %258 = tpu.concatenate %257, %224 in 0 : vector<4x32xf32>, vector<4x32xf32> -> vector<8x32xf32>
    %cst_67 = arith.constant dense<0.000000e+00> : vector<8x192xf32>
    %259 = tpu.matmul %258, %4, %cst_67 {dimension_numbers = #tpu.dot_dimension_numbers<[1], [0], [0], [1], [0, 0, 1, 1], [], []>} : vector<8x32xf32>, vector<32x192xf32>, vector<8x192xf32> -> vector<8x192xf32>
    %260 = vector.extract_strided_slice %259 {offsets = [0, 0], sizes = [4, 96], strides = [1, 1]} : vector<8x192xf32> to vector<4x96xf32>
    %261 = arith.addf %260, %7 : vector<4x96xf32>
    %262 = vector.extract_strided_slice %259 {offsets = [4, 96], sizes = [4, 96], strides = [1, 1]} : vector<8x192xf32> to vector<4x96xf32>
    %263 = arith.addf %262, %10 : vector<4x96xf32>
    %264 = vector.extract_strided_slice %261 {offsets = [0, 0], sizes = [4, 32], strides = [1, 1]} : vector<4x96xf32> to vector<4x32xf32>
    %265 = vector.extract_strided_slice %263 {offsets = [0, 0], sizes = [4, 32], strides = [1, 1]} : vector<4x96xf32> to vector<4x32xf32>
    %266 = arith.addf %264, %265 : vector<4x32xf32>
    %267 = arith.negf %266 : vector<4x32xf32>
    %268 = math.exp %267 : vector<4x32xf32>
    %cst_68 = arith.constant 1.000000e+00 : f32
    %269 = vector.broadcast %cst_68 : f32 to vector<4x32xf32>
    %270 = arith.addf %269, %268 : vector<4x32xf32>
    %271 = arith.divf %269, %270 : vector<4x32xf32>
    %272 = vector.extract_strided_slice %261 {offsets = [0, 32], sizes = [4, 32], strides = [1, 1]} : vector<4x96xf32> to vector<4x32xf32>
    %273 = vector.extract_strided_slice %263 {offsets = [0, 32], sizes = [4, 32], strides = [1, 1]} : vector<4x96xf32> to vector<4x32xf32>
    %274 = arith.addf %272, %273 : vector<4x32xf32>
    %275 = arith.negf %274 : vector<4x32xf32>
    %276 = math.exp %275 : vector<4x32xf32>
    %cst_69 = arith.constant 1.000000e+00 : f32
    %277 = vector.broadcast %cst_69 : f32 to vector<4x32xf32>
    %278 = arith.addf %277, %276 : vector<4x32xf32>
    %279 = arith.divf %277, %278 : vector<4x32xf32>
    %280 = vector.extract_strided_slice %261 {offsets = [0, 64], sizes = [4, 32], strides = [1, 1]} : vector<4x96xf32> to vector<4x32xf32>
    %281 = vector.extract_strided_slice %263 {offsets = [0, 64], sizes = [4, 32], strides = [1, 1]} : vector<4x96xf32> to vector<4x32xf32>
    %282 = arith.mulf %271, %281 : vector<4x32xf32>
    %283 = arith.addf %280, %282 : vector<4x32xf32>
    %284 = math.tanh %283 : vector<4x32xf32>
    %cst_70 = arith.constant 1.000000e+00 : f32
    %285 = vector.broadcast %cst_70 : f32 to vector<4x32xf32>
    %286 = arith.subf %285, %279 : vector<4x32xf32>
    %287 = arith.mulf %286, %284 : vector<4x32xf32>
    %288 = arith.mulf %279, %224 : vector<4x32xf32>
    %289 = arith.addf %287, %288 : vector<4x32xf32>
    %c3 = arith.constant 3 : index
    %c0_71 = arith.constant 0 : index
    %c0_72 = arith.constant 0 : index
    %290 = vector.load %arg15[%c3, %c0_71, %c0_72] : memref<8x4x32xf32, #tpu.memory_space<vmem>>, vector<1x4x32xf32>
    %291 = vector.shape_cast %290 : vector<1x4x32xf32> to vector<4x32xf32>
    %292 = vector.shape_cast %289 : vector<4x32xf32> to vector<1x4x32xf32>
    tpu.vector_store %arg15[%c3, %c0_71, %c0_72], %292 {strides = array<i32>} : memref<8x4x32xf32, #tpu.memory_space<vmem>>, vector<1x4x32xf32>,
    %cst_73 = arith.constant dense<0.000000e+00> : vector<4x96xf32>
    %293 = tpu.matmul %257, %0, %cst_73 {dimension_numbers = #tpu.dot_dimension_numbers<[1], [0], [0], [1], [0, 0, 1, 1], [], []>} : vector<4x32xf32>, vector<32x96xf32>, vector<4x96xf32> -> vector<4x96xf32>
    %294 = arith.addf %293, %3 : vector<4x96xf32>
    %295 = vector.extract_strided_slice %28 {offsets = [4, 0, 0], sizes = [1, 4, 96], strides = [1, 1, 1]} : vector<8x4x96xf32> to vector<1x4x96xf32>
    %296 = vector.shape_cast %295 : vector<1x4x96xf32> to vector<4x96xf32>
    %297 = vector.extract_strided_slice %296 {offsets = [0, 0], sizes = [4, 32], strides = [1, 1]} : vector<4x96xf32> to vector<4x32xf32>
    %298 = vector.extract_strided_slice %294 {offsets = [0, 0], sizes = [4, 32], strides = [1, 1]} : vector<4x96xf32> to vector<4x32xf32>
    %299 = arith.addf %297, %298 : vector<4x32xf32>
    %300 = arith.negf %299 : vector<4x32xf32>
    %301 = math.exp %300 : vector<4x32xf32>
    %cst_74 = arith.constant 1.000000e+00 : f32
    %302 = vector.broadcast %cst_74 : f32 to vector<4x32xf32>
    %303 = arith.addf %302, %301 : vector<4x32xf32>
    %304 = arith.divf %302, %303 : vector<4x32xf32>
    %305 = vector.extract_strided_slice %296 {offsets = [0, 32], sizes = [4, 32], strides = [1, 1]} : vector<4x96xf32> to vector<4x32xf32>
    %306 = vector.extract_strided_slice %294 {offsets = [0, 32], sizes = [4, 32], strides = [1, 1]} : vector<4x96xf32> to vector<4x32xf32>
    %307 = arith.addf %305, %306 : vector<4x32xf32>
    %308 = arith.negf %307 : vector<4x32xf32>
    %309 = math.exp %308 : vector<4x32xf32>
    %cst_75 = arith.constant 1.000000e+00 : f32
    %310 = vector.broadcast %cst_75 : f32 to vector<4x32xf32>
    %311 = arith.addf %310, %309 : vector<4x32xf32>
    %312 = arith.divf %310, %311 : vector<4x32xf32>
    %313 = vector.extract_strided_slice %296 {offsets = [0, 64], sizes = [4, 32], strides = [1, 1]} : vector<4x96xf32> to vector<4x32xf32>
    %314 = vector.extract_strided_slice %294 {offsets = [0, 64], sizes = [4, 32], strides = [1, 1]} : vector<4x96xf32> to vector<4x32xf32>
    %315 = arith.mulf %304, %314 : vector<4x32xf32>
    %316 = arith.addf %313, %315 : vector<4x32xf32>
    %317 = math.tanh %316 : vector<4x32xf32>
    %cst_76 = arith.constant 1.000000e+00 : f32
    %318 = vector.broadcast %cst_76 : f32 to vector<4x32xf32>
    %319 = arith.subf %318, %312 : vector<4x32xf32>
    %320 = arith.mulf %319, %317 : vector<4x32xf32>
    %321 = arith.mulf %312, %257 : vector<4x32xf32>
    %322 = arith.addf %320, %321 : vector<4x32xf32>
    %323 = tpu.concatenate %322, %289 in 0 : vector<4x32xf32>, vector<4x32xf32> -> vector<8x32xf32>
    %cst_77 = arith.constant dense<0.000000e+00> : vector<8x192xf32>
    %324 = tpu.matmul %323, %4, %cst_77 {dimension_numbers = #tpu.dot_dimension_numbers<[1], [0], [0], [1], [0, 0, 1, 1], [], []>} : vector<8x32xf32>, vector<32x192xf32>, vector<8x192xf32> -> vector<8x192xf32>
    %325 = vector.extract_strided_slice %324 {offsets = [0, 0], sizes = [4, 96], strides = [1, 1]} : vector<8x192xf32> to vector<4x96xf32>
    %326 = arith.addf %325, %7 : vector<4x96xf32>
    %327 = vector.extract_strided_slice %324 {offsets = [4, 96], sizes = [4, 96], strides = [1, 1]} : vector<8x192xf32> to vector<4x96xf32>
    %328 = arith.addf %327, %10 : vector<4x96xf32>
    %329 = vector.extract_strided_slice %326 {offsets = [0, 0], sizes = [4, 32], strides = [1, 1]} : vector<4x96xf32> to vector<4x32xf32>
    %330 = vector.extract_strided_slice %328 {offsets = [0, 0], sizes = [4, 32], strides = [1, 1]} : vector<4x96xf32> to vector<4x32xf32>
    %331 = arith.addf %329, %330 : vector<4x32xf32>
    %332 = arith.negf %331 : vector<4x32xf32>
    %333 = math.exp %332 : vector<4x32xf32>
    %cst_78 = arith.constant 1.000000e+00 : f32
    %334 = vector.broadcast %cst_78 : f32 to vector<4x32xf32>
    %335 = arith.addf %334, %333 : vector<4x32xf32>
    %336 = arith.divf %334, %335 : vector<4x32xf32>
    %337 = vector.extract_strided_slice %326 {offsets = [0, 32], sizes = [4, 32], strides = [1, 1]} : vector<4x96xf32> to vector<4x32xf32>
    %338 = vector.extract_strided_slice %328 {offsets = [0, 32], sizes = [4, 32], strides = [1, 1]} : vector<4x96xf32> to vector<4x32xf32>
    %339 = arith.addf %337, %338 : vector<4x32xf32>
    %340 = arith.negf %339 : vector<4x32xf32>
    %341 = math.exp %340 : vector<4x32xf32>
    %cst_79 = arith.constant 1.000000e+00 : f32
    %342 = vector.broadcast %cst_79 : f32 to vector<4x32xf32>
    %343 = arith.addf %342, %341 : vector<4x32xf32>
    %344 = arith.divf %342, %343 : vector<4x32xf32>
    %345 = vector.extract_strided_slice %326 {offsets = [0, 64], sizes = [4, 32], strides = [1, 1]} : vector<4x96xf32> to vector<4x32xf32>
    %346 = vector.extract_strided_slice %328 {offsets = [0, 64], sizes = [4, 32], strides = [1, 1]} : vector<4x96xf32> to vector<4x32xf32>
    %347 = arith.mulf %336, %346 : vector<4x32xf32>
    %348 = arith.addf %345, %347 : vector<4x32xf32>
    %349 = math.tanh %348 : vector<4x32xf32>
    %cst_80 = arith.constant 1.000000e+00 : f32
    %350 = vector.broadcast %cst_80 : f32 to vector<4x32xf32>
    %351 = arith.subf %350, %344 : vector<4x32xf32>
    %352 = arith.mulf %351, %349 : vector<4x32xf32>
    %353 = arith.mulf %344, %289 : vector<4x32xf32>
    %354 = arith.addf %352, %353 : vector<4x32xf32>
    %c4 = arith.constant 4 : index
    %c0_81 = arith.constant 0 : index
    %c0_82 = arith.constant 0 : index
    %355 = vector.load %arg15[%c4, %c0_81, %c0_82] : memref<8x4x32xf32, #tpu.memory_space<vmem>>, vector<1x4x32xf32>
    %356 = vector.shape_cast %355 : vector<1x4x32xf32> to vector<4x32xf32>
    %357 = vector.shape_cast %354 : vector<4x32xf32> to vector<1x4x32xf32>
    tpu.vector_store %arg15[%c4, %c0_81, %c0_82], %357 {strides = array<i32>} : memref<8x4x32xf32, #tpu.memory_space<vmem>>, vector<1x4x32xf32>,
    %cst_83 = arith.constant dense<0.000000e+00> : vector<4x96xf32>
    %358 = tpu.matmul %322, %0, %cst_83 {dimension_numbers = #tpu.dot_dimension_numbers<[1], [0], [0], [1], [0, 0, 1, 1], [], []>} : vector<4x32xf32>, vector<32x96xf32>, vector<4x96xf32> -> vector<4x96xf32>
    %359 = arith.addf %358, %3 : vector<4x96xf32>
    %360 = vector.extract_strided_slice %28 {offsets = [5, 0, 0], sizes = [1, 4, 96], strides = [1, 1, 1]} : vector<8x4x96xf32> to vector<1x4x96xf32>
    %361 = vector.shape_cast %360 : vector<1x4x96xf32> to vector<4x96xf32>
    %362 = vector.extract_strided_slice %361 {offsets = [0, 0], sizes = [4, 32], strides = [1, 1]} : vector<4x96xf32> to vector<4x32xf32>
    %363 = vector.extract_strided_slice %359 {offsets = [0, 0], sizes = [4, 32], strides = [1, 1]} : vector<4x96xf32> to vector<4x32xf32>
    %364 = arith.addf %362, %363 : vector<4x32xf32>
    %365 = arith.negf %364 : vector<4x32xf32>
    %366 = math.exp %365 : vector<4x32xf32>
    %cst_84 = arith.constant 1.000000e+00 : f32
    %367 = vector.broadcast %cst_84 : f32 to vector<4x32xf32>
    %368 = arith.addf %367, %366 : vector<4x32xf32>
    %369 = arith.divf %367, %368 : vector<4x32xf32>
    %370 = vector.extract_strided_slice %361 {offsets = [0, 32], sizes = [4, 32], strides = [1, 1]} : vector<4x96xf32> to vector<4x32xf32>
    %371 = vector.extract_strided_slice %359 {offsets = [0, 32], sizes = [4, 32], strides = [1, 1]} : vector<4x96xf32> to vector<4x32xf32>
    %372 = arith.addf %370, %371 : vector<4x32xf32>
    %373 = arith.negf %372 : vector<4x32xf32>
    %374 = math.exp %373 : vector<4x32xf32>
    %cst_85 = arith.constant 1.000000e+00 : f32
    %375 = vector.broadcast %cst_85 : f32 to vector<4x32xf32>
    %376 = arith.addf %375, %374 : vector<4x32xf32>
    %377 = arith.divf %375, %376 : vector<4x32xf32>
    %378 = vector.extract_strided_slice %361 {offsets = [0, 64], sizes = [4, 32], strides = [1, 1]} : vector<4x96xf32> to vector<4x32xf32>
    %379 = vector.extract_strided_slice %359 {offsets = [0, 64], sizes = [4, 32], strides = [1, 1]} : vector<4x96xf32> to vector<4x32xf32>
    %380 = arith.mulf %369, %379 : vector<4x32xf32>
    %381 = arith.addf %378, %380 : vector<4x32xf32>
    %382 = math.tanh %381 : vector<4x32xf32>
    %cst_86 = arith.constant 1.000000e+00 : f32
    %383 = vector.broadcast %cst_86 : f32 to vector<4x32xf32>
    %384 = arith.subf %383, %377 : vector<4x32xf32>
    %385 = arith.mulf %384, %382 : vector<4x32xf32>
    %386 = arith.mulf %377, %322 : vector<4x32xf32>
    %387 = arith.addf %385, %386 : vector<4x32xf32>
    %388 = tpu.concatenate %387, %354 in 0 : vector<4x32xf32>, vector<4x32xf32> -> vector<8x32xf32>
    %cst_87 = arith.constant dense<0.000000e+00> : vector<8x192xf32>
    %389 = tpu.matmul %388, %4, %cst_87 {dimension_numbers = #tpu.dot_dimension_numbers<[1], [0], [0], [1], [0, 0, 1, 1], [], []>} : vector<8x32xf32>, vector<32x192xf32>, vector<8x192xf32> -> vector<8x192xf32>
    %390 = vector.extract_strided_slice %389 {offsets = [0, 0], sizes = [4, 96], strides = [1, 1]} : vector<8x192xf32> to vector<4x96xf32>
    %391 = arith.addf %390, %7 : vector<4x96xf32>
    %392 = vector.extract_strided_slice %389 {offsets = [4, 96], sizes = [4, 96], strides = [1, 1]} : vector<8x192xf32> to vector<4x96xf32>
    %393 = arith.addf %392, %10 : vector<4x96xf32>
    %394 = vector.extract_strided_slice %391 {offsets = [0, 0], sizes = [4, 32], strides = [1, 1]} : vector<4x96xf32> to vector<4x32xf32>
    %395 = vector.extract_strided_slice %393 {offsets = [0, 0], sizes = [4, 32], strides = [1, 1]} : vector<4x96xf32> to vector<4x32xf32>
    %396 = arith.addf %394, %395 : vector<4x32xf32>
    %397 = arith.negf %396 : vector<4x32xf32>
    %398 = math.exp %397 : vector<4x32xf32>
    %cst_88 = arith.constant 1.000000e+00 : f32
    %399 = vector.broadcast %cst_88 : f32 to vector<4x32xf32>
    %400 = arith.addf %399, %398 : vector<4x32xf32>
    %401 = arith.divf %399, %400 : vector<4x32xf32>
    %402 = vector.extract_strided_slice %391 {offsets = [0, 32], sizes = [4, 32], strides = [1, 1]} : vector<4x96xf32> to vector<4x32xf32>
    %403 = vector.extract_strided_slice %393 {offsets = [0, 32], sizes = [4, 32], strides = [1, 1]} : vector<4x96xf32> to vector<4x32xf32>
    %404 = arith.addf %402, %403 : vector<4x32xf32>
    %405 = arith.negf %404 : vector<4x32xf32>
    %406 = math.exp %405 : vector<4x32xf32>
    %cst_89 = arith.constant 1.000000e+00 : f32
    %407 = vector.broadcast %cst_89 : f32 to vector<4x32xf32>
    %408 = arith.addf %407, %406 : vector<4x32xf32>
    %409 = arith.divf %407, %408 : vector<4x32xf32>
    %410 = vector.extract_strided_slice %391 {offsets = [0, 64], sizes = [4, 32], strides = [1, 1]} : vector<4x96xf32> to vector<4x32xf32>
    %411 = vector.extract_strided_slice %393 {offsets = [0, 64], sizes = [4, 32], strides = [1, 1]} : vector<4x96xf32> to vector<4x32xf32>
    %412 = arith.mulf %401, %411 : vector<4x32xf32>
    %413 = arith.addf %410, %412 : vector<4x32xf32>
    %414 = math.tanh %413 : vector<4x32xf32>
    %cst_90 = arith.constant 1.000000e+00 : f32
    %415 = vector.broadcast %cst_90 : f32 to vector<4x32xf32>
    %416 = arith.subf %415, %409 : vector<4x32xf32>
    %417 = arith.mulf %416, %414 : vector<4x32xf32>
    %418 = arith.mulf %409, %354 : vector<4x32xf32>
    %419 = arith.addf %417, %418 : vector<4x32xf32>
    %c5 = arith.constant 5 : index
    %c0_91 = arith.constant 0 : index
    %c0_92 = arith.constant 0 : index
    %420 = vector.load %arg15[%c5, %c0_91, %c0_92] : memref<8x4x32xf32, #tpu.memory_space<vmem>>, vector<1x4x32xf32>
    %421 = vector.shape_cast %420 : vector<1x4x32xf32> to vector<4x32xf32>
    %422 = vector.shape_cast %419 : vector<4x32xf32> to vector<1x4x32xf32>
    tpu.vector_store %arg15[%c5, %c0_91, %c0_92], %422 {strides = array<i32>} : memref<8x4x32xf32, #tpu.memory_space<vmem>>, vector<1x4x32xf32>,
    %cst_93 = arith.constant dense<0.000000e+00> : vector<4x96xf32>
    %423 = tpu.matmul %387, %0, %cst_93 {dimension_numbers = #tpu.dot_dimension_numbers<[1], [0], [0], [1], [0, 0, 1, 1], [], []>} : vector<4x32xf32>, vector<32x96xf32>, vector<4x96xf32> -> vector<4x96xf32>
    %424 = arith.addf %423, %3 : vector<4x96xf32>
    %425 = vector.extract_strided_slice %28 {offsets = [6, 0, 0], sizes = [1, 4, 96], strides = [1, 1, 1]} : vector<8x4x96xf32> to vector<1x4x96xf32>
    %426 = vector.shape_cast %425 : vector<1x4x96xf32> to vector<4x96xf32>
    %427 = vector.extract_strided_slice %426 {offsets = [0, 0], sizes = [4, 32], strides = [1, 1]} : vector<4x96xf32> to vector<4x32xf32>
    %428 = vector.extract_strided_slice %424 {offsets = [0, 0], sizes = [4, 32], strides = [1, 1]} : vector<4x96xf32> to vector<4x32xf32>
    %429 = arith.addf %427, %428 : vector<4x32xf32>
    %430 = arith.negf %429 : vector<4x32xf32>
    %431 = math.exp %430 : vector<4x32xf32>
    %cst_94 = arith.constant 1.000000e+00 : f32
    %432 = vector.broadcast %cst_94 : f32 to vector<4x32xf32>
    %433 = arith.addf %432, %431 : vector<4x32xf32>
    %434 = arith.divf %432, %433 : vector<4x32xf32>
    %435 = vector.extract_strided_slice %426 {offsets = [0, 32], sizes = [4, 32], strides = [1, 1]} : vector<4x96xf32> to vector<4x32xf32>
    %436 = vector.extract_strided_slice %424 {offsets = [0, 32], sizes = [4, 32], strides = [1, 1]} : vector<4x96xf32> to vector<4x32xf32>
    %437 = arith.addf %435, %436 : vector<4x32xf32>
    %438 = arith.negf %437 : vector<4x32xf32>
    %439 = math.exp %438 : vector<4x32xf32>
    %cst_95 = arith.constant 1.000000e+00 : f32
    %440 = vector.broadcast %cst_95 : f32 to vector<4x32xf32>
    %441 = arith.addf %440, %439 : vector<4x32xf32>
    %442 = arith.divf %440, %441 : vector<4x32xf32>
    %443 = vector.extract_strided_slice %426 {offsets = [0, 64], sizes = [4, 32], strides = [1, 1]} : vector<4x96xf32> to vector<4x32xf32>
    %444 = vector.extract_strided_slice %424 {offsets = [0, 64], sizes = [4, 32], strides = [1, 1]} : vector<4x96xf32> to vector<4x32xf32>
    %445 = arith.mulf %434, %444 : vector<4x32xf32>
    %446 = arith.addf %443, %445 : vector<4x32xf32>
    %447 = math.tanh %446 : vector<4x32xf32>
    %cst_96 = arith.constant 1.000000e+00 : f32
    %448 = vector.broadcast %cst_96 : f32 to vector<4x32xf32>
    %449 = arith.subf %448, %442 : vector<4x32xf32>
    %450 = arith.mulf %449, %447 : vector<4x32xf32>
    %451 = arith.mulf %442, %387 : vector<4x32xf32>
    %452 = arith.addf %450, %451 : vector<4x32xf32>
    %453 = tpu.concatenate %452, %419 in 0 : vector<4x32xf32>, vector<4x32xf32> -> vector<8x32xf32>
    %cst_97 = arith.constant dense<0.000000e+00> : vector<8x192xf32>
    %454 = tpu.matmul %453, %4, %cst_97 {dimension_numbers = #tpu.dot_dimension_numbers<[1], [0], [0], [1], [0, 0, 1, 1], [], []>} : vector<8x32xf32>, vector<32x192xf32>, vector<8x192xf32> -> vector<8x192xf32>
    %455 = vector.extract_strided_slice %454 {offsets = [0, 0], sizes = [4, 96], strides = [1, 1]} : vector<8x192xf32> to vector<4x96xf32>
    %456 = arith.addf %455, %7 : vector<4x96xf32>
    %457 = vector.extract_strided_slice %454 {offsets = [4, 96], sizes = [4, 96], strides = [1, 1]} : vector<8x192xf32> to vector<4x96xf32>
    %458 = arith.addf %457, %10 : vector<4x96xf32>
    %459 = vector.extract_strided_slice %456 {offsets = [0, 0], sizes = [4, 32], strides = [1, 1]} : vector<4x96xf32> to vector<4x32xf32>
    %460 = vector.extract_strided_slice %458 {offsets = [0, 0], sizes = [4, 32], strides = [1, 1]} : vector<4x96xf32> to vector<4x32xf32>
    %461 = arith.addf %459, %460 : vector<4x32xf32>
    %462 = arith.negf %461 : vector<4x32xf32>
    %463 = math.exp %462 : vector<4x32xf32>
    %cst_98 = arith.constant 1.000000e+00 : f32
    %464 = vector.broadcast %cst_98 : f32 to vector<4x32xf32>
    %465 = arith.addf %464, %463 : vector<4x32xf32>
    %466 = arith.divf %464, %465 : vector<4x32xf32>
    %467 = vector.extract_strided_slice %456 {offsets = [0, 32], sizes = [4, 32], strides = [1, 1]} : vector<4x96xf32> to vector<4x32xf32>
    %468 = vector.extract_strided_slice %458 {offsets = [0, 32], sizes = [4, 32], strides = [1, 1]} : vector<4x96xf32> to vector<4x32xf32>
    %469 = arith.addf %467, %468 : vector<4x32xf32>
    %470 = arith.negf %469 : vector<4x32xf32>
    %471 = math.exp %470 : vector<4x32xf32>
    %cst_99 = arith.constant 1.000000e+00 : f32
    %472 = vector.broadcast %cst_99 : f32 to vector<4x32xf32>
    %473 = arith.addf %472, %471 : vector<4x32xf32>
    %474 = arith.divf %472, %473 : vector<4x32xf32>
    %475 = vector.extract_strided_slice %456 {offsets = [0, 64], sizes = [4, 32], strides = [1, 1]} : vector<4x96xf32> to vector<4x32xf32>
    %476 = vector.extract_strided_slice %458 {offsets = [0, 64], sizes = [4, 32], strides = [1, 1]} : vector<4x96xf32> to vector<4x32xf32>
    %477 = arith.mulf %466, %476 : vector<4x32xf32>
    %478 = arith.addf %475, %477 : vector<4x32xf32>
    %479 = math.tanh %478 : vector<4x32xf32>
    %cst_100 = arith.constant 1.000000e+00 : f32
    %480 = vector.broadcast %cst_100 : f32 to vector<4x32xf32>
    %481 = arith.subf %480, %474 : vector<4x32xf32>
    %482 = arith.mulf %481, %479 : vector<4x32xf32>
    %483 = arith.mulf %474, %419 : vector<4x32xf32>
    %484 = arith.addf %482, %483 : vector<4x32xf32>
    %c6 = arith.constant 6 : index
    %c0_101 = arith.constant 0 : index
    %c0_102 = arith.constant 0 : index
    %485 = vector.load %arg15[%c6, %c0_101, %c0_102] : memref<8x4x32xf32, #tpu.memory_space<vmem>>, vector<1x4x32xf32>
    %486 = vector.shape_cast %485 : vector<1x4x32xf32> to vector<4x32xf32>
    %487 = vector.shape_cast %484 : vector<4x32xf32> to vector<1x4x32xf32>
    tpu.vector_store %arg15[%c6, %c0_101, %c0_102], %487 {strides = array<i32>} : memref<8x4x32xf32, #tpu.memory_space<vmem>>, vector<1x4x32xf32>,
    %cst_103 = arith.constant dense<0.000000e+00> : vector<4x96xf32>
    %488 = tpu.matmul %452, %0, %cst_103 {dimension_numbers = #tpu.dot_dimension_numbers<[1], [0], [0], [1], [0, 0, 1, 1], [], []>} : vector<4x32xf32>, vector<32x96xf32>, vector<4x96xf32> -> vector<4x96xf32>
    %489 = arith.addf %488, %3 : vector<4x96xf32>
    %490 = vector.extract_strided_slice %28 {offsets = [7, 0, 0], sizes = [1, 4, 96], strides = [1, 1, 1]} : vector<8x4x96xf32> to vector<1x4x96xf32>
    %491 = vector.shape_cast %490 : vector<1x4x96xf32> to vector<4x96xf32>
    %492 = vector.extract_strided_slice %491 {offsets = [0, 0], sizes = [4, 32], strides = [1, 1]} : vector<4x96xf32> to vector<4x32xf32>
    %493 = vector.extract_strided_slice %489 {offsets = [0, 0], sizes = [4, 32], strides = [1, 1]} : vector<4x96xf32> to vector<4x32xf32>
    %494 = arith.addf %492, %493 : vector<4x32xf32>
    %495 = arith.negf %494 : vector<4x32xf32>
    %496 = math.exp %495 : vector<4x32xf32>
    %cst_104 = arith.constant 1.000000e+00 : f32
    %497 = vector.broadcast %cst_104 : f32 to vector<4x32xf32>
    %498 = arith.addf %497, %496 : vector<4x32xf32>
    %499 = arith.divf %497, %498 : vector<4x32xf32>
    %500 = vector.extract_strided_slice %491 {offsets = [0, 32], sizes = [4, 32], strides = [1, 1]} : vector<4x96xf32> to vector<4x32xf32>
    %501 = vector.extract_strided_slice %489 {offsets = [0, 32], sizes = [4, 32], strides = [1, 1]} : vector<4x96xf32> to vector<4x32xf32>
    %502 = arith.addf %500, %501 : vector<4x32xf32>
    %503 = arith.negf %502 : vector<4x32xf32>
    %504 = math.exp %503 : vector<4x32xf32>
    %cst_105 = arith.constant 1.000000e+00 : f32
    %505 = vector.broadcast %cst_105 : f32 to vector<4x32xf32>
    %506 = arith.addf %505, %504 : vector<4x32xf32>
    %507 = arith.divf %505, %506 : vector<4x32xf32>
    %508 = vector.extract_strided_slice %491 {offsets = [0, 64], sizes = [4, 32], strides = [1, 1]} : vector<4x96xf32> to vector<4x32xf32>
    %509 = vector.extract_strided_slice %489 {offsets = [0, 64], sizes = [4, 32], strides = [1, 1]} : vector<4x96xf32> to vector<4x32xf32>
    %510 = arith.mulf %499, %509 : vector<4x32xf32>
    %511 = arith.addf %508, %510 : vector<4x32xf32>
    %512 = math.tanh %511 : vector<4x32xf32>
    %cst_106 = arith.constant 1.000000e+00 : f32
    %513 = vector.broadcast %cst_106 : f32 to vector<4x32xf32>
    %514 = arith.subf %513, %507 : vector<4x32xf32>
    %515 = arith.mulf %514, %512 : vector<4x32xf32>
    %516 = arith.mulf %507, %452 : vector<4x32xf32>
    %517 = arith.addf %515, %516 : vector<4x32xf32>
    %518 = tpu.concatenate %517, %484 in 0 : vector<4x32xf32>, vector<4x32xf32> -> vector<8x32xf32>
    %cst_107 = arith.constant dense<0.000000e+00> : vector<8x192xf32>
    %519 = tpu.matmul %518, %4, %cst_107 {dimension_numbers = #tpu.dot_dimension_numbers<[1], [0], [0], [1], [0, 0, 1, 1], [], []>} : vector<8x32xf32>, vector<32x192xf32>, vector<8x192xf32> -> vector<8x192xf32>
    %520 = vector.extract_strided_slice %519 {offsets = [0, 0], sizes = [4, 96], strides = [1, 1]} : vector<8x192xf32> to vector<4x96xf32>
    %521 = arith.addf %520, %7 : vector<4x96xf32>
    %522 = vector.extract_strided_slice %519 {offsets = [4, 96], sizes = [4, 96], strides = [1, 1]} : vector<8x192xf32> to vector<4x96xf32>
    %523 = arith.addf %522, %10 : vector<4x96xf32>
    %524 = vector.extract_strided_slice %521 {offsets = [0, 0], sizes = [4, 32], strides = [1, 1]} : vector<4x96xf32> to vector<4x32xf32>
    %525 = vector.extract_strided_slice %523 {offsets = [0, 0], sizes = [4, 32], strides = [1, 1]} : vector<4x96xf32> to vector<4x32xf32>
    %526 = arith.addf %524, %525 : vector<4x32xf32>
    %527 = arith.negf %526 : vector<4x32xf32>
    %528 = math.exp %527 : vector<4x32xf32>
    %cst_108 = arith.constant 1.000000e+00 : f32
    %529 = vector.broadcast %cst_108 : f32 to vector<4x32xf32>
    %530 = arith.addf %529, %528 : vector<4x32xf32>
    %531 = arith.divf %529, %530 : vector<4x32xf32>
    %532 = vector.extract_strided_slice %521 {offsets = [0, 32], sizes = [4, 32], strides = [1, 1]} : vector<4x96xf32> to vector<4x32xf32>
    %533 = vector.extract_strided_slice %523 {offsets = [0, 32], sizes = [4, 32], strides = [1, 1]} : vector<4x96xf32> to vector<4x32xf32>
    %534 = arith.addf %532, %533 : vector<4x32xf32>
    %535 = arith.negf %534 : vector<4x32xf32>
    %536 = math.exp %535 : vector<4x32xf32>
    %cst_109 = arith.constant 1.000000e+00 : f32
    %537 = vector.broadcast %cst_109 : f32 to vector<4x32xf32>
    %538 = arith.addf %537, %536 : vector<4x32xf32>
    %539 = arith.divf %537, %538 : vector<4x32xf32>
    %540 = vector.extract_strided_slice %521 {offsets = [0, 64], sizes = [4, 32], strides = [1, 1]} : vector<4x96xf32> to vector<4x32xf32>
    %541 = vector.extract_strided_slice %523 {offsets = [0, 64], sizes = [4, 32], strides = [1, 1]} : vector<4x96xf32> to vector<4x32xf32>
    %542 = arith.mulf %531, %541 : vector<4x32xf32>
    %543 = arith.addf %540, %542 : vector<4x32xf32>
    %544 = math.tanh %543 : vector<4x32xf32>
    %cst_110 = arith.constant 1.000000e+00 : f32
    %545 = vector.broadcast %cst_110 : f32 to vector<4x32xf32>
    %546 = arith.subf %545, %539 : vector<4x32xf32>
    %547 = arith.mulf %546, %544 : vector<4x32xf32>
    %548 = arith.mulf %539, %484 : vector<4x32xf32>
    %549 = arith.addf %547, %548 : vector<4x32xf32>
    %c7 = arith.constant 7 : index
    %c0_111 = arith.constant 0 : index
    %c0_112 = arith.constant 0 : index
    %550 = vector.load %arg15[%c7, %c0_111, %c0_112] : memref<8x4x32xf32, #tpu.memory_space<vmem>>, vector<1x4x32xf32>
    %551 = vector.shape_cast %550 : vector<1x4x32xf32> to vector<4x32xf32>
    %552 = vector.shape_cast %549 : vector<4x32xf32> to vector<1x4x32xf32>
    tpu.vector_store %arg15[%c7, %c0_111, %c0_112], %552 {strides = array<i32>} : memref<8x4x32xf32, #tpu.memory_space<vmem>>, vector<1x4x32xf32>,
    %c0_113 = arith.constant 0 : index
    %c0_114 = arith.constant 0 : index
    %c0_115 = arith.constant 0 : index
    %553 = vector.load %arg15[%c0_113, %c0_114, %c0_115] : memref<8x4x32xf32, #tpu.memory_space<vmem>>, vector<8x4x32xf32>
    %554 = vector.shape_cast %553 : vector<8x4x32xf32> to vector<32x32xf32>
    %cst_116 = arith.constant dense<0.000000e+00> : vector<32x8xf32>
    %555 = tpu.matmul %554, %11, %cst_116 {dimension_numbers = #tpu.dot_dimension_numbers<[1], [0], [0], [1], [0, 0, 1, 1], [], []>} : vector<32x32xf32>, vector<32x8xf32>, vector<32x8xf32> -> vector<32x8xf32>
    %556 = vector.broadcast %12 : vector<1x8xf32> to vector<32x8xf32>
    %557 = arith.addf %555, %556 : vector<32x8xf32>
    %558 = vector.shape_cast %557 : vector<32x8xf32> to vector<8x4x8xf32>
    %559 = tpu.transpose %558, [1, 0, 2] : vector<8x4x8xf32> -> vector<4x8x8xf32>
    %c0_117 = arith.constant 0 : index
    %c0_118 = arith.constant 0 : index
    %c0_119 = arith.constant 0 : index
    %560 = vector.load %arg13[%c0_117, %c0_118, %c0_119] : memref<4x8x8xf32, #tpu.memory_space<vmem>>, vector<4x8x8xf32>
    tpu.vector_store %arg13[%c0_117, %c0_118, %c0_119], %559 {strides = array<i32>} : memref<4x8x8xf32, #tpu.memory_space<vmem>>, vector<4x8x8xf32>,
    %c0_120 = arith.constant 0 : index
    %c0_121 = arith.constant 0 : index
    %c0_122 = arith.constant 0 : index
    %561 = vector.load %arg14[%c0_120, %c0_121, %c0_122] : memref<2x4x32xf32, #tpu.memory_space<vmem>>, vector<1x4x32xf32>
    %562 = vector.shape_cast %561 : vector<1x4x32xf32> to vector<4x32xf32>
    %563 = vector.shape_cast %517 : vector<4x32xf32> to vector<1x4x32xf32>
    tpu.vector_store %arg14[%c0_120, %c0_121, %c0_122], %563 {strides = array<i32>} : memref<2x4x32xf32, #tpu.memory_space<vmem>>, vector<1x4x32xf32>,
    %c1_123 = arith.constant 1 : index
    %c0_124 = arith.constant 0 : index
    %c0_125 = arith.constant 0 : index
    %564 = vector.load %arg14[%c1_123, %c0_124, %c0_125] : memref<2x4x32xf32, #tpu.memory_space<vmem>>, vector<1x4x32xf32>
    %565 = vector.shape_cast %564 : vector<1x4x32xf32> to vector<4x32xf32>
    %566 = vector.shape_cast %549 : vector<4x32xf32> to vector<1x4x32xf32>
    tpu.vector_store %arg14[%c1_123, %c0_124, %c0_125], %566 {strides = array<i32>} : memref<2x4x32xf32, #tpu.memory_space<vmem>>, vector<1x4x32xf32>,
    return
  }
  func.func @transform_0(%arg0: i32) -> (i32, i32, i32) {
    %c0_i32 = arith.constant 0 : i32
    %c0_i32_0 = arith.constant 0 : i32
    %c0_i32_1 = arith.constant 0 : i32
    return %arg0, %c0_i32, %c0_i32_0 : i32, i32, i32
  }
  func.func @transform_1(%arg0: i32) -> (i32, i32, i32) {
    %c0_i32 = arith.constant 0 : i32
    %c0_i32_0 = arith.constant 0 : i32
    %c0_i32_1 = arith.constant 0 : i32
    return %c0_i32, %arg0, %c0_i32_0 : i32, i32, i32
  }
  func.func @transform_2(%arg0: i32) -> (i32, i32) {
    %c0_i32 = arith.constant 0 : i32
    %c0_i32_0 = arith.constant 0 : i32
    %c0_i32_1 = arith.constant 0 : i32
    return %c0_i32, %c0_i32_0 : i32, i32
  }
  func.func @transform_3(%arg0: i32) -> (i32, i32) {
    %c0_i32 = arith.constant 0 : i32
    %c0_i32_0 = arith.constant 0 : i32
    %c0_i32_1 = arith.constant 0 : i32
    return %c0_i32, %c0_i32_0 : i32, i32
  }
  func.func @transform_4(%arg0: i32) -> (i32, i32) {
    %c0_i32 = arith.constant 0 : i32
    %c0_i32_0 = arith.constant 0 : i32
    %c0_i32_1 = arith.constant 0 : i32
    return %c0_i32, %c0_i32_0 : i32, i32
  }
  func.func @transform_5(%arg0: i32) -> (i32, i32) {
    %c0_i32 = arith.constant 0 : i32
    %c0_i32_0 = arith.constant 0 : i32
    %c0_i32_1 = arith.constant 0 : i32
    return %c0_i32, %c0_i32_0 : i32, i32
  }
  func.func @transform_6(%arg0: i32) -> (i32, i32) {
    %c0_i32 = arith.constant 0 : i32
    %c0_i32_0 = arith.constant 0 : i32
    %c0_i32_1 = arith.constant 0 : i32
    return %c0_i32, %c0_i32_0 : i32, i32
  }
  func.func @transform_7(%arg0: i32) -> (i32, i32) {
    %c0_i32 = arith.constant 0 : i32
    %c0_i32_0 = arith.constant 0 : i32
    %c0_i32_1 = arith.constant 0 : i32
    return %c0_i32, %c0_i32_0 : i32, i32
  }
  func.func @transform_8(%arg0: i32) -> (i32, i32) {
    %c0_i32 = arith.constant 0 : i32
    %c0_i32_0 = arith.constant 0 : i32
    %c0_i32_1 = arith.constant 0 : i32
    return %c0_i32, %c0_i32_0 : i32, i32
  }
  func.func @transform_9(%arg0: i32) -> (i32, i32) {
    %c0_i32 = arith.constant 0 : i32
    %c0_i32_0 = arith.constant 0 : i32
    %c0_i32_1 = arith.constant 0 : i32
    return %c0_i32, %c0_i32_0 : i32, i32
  }
  func.func @transform_10(%arg0: i32) -> (i32, i32) {
    %c0_i32 = arith.constant 0 : i32
    %c0_i32_0 = arith.constant 0 : i32
    %c0_i32_1 = arith.constant 0 : i32
    return %c0_i32, %c0_i32_0 : i32, i32
  }
  func.func @transform_11(%arg0: i32) -> (i32, i32) {
    %c0_i32 = arith.constant 0 : i32
    %c0_i32_0 = arith.constant 0 : i32
    %c0_i32_1 = arith.constant 0 : i32
    return %c0_i32, %c0_i32_0 : i32, i32
  }
  func.func @transform_12(%arg0: i32) -> (i32, i32, i32) {
    %c0_i32 = arith.constant 0 : i32
    %c0_i32_0 = arith.constant 0 : i32
    %c0_i32_1 = arith.constant 0 : i32
    return %arg0, %c0_i32, %c0_i32_0 : i32, i32, i32
  }
  func.func @transform_13(%arg0: i32) -> (i32, i32, i32) {
    %c0_i32 = arith.constant 0 : i32
    %c0_i32_0 = arith.constant 0 : i32
    %c0_i32_1 = arith.constant 0 : i32
    return %c0_i32, %arg0, %c0_i32_0 : i32, i32, i32
  }
}

</mosaic_0001>

<llo_original>
// kernel: tpu_custom_call.1
$region0: #{tpu_custom_call.1}
  #allocation0 [shape = 'u32[]', space=smem, size = 0x4, offset = 0x4, fixed_abs, tag = 'smem constant byte address 0x4 - core index']
  #allocation1 [shape = 'u32[72,128]{1,0:T(1,128)}', space=vmem, size = 0x9000, scoped, tag = 'internal scratch']
  #allocation2 [shape = 'f32[8,4,32]{2,1,0:T(4,128)}', space=vmem, size = 0x4000, scoped, tag = 'scratch operand']
  %s0 = inlined_call_operand.vmem [shape: f32[4,8,16], index: 0, kind: input, shape index: {}]
  %s1 = inlined_call_operand.vmem [shape: f32[2,4,32], index: 1, kind: input, shape index: {}]
  %s2 = inlined_call_operand.hbm [shape: f32[16,96], index: 2, kind: input, shape index: {}]
  %s3 = inlined_call_operand.hbm [shape: f32[32,96], index: 3, kind: input, shape index: {}]
  %s4 = inlined_call_operand.vmem [shape: f32[1,96], index: 4, kind: input, shape index: {}]
  %s5 = inlined_call_operand.hbm [shape: f32[32,96], index: 5, kind: input, shape index: {}]
  %s6 = inlined_call_operand.hbm [shape: f32[1,96], index: 6, kind: input, shape index: {}]
  %s7 = inlined_call_operand.hbm [shape: f32[32,192], index: 7, kind: input, shape index: {}]
  %s8 = inlined_call_operand.hbm [shape: f32[1,96], index: 8, kind: input, shape index: {}]
  %s9 = inlined_call_operand.hbm [shape: f32[1,96], index: 9, kind: input, shape index: {}]
  %s10 = inlined_call_operand.vmem [shape: f32[32,8], index: 10, kind: input, shape index: {}]
  %s11 = inlined_call_operand.vmem [shape: f32[1,8], index: 11, kind: input, shape index: {}]
  %s12 = inlined_call_operand.hbm [shape: f32[4,8,8], index: 12, kind: output, shape index: {0}]
  %s13 = inlined_call_operand.hbm [shape: f32[2,4,32], index: 13, kind: output, shape index: {1}]
  %14 = xla_tuple %s12, %s13
  %s15 = sld [smem:[#allocation0]]
  $region94: #{tpu_custom_call.1} parent=0
    _
  %s17 = ssub.s32 1, %s15
  %s18 = scalar_select 0, %s17, %s15
  $region1: #{tpu_custom_call.1} parent=0
    #allocation3 [shape = 'u8[8192]{0}', space=vmem, size = 0x2000, scoped, tag = 'input window, operand 2, single buffered']
    #allocation4 [shape = 's32[1]{0}', space=sflag, size = 0x4, scoped, tag = 'scoped memory for tpu_custom_call.1']
    #allocation5 [shape = 's32[1]{0}', space=sflag, size = 0x4, scoped, tag = 'scoped memory for tpu_custom_call.1']
    #allocation6 [shape = 'u8[16384]{0}', space=vmem, size = 0x4000, scoped, tag = 'input window, operand 3, single buffered']
    #allocation7 [shape = 's32[1]{0}', space=sflag, size = 0x4, scoped, tag = 'scoped memory for tpu_custom_call.1']
    #allocation8 [shape = 'u8[16384]{0}', space=vmem, size = 0x4000, scoped, tag = 'input window, operand 5, single buffered']
    #allocation9 [shape = 'u8[512]{0}', space=vmem, size = 0x400, scoped, tag = 'input window, operand 6, single buffered']
    #allocation10 [shape = 's32[1]{0}', space=sflag, size = 0x4, scoped, tag = 'scoped memory for tpu_custom_call.1']
    #allocation11 [shape = 'u8[32768]{0}', space=vmem, size = 0x8000, scoped, tag = 'input window, operand 7, single buffered']
    #allocation12 [shape = 'u8[512]{0}', space=vmem, size = 0x400, scoped, tag = 'input window, operand 8, single buffered']
    #allocation13 [shape = 's32[1]{0}', space=sflag, size = 0x4, scoped, tag = 'scoped memory for tpu_custom_call.1']
    #allocation14 [shape = 'u8[512]{0}', space=vmem, size = 0x400, scoped, tag = 'input window, operand 9, single buffered']
    #allocation15 [shape = 'u8[16384]{0}', space=vmem, size = 0x4000, scoped, tag = 'output window, operand 0, single buffered']
    #allocation16 [shape = 'u8[4096]{0}', space=vmem, size = 0x1000, scoped, tag = 'output window, operand 1, single buffered']
    #allocation17 [shape = 's32[1]{0}', space=sflag, size = 0x4, scoped, tag = 'scoped memory for tpu_custom_call.1']
    %19 = vsyncpa [#allocation4], 0
    %20 = vsyncpa [#allocation7], 0
    %21 = vsyncpa [#allocation10], 0
    %22 = vsyncpa [#allocation13], 0
    %23 = vsyncpa [#allocation5], 0
    %24 = vsyncpa [#allocation17], 0
    // Predicated region
    $region2: #{tpu_custom_call.1} parent=1 // pred_check
      _
    $region3: #{tpu_custom_call.1} parent=1 // pred_check_branch
      %26 = sbr.rel (0) target = $region5
    $region4: #{tpu_custom_call.1} parent=1 // pred_region
      _
    $region5: #{tpu_custom_call.1} parent=1 // pred_fallthru
      _
    // Predicated region
    $region6: #{tpu_custom_call.1} parent=1 // pred_check
      _
    $region7: #{tpu_custom_call.1} parent=1 // pred_check_branch
      %28 = sbr.rel (0) target = $region9
    $region8: #{tpu_custom_call.1} parent=1 // pred_region
      _
    $region9: #{tpu_custom_call.1} parent=1 // pred_fallthru
      _
    // Predicated region
    $region10: #{tpu_custom_call.1} parent=1 // pred_check
      _
    $region11: #{tpu_custom_call.1} parent=1 // pred_check_branch
      %30 = sbr.rel (0) target = $region13
    $region12: #{tpu_custom_call.1} parent=1 // pred_region
      %32 = vsyncadd [#allocation4], 0
      %s33 = sshll.u32 %s2, 4
      %s34 = int_to_ptr.hbm [resolvable:$true] %s33
      %s35 = sshll.u32 [#allocation3], 4
      %s36 = int_to_ptr.vmem [resolvable:$true] %s35
      %41 = dma.hbm_to_vmem [thread:$0]  %s34, 256, %s36, [#allocation4], 128, 128, 8
    $region13: #{tpu_custom_call.1} parent=1 // pred_fallthru
      _
    // Predicated region
    $region14: #{tpu_custom_call.1} parent=1 // pred_check
      _
    $region15: #{tpu_custom_call.1} parent=1 // pred_check_branch
      %43 = sbr.rel (0) target = $region17
    $region16: #{tpu_custom_call.1} parent=1 // pred_region
      %45 = vsyncadd [#allocation7], 0
      %s46 = sshll.u32 %s3, 4
      %s47 = int_to_ptr.hbm [resolvable:$true] %s46
      %s48 = sshll.u32 [#allocation6], 4
      %s49 = int_to_ptr.vmem [resolvable:$true] %s48
      %54 = dma.hbm_to_vmem [thread:$0]  %s47, 512, %s49, [#allocation7], 128, 128, 8
    $region17: #{tpu_custom_call.1} parent=1 // pred_fallthru
      _
    // Predicated region
    $region18: #{tpu_custom_call.1} parent=1 // pred_check
      _
    $region19: #{tpu_custom_call.1} parent=1 // pred_check_branch
      %56 = sbr.rel (0) target = $region21
    $region20: #{tpu_custom_call.1} parent=1 // pred_region
      _
    $region21: #{tpu_custom_call.1} parent=1 // pred_fallthru
      _
    // Predicated region
    $region22: #{tpu_custom_call.1} parent=1 // pred_check
      _
    $region23: #{tpu_custom_call.1} parent=1 // pred_check_branch
      %58 = sbr.rel (0) target = $region25
    $region24: #{tpu_custom_call.1} parent=1 // pred_region
      %60 = vsyncadd [#allocation7], 0
      %s61 = sshll.u32 %s5, 4
      %s62 = int_to_ptr.hbm [resolvable:$true] %s61
      %s63 = sshll.u32 [#allocation8], 4
      %s64 = int_to_ptr.vmem [resolvable:$true] %s63
      %69 = dma.hbm_to_vmem [thread:$0]  %s62, 512, %s64, [#allocation7], 128, 128, 8
    $region25: #{tpu_custom_call.1} parent=1 // pred_fallthru
      _
    // Predicated region
    $region26: #{tpu_custom_call.1} parent=1 // pred_check
      _
    $region27: #{tpu_custom_call.1} parent=1 // pred_check_branch
      %71 = sbr.rel (0) target = $region29
    $region28: #{tpu_custom_call.1} parent=1 // pred_region
      %73 = vsyncadd [#allocation10], 0
      %s75 = sshll.u32 %s6, 4
      %s76 = int_to_ptr.hbm [resolvable:$true] %s75
      %s77 = sshll.u32 [#allocation9], 4
      %s78 = int_to_ptr.vmem [resolvable:$true] %s77
      %80 = dma.hbm_to_vmem [thread:$0]  %s76, 16, %s78, [#allocation10]
    $region29: #{tpu_custom_call.1} parent=1 // pred_fallthru
      _
    // Predicated region
    $region30: #{tpu_custom_call.1} parent=1 // pred_check
      _
    $region31: #{tpu_custom_call.1} parent=1 // pred_check_branch
      %82 = sbr.rel (0) target = $region33
    $region32: #{tpu_custom_call.1} parent=1 // pred_region
      %84 = vsyncadd [#allocation10], 0
      %s85 = sshll.u32 %s7, 4
      %s86 = int_to_ptr.hbm [resolvable:$true] %s85
      %s87 = sshll.u32 [#allocation11], 4
      %s88 = int_to_ptr.vmem [resolvable:$true] %s87
      %93 = dma.hbm_to_vmem [thread:$0]  %s86, 1024, %s88, [#allocation10], 256, 256, 16
    $region33: #{tpu_custom_call.1} parent=1 // pred_fallthru
      _
    // Predicated region
    $region34: #{tpu_custom_call.1} parent=1 // pred_check
      _
    $region35: #{tpu_custom_call.1} parent=1 // pred_check_branch
      %95 = sbr.rel (0) target = $region37
    $region36: #{tpu_custom_call.1} parent=1 // pred_region
      %97 = vsyncadd [#allocation13], 0
      %s99 = sshll.u32 %s8, 4
      %s100 = int_to_ptr.hbm [resolvable:$true] %s99
      %s101 = sshll.u32 [#allocation12], 4
      %s102 = int_to_ptr.vmem [resolvable:$true] %s101
      %104 = dma.hbm_to_vmem [thread:$0]  %s100, 16, %s102, [#allocation13]
    $region37: #{tpu_custom_call.1} parent=1 // pred_fallthru
      _
    // Predicated region
    $region38: #{tpu_custom_call.1} parent=1 // pred_check
      _
    $region39: #{tpu_custom_call.1} parent=1 // pred_check_branch
      %106 = sbr.rel (0) target = $region41
    $region40: #{tpu_custom_call.1} parent=1 // pred_region
      %108 = vsyncadd [#allocation13], 0
      %s110 = sshll.u32 %s9, 4
      %s111 = int_to_ptr.hbm [resolvable:$true] %s110
      %s112 = sshll.u32 [#allocation14], 4
      %s113 = int_to_ptr.vmem [resolvable:$true] %s112
      %115 = dma.hbm_to_vmem [thread:$0]  %s111, 16, %s113, [#allocation13]
    $region41: #{tpu_custom_call.1} parent=1 // pred_fallthru
      _
    // Predicated region
    $region42: #{tpu_custom_call.1} parent=1 // pred_check
      _
    $region43: #{tpu_custom_call.1} parent=1 // pred_check_branch
      %117 = sbr.rel (0) target = $region45
    $region44: #{tpu_custom_call.1} parent=1 // pred_region
      _
    $region45: #{tpu_custom_call.1} parent=1 // pred_fallthru
      _
    // Predicated region
    $region46: #{tpu_custom_call.1} parent=1 // pred_check
      _
    $region47: #{tpu_custom_call.1} parent=1 // pred_check_branch
      %119 = sbr.rel (0) target = $region49
    $region48: #{tpu_custom_call.1} parent=1 // pred_region
      _
    $region49: #{tpu_custom_call.1} parent=1 // pred_fallthru
      _
    // Predicated region
    $region50: #{tpu_custom_call.1} parent=1 // pred_check
      _
    $region51: #{tpu_custom_call.1} parent=1 // pred_check_branch
      %121 = sbr.rel (0) target = $region53
    $region52: #{tpu_custom_call.1} parent=1 // pred_region
      %123 = dma.done [#allocation4], 256
    $region53: #{tpu_custom_call.1} parent=1 // pred_fallthru
      _
    // Predicated region
    $region54: #{tpu_custom_call.1} parent=1 // pred_check
      _
    $region55: #{tpu_custom_call.1} parent=1 // pred_check_branch
      %125 = sbr.rel (0) target = $region57
    $region56: #{tpu_custom_call.1} parent=1 // pred_region
      %127 = dma.done [#allocation7], 512
    $region57: #{tpu_custom_call.1} parent=1 // pred_fallthru
      _
    // Predicated region
    $region58: #{tpu_custom_call.1} parent=1 // pred_check
      _
    $region59: #{tpu_custom_call.1} parent=1 // pred_check_branch
      %129 = sbr.rel (0) target = $region61
    $region60: #{tpu_custom_call.1} parent=1 // pred_region
      %131 = dma.done [#allocation7], 512
    $region61: #{tpu_custom_call.1} parent=1 // pred_fallthru
      _
    // Predicated region
    $region62: #{tpu_custom_call.1} parent=1 // pred_check
      _
    $region63: #{tpu_custom_call.1} parent=1 // pred_check_branch
      %133 = sbr.rel (0) target = $region65
    $region64: #{tpu_custom_call.1} parent=1 // pred_region
      %135 = dma.done [#allocation10], 16
    $region65: #{tpu_custom_call.1} parent=1 // pred_fallthru
      _
    // Predicated region
    $region66: #{tpu_custom_call.1} parent=1 // pred_check
      _
    $region67: #{tpu_custom_call.1} parent=1 // pred_check_branch
      %137 = sbr.rel (0) target = $region69
    $region68: #{tpu_custom_call.1} parent=1 // pred_region
      %139 = dma.done [#allocation10], 1024
    $region69: #{tpu_custom_call.1} parent=1 // pred_fallthru
      _
    // Predicated region
    $region70: #{tpu_custom_call.1} parent=1 // pred_check
      _
    $region71: #{tpu_custom_call.1} parent=1 // pred_check_branch
      %141 = sbr.rel (0) target = $region73
    $region72: #{tpu_custom_call.1} parent=1 // pred_region
      %143 = dma.done [#allocation13], 16
    $region73: #{tpu_custom_call.1} parent=1 // pred_fallthru
      _
    // Predicated region
    $region74: #{tpu_custom_call.1} parent=1 // pred_check
      _
    $region75: #{tpu_custom_call.1} parent=1 // pred_check_branch
      %145 = sbr.rel (0) target = $region77
    $region76: #{tpu_custom_call.1} parent=1 // pred_region
      %147 = dma.done [#allocation13], 16
    $region77: #{tpu_custom_call.1} parent=1 // pred_fallthru
      _
    %v148 = vld [vmem:[#allocation8] sm:$0xff]
    %v149 = vld [vmem:[#allocation8 + $0x8] sm:$0xff]
    %v150 = vld [vmem:[#allocation8 + $0x10] sm:$0xff]
    %v151 = vld [vmem:[#allocation8 + $0x18] sm:$0xff]
    %v152 = vld [vmem:[#allocation9] sm:$0x1]
    %v154 = vperm.slane %v152, 0
    %v156 = vld [vmem:[#allocation11] sm:$0xff]
    %v157 = vld [vmem:[#allocation11 + $0x8] sm:$0xff]
    %v158 = vld [vmem:[#allocation11 + $0x10] sm:$0xff]
    %v159 = vld [vmem:[#allocation11 + $0x18] sm:$0xff]
    %v160 = vld [vmem:[#allocation11 + $0x20] sm:$0xff]
    %v161 = vld [vmem:[#allocation11 + $0x28] sm:$0xff]
    %v162 = vld [vmem:[#allocation11 + $0x30] sm:$0xff]
    %v163 = vld [vmem:[#allocation11 + $0x38] sm:$0xff]
    %v164 = vld [vmem:[#allocation12] sm:$0x1]
    %v166 = vperm.slane %v164, 0
    %v168 = vld [vmem:[#allocation14] sm:$0x1]
    %v170 = vperm.slane %v168, 0
    %v171 = vld [vmem:[%s10] sm:$0xff]
    %v172 = vld [vmem:[%s10 + $0x8] sm:$0xff]
    %v173 = vld [vmem:[%s10 + $0x10] sm:$0xff]
    %v174 = vld [vmem:[%s10 + $0x18] sm:$0xff]
    %v175 = vld [vmem:[%s11] sm:$0x1]
    %s176 = scalar_lea.vmem %s1, 4
    %v177 = vld [vmem:[%s176] sm:$0xf]
    %v178 = vld [vmem:[#allocation6] sm:$0xff]
    %v179 = vld [vmem:[#allocation6 + $0x8] sm:$0xff]
    %v180 = vld [vmem:[#allocation6 + $0x10] sm:$0xff]
    %v181 = vld [vmem:[#allocation6 + $0x18] sm:$0xff]
    %v182 = vld [vmem:[%s4] sm:$0x1]
    %v184 = vperm.slane %v182, 0
    %vm186 = vcmask 261120
    %v188 = vsel %vm186, %v177, 0
    %190 = vmatpush.msra.mxu0 0.0
    %191 = vmatpush.msra.mxu0 0.0
    %192 = vmatpush.msra.mxu0 0.0
    %193 = vmatpush.msra.mxu0 0.0
    %194 = vmatpush.msra.mxu0 0.0
    %195 = vmatpush.msra.mxu0 0.0
    %196 = vmatpush.msra.mxu0 0.0
    %197 = vmatpush.msra.mxu0 0.0
    %198 = vmatpush.msra.mxu0 0.0
    %199 = vmatpush.msra.mxu0 0.0
    %200 = vmatpush.msra.mxu0 0.0
    %201 = vmatpush.msra.mxu0 0.0
    %202 = vmatpush.msra.mxu0 %v181
    %203 = vmatpush.msra.mxu0 %v180
    %204 = vmatpush.msra.mxu0 %v179
    %205 = vmatpush.msra.mxu0 %v178
    %206 = vmatmul.f32.gmra.mxu0 %v188
    %v207 = vpop.f32.mrf.mxu0
    %v208 = vadd.f32 %v184, %v207
    %209 = vdwg.mxu0
    %v210 = vld [vmem:[%s0] sm:$0xff]
    %v211 = vld [vmem:[%s0 + $0x8] sm:$0xff]
    %v212 = vld [vmem:[%s0 + $0x10] sm:$0xff]
    %v213 = vld [vmem:[%s0 + $0x18] sm:$0xff]
    %v214 = vrot.slane %v212, 4
    %vm215 = vcmask 1047556
    %v216 = vsel %vm215, %v214, %v210
    %v217 = vrot.slane %v210, 4
    %v218 = vsel %vm215, %v212, %v217
    %v220 = vunpack.c.l.s4 1983009808
    %v221 = vunpack.c.0.s8 %v220
    %v222 = vperm.slane %v216, %v221
    %v224 = vunpack.c.l.s4 1983009808
    %v225 = vunpack.c.0.s8 %v224
    %v226 = vperm.slane %v218, %v225
    %v227 = vrot.slane %v213, 4
    %v228 = vsel %vm215, %v227, %v211
    %v229 = vrot.slane %v211, 4
    %v230 = vsel %vm215, %v213, %v229
    %v232 = vunpack.c.l.s4 1983009808
    %v233 = vunpack.c.0.s8 %v232
    %v234 = vperm.slane %v228, %v233
    %v236 = vunpack.c.l.s4 1983009808
    %v237 = vunpack.c.0.s8 %v236
    %v238 = vperm.slane %v230, %v237
    %v239 = vrot.slane %v234, 4
    %v240 = vsel %vm215, %v239, %v222
    %v241 = vrot.slane %v222, 4
    %v242 = vsel %vm215, %v234, %v241
    %v244 = vunpack.c.l.s4 1934713408
    %v245 = vunpack.c.0.s8 %v244
    %v246 = vperm.slane %v240, %v245
    %v248 = vunpack.c.l.s4 1934713408
    %v249 = vunpack.c.0.s8 %v248
    %v250 = vperm.slane %v242, %v249
    %v251 = vrot.slane %v238, 4
    %v252 = vsel %vm215, %v251, %v226
    %v253 = vrot.slane %v226, 4
    %v254 = vsel %vm215, %v238, %v253
    %v256 = vunpack.c.l.s4 1934713408
    %v257 = vunpack.c.0.s8 %v256
    %v258 = vperm.slane %v252, %v257
    %v260 = vunpack.c.l.s4 1934713408
    %v261 = vunpack.c.0.s8 %v260
    %v262 = vperm.slane %v254, %v261
    %v263 = vrot.slane %v246, 4
    %v264 = vsel %vm215, 0.0, %v263
    %v265 = vrot.slane %v250, 4
    %v266 = vsel %vm215, 0.0, %v265
    %v267 = vrot.slane %v258, 4
    %v268 = vsel %vm215, 0.0, %v267
    %v269 = vrot.slane %v262, 4
    %v270 = vsel %vm215, 0.0, %v269
    %v271 = vld [vmem:[#allocation3] sm:$0xff]
    %v272 = vld [vmem:[#allocation3 + $0x8] sm:$0xff]
    %281 = vst [vmem:[#allocation1] ss:$2 sm:$0xff] %v246
    %s282 = scalar_lea.vmem [#allocation1], 1
    %283 = vst [vmem:[%s282] ss:$2 sm:$0xff] %v264
    %s284 = scalar_lea.vmem [#allocation1], 16
    %285 = vst [vmem:[%s284] ss:$2 sm:$0xff] %v250
    %s286 = scalar_lea.vmem [#allocation1], 17
    %287 = vst [vmem:[%s286] ss:$2 sm:$0xff] %v266
    %s288 = scalar_lea.vmem [#allocation1], 32
    %289 = vst [vmem:[%s288] ss:$2 sm:$0xff] %v258
    %s290 = scalar_lea.vmem [#allocation1], 33
    %291 = vst [vmem:[%s290] ss:$2 sm:$0xff] %v268
    %s292 = scalar_lea.vmem [#allocation1], 48
    %293 = vst [vmem:[%s292] ss:$2 sm:$0xff] %v262
    %s294 = scalar_lea.vmem [#allocation1], 49
    %295 = vst [vmem:[%s294] ss:$2 sm:$0xff] %v270
    %v296 = vld.sshfl [vmem:[#allocation1] sm:$0xff pattern:$0x75316420]
    %v297 = vld.sshfl [vmem:[#allocation1 + $0x10] sm:$0xff pattern:$0x75316420]
    %v298 = vld.sshfl [vmem:[#allocation1 + $0x20] sm:$0xff pattern:$0x75316420]
    %v299 = vld.sshfl [vmem:[#allocation1 + $0x30] sm:$0xff pattern:$0x75316420]
    %vm300 = vcmask 130048
    %v301 = vsel %vm300, %v296, 0
    %v303 = vsel %vm300, %v297, 0
    %v305 = vsel %vm300, %v298, 0
    %v307 = vsel %vm300, %v299, 0
    %309 = vmatpush.msra.mxu0 0.0
    %310 = vmatpush.msra.mxu0 0.0
    %311 = vmatpush.msra.mxu0 0.0
    %312 = vmatpush.msra.mxu0 0.0
    %313 = vmatpush.msra.mxu0 0.0
    %314 = vmatpush.msra.mxu0 0.0
    %315 = vmatpush.msra.mxu0 0.0
    %316 = vmatpush.msra.mxu0 0.0
    %317 = vmatpush.msra.mxu0 0.0
    %318 = vmatpush.msra.mxu0 0.0
    %319 = vmatpush.msra.mxu0 0.0
    %320 = vmatpush.msra.mxu0 0.0
    %321 = vmatpush.msra.mxu0 0.0
    %322 = vmatpush.msra.mxu0 0.0
    %323 = vmatpush.msra.mxu0 %v272
    %324 = vmatpush.msra.mxu0 %v271
    %325 = vmatmul.f32.gmra.mxu0 %v301
    %v326 = vpop.f32.mrf.mxu0
    %v327 = vadd.f32 0.0, %v326
    %328 = vmatmul.f32.gmra.mxu0 %v303
    %v329 = vpop.f32.mrf.mxu0
    %v330 = vadd.f32 0.0, %v329
    %331 = vmatmul.f32.gmra.mxu0 %v305
    %v332 = vpop.f32.mrf.mxu0
    %v333 = vadd.f32 0.0, %v332
    %334 = vmatmul.f32.gmra.mxu0 %v307
    %v335 = vpop.f32.mrf.mxu0
    %v336 = vadd.f32 0.0, %v335
    %337 = vdwg.mxu0
    %v342 = vrot.slane %v327, 4
    %v343 = vrot.slane %v330, 4
    %v344 = vrot.slane %v333, 4
    %v345 = vrot.slane %v336, 4
    %v350 = vadd.f32 %v327, %v208
    %v351 = vadd.f32 %v342, %v208
    %v352 = vadd.f32 %v330, %v208
    %v353 = vadd.f32 %v343, %v208
    %v354 = vadd.f32 %v333, %v208
    %v355 = vadd.f32 %v344, %v208
    %v356 = vadd.f32 %v336, %v208
    %v357 = vadd.f32 %v345, %v208
    %v358 = vld [vmem:[%s1] sm:$0xf]
    %v360 = vsel %vm186, %v358, 0
    %362 = vmatpush.msra.mxu0 0.0
    %363 = vmatpush.msra.mxu0 0.0
    %364 = vmatpush.msra.mxu0 0.0
    %365 = vmatpush.msra.mxu0 0.0
    %366 = vmatpush.msra.mxu0 0.0
    %367 = vmatpush.msra.mxu0 0.0
    %368 = vmatpush.msra.mxu0 0.0
    %369 = vmatpush.msra.mxu0 0.0
    %370 = vmatpush.msra.mxu0 0.0
    %371 = vmatpush.msra.mxu0 0.0
    %372 = vmatpush.msra.mxu0 0.0
    %373 = vmatpush.msra.mxu0 0.0
    %374 = vmatpush.msra.mxu0 %v151
    %375 = vmatpush.msra.mxu0 %v150
    %376 = vmatpush.msra.mxu0 %v149
    %377 = vmatpush.msra.mxu0 %v148
    %378 = vmatmul.f32.gmra.mxu0 %v360
    %v379 = vpop.f32.mrf.mxu0
    %v380 = vadd.f32 %v154, %v379
    %381 = vdwg.mxu0
    %v382 = vadd.f32 %v350, %v380
    %v383 = vxor.u32 %v382, 2147483648
    %v384 = vmul.f32 %v383, 1.442695
    %v385 = vpow.pop %v384
    %v386 = vadd.f32 %v385, 1.0
    %v387 = vrcp.pop %v386
    %v388 = vmul.f32 %v386, %v387
    %v389 = vsub.f32 1.0, %v388
    %v390 = vmul.f32 %v387, %v389
    %v391 = vadd.f32 %v387, %v390
    %vm392 = vweird.f32 %v386
    %vm393 = vweird.f32 %v387
    %vm394 = vmor %vm392, %vm393
    %v395 = vsel %vm394, %v387, %v391
    %v396 = vand.u32 2147483647, %v386
    %vm397 = vcmp.eq.f32.partialorder %v396, 8.507059e+37
    %v398 = vand.u32 %v386, 2147483648
    %v399 = vor.u32 1.1754944e-38, %v398
    %v400 = vsel %vm397, %v399, %v395
    %v401 = vmul.f32 1.0, %v400
    %403 = vrot.lane.b32.xlu0 %v380, 64
    %v404 = vpop.permute.xlu0 %403
    %v406 = vmul.f32 %v401, %v404
    %408 = vrot.lane.b32.xlu0 %v406, 64
    %v409 = vpop.permute.xlu0 %408
    %v411 = vadd.f32 %v350, %v409
    %v412 = vtanh.pop %v411
    %v413 = vsub.f32 1.0, %v401
    %415 = vrot.lane.b32.xlu0 %v412, 96
    %v416 = vpop.permute.xlu0 %415
    %v418 = vmul.f32 %v413, %v416
    %419 = vrot.lane.b32.xlu0 %v358, 32
    %v420 = vpop.permute.xlu0 %419
    %v422 = vmul.f32 %v401, %v420
    %v423 = vadd.f32 %v418, %v422
    %v424 = vrot.slane %v177, 4
    %425 = vrot.lane.b32.xlu0 %v424, 32
    %v426 = vpop.permute.xlu0 %425
    %vm428 = vcmask 1043456
    %v429 = vsel %vm428, %v423, %v426
    %431 = vrot.lane.b32.xlu0 %v429, 96
    %v432 = vpop.permute.xlu0 %431
    %v433 = vsel %vm186, %v432, 0
    %435 = vmatpush.msra.mxu0 0.0
    %436 = vmatpush.msra.mxu0 0.0
    %437 = vmatpush.msra.mxu0 0.0
    %438 = vmatpush.msra.mxu0 0.0
    %439 = vmatpush.msra.mxu0 0.0
    %440 = vmatpush.msra.mxu0 0.0
    %441 = vmatpush.msra.mxu0 0.0
    %442 = vmatpush.msra.mxu0 0.0
    %443 = vmatpush.msra.mxu0 0.0
    %444 = vmatpush.msra.mxu0 0.0
    %445 = vmatpush.msra.mxu0 0.0
    %446 = vmatpush.msra.mxu0 0.0
    %447 = vmatpush.msra.mxu0 %v162
    %448 = vmatpush.msra.mxu0 %v160
    %449 = vmatpush.msra.mxu0 %v158
    %450 = vmatpush.msra.mxu0 %v156
    %451 = vmatmul.f32.gmra.mxu0 %v433
    %v452 = vpop.f32.mrf.mxu0
    %v453 = vadd.f32 0.0, %v452
    %454 = vdwg.mxu0
    %455 = vmatpush.msra.mxu0 0.0
    %456 = vmatpush.msra.mxu0 0.0
    %457 = vmatpush.msra.mxu0 0.0
    %458 = vmatpush.msra.mxu0 0.0
    %459 = vmatpush.msra.mxu0 0.0
    %460 = vmatpush.msra.mxu0 0.0
    %461 = vmatpush.msra.mxu0 0.0
    %462 = vmatpush.msra.mxu0 0.0
    %463 = vmatpush.msra.mxu0 0.0
    %464 = vmatpush.msra.mxu0 0.0
    %465 = vmatpush.msra.mxu0 0.0
    %466 = vmatpush.msra.mxu0 0.0
    %467 = vmatpush.msra.mxu0 %v163
    %468 = vmatpush.msra.mxu0 %v161
    %469 = vmatpush.msra.mxu0 %v159
    %470 = vmatpush.msra.mxu0 %v157
    %471 = vmatmul.f32.gmra.mxu0 %v433
    %v472 = vpop.f32.mrf.mxu0
    %v473 = vadd.f32 0.0, %v472
    %474 = vdwg.mxu0
    %v475 = vadd.f32 %v453, %v166
    %476 = vrot.lane.b32.xlu0 %v170, 96
    %v477 = vpop.permute.xlu0 %476
    %v479 = vadd.f32 %v453, %v477
    %v480 = vadd.f32 %v473, %v477
    %v482 = vrot.slane %v479, 4
    %483 = vrot.lane.b32.xlu0 %v482, 32
    %v484 = vpop.permute.xlu0 %483
    %v486 = vadd.f32 %v475, %v484
    %v487 = vxor.u32 %v486, 2147483648
    %v488 = vmul.f32 %v487, 1.442695
    %v489 = vpow.pop %v488
    %v490 = vadd.f32 %v489, 1.0
    %v491 = vrcp.pop %v490
    %v492 = vmul.f32 %v490, %v491
    %v493 = vsub.f32 1.0, %v492
    %v494 = vmul.f32 %v491, %v493
    %v495 = vadd.f32 %v491, %v494
    %vm496 = vweird.f32 %v490
    %vm497 = vweird.f32 %v491
    %vm498 = vmor %vm496, %vm497
    %v499 = vsel %vm498, %v491, %v495
    %v500 = vand.u32 2147483647, %v490
    %vm501 = vcmp.eq.f32.partialorder %v500, 8.507059e+37
    %v502 = vand.u32 %v490, 2147483648
    %v503 = vor.u32 1.1754944e-38, %v502
    %v504 = vsel %vm501, %v503, %v499
    %v505 = vmul.f32 1.0, %v504
    %v507 = vrot.slane %v480, 4
    %508 = vrot.lane.b32.xlu0 %v507, 32
    %v509 = vpop.permute.xlu0 %508
    %v511 = vadd.f32 %v475, %v509
    %v512 = vxor.u32 %v511, 2147483648
    %v513 = vmul.f32 %v512, 1.442695
    %v514 = vpow.pop %v513
    %v515 = vadd.f32 %v514, 1.0
    %v516 = vrcp.pop %v515
    %v517 = vmul.f32 %v515, %v516
    %v518 = vsub.f32 1.0, %v517
    %v519 = vmul.f32 %v516, %v518
    %v520 = vadd.f32 %v516, %v519
    %vm521 = vweird.f32 %v515
    %vm522 = vweird.f32 %v516
    %vm523 = vmor %vm521, %vm522
    %v524 = vsel %vm523, %v516, %v520
    %v525 = vand.u32 2147483647, %v515
    %vm526 = vcmp.eq.f32.partialorder %v525, 8.507059e+37
    %v527 = vand.u32 %v515, 2147483648
    %v528 = vor.u32 1.1754944e-38, %v527
    %v529 = vsel %vm526, %v528, %v524
    %v530 = vmul.f32 1.0, %v529
    %531 = vrot.lane.b32.xlu0 %v507, 96
    %v532 = vpop.permute.xlu0 %531
    %v534 = vmul.f32 %v505, %v532
    %536 = vrot.lane.b32.xlu0 %v534, 64
    %v537 = vpop.permute.xlu0 %536
    %v539 = vadd.f32 %v475, %v537
    %v540 = vtanh.pop %v539
    %v541 = vsub.f32 1.0, %v530
    %543 = vrot.lane.b32.xlu0 %v540, 96
    %v544 = vpop.permute.xlu0 %543
    %v546 = vmul.f32 %v541, %v544
    %547 = vrot.lane.b32.xlu0 %v177, 32
    %v548 = vpop.permute.xlu0 %547
    %v550 = vmul.f32 %v530, %v548
    %v551 = vadd.f32 %v546, %v550
    %553 = vrot.lane.b32.xlu0 %v551, 96
    %v554 = vpop.permute.xlu0 %553
    %vm556 = vcmask 257024
    %557 = vst.msk [vmem:[#allocation2] sm:$0xf] %vm556, %v554
    %559 = vst [vmem:[#allocation1] ss:$2 sm:$0xff] %v423
    %v560 = vld.sshfl [vmem:[#allocation1] sm:$0xff pattern:$0x75316420]
    %561 = vrot.lane.b32.xlu0 %v560, 96
    %v562 = vpop.permute.xlu0 %561
    %v563 = vsel %vm186, %v562, 0
    %565 = vmatpush.msra.mxu0 0.0
    %566 = vmatpush.msra.mxu0 0.0
    %567 = vmatpush.msra.mxu0 0.0
    %568 = vmatpush.msra.mxu0 0.0
    %569 = vmatpush.msra.mxu0 0.0
    %570 = vmatpush.msra.mxu0 0.0
    %571 = vmatpush.msra.mxu0 0.0
    %572 = vmatpush.msra.mxu0 0.0
    %573 = vmatpush.msra.mxu0 0.0
    %574 = vmatpush.msra.mxu0 0.0
    %575 = vmatpush.msra.mxu0 0.0
    %576 = vmatpush.msra.mxu0 0.0
    %577 = vmatpush.msra.mxu0 %v151
    %578 = vmatpush.msra.mxu0 %v150
    %579 = vmatpush.msra.mxu0 %v149
    %580 = vmatpush.msra.mxu0 %v148
    %581 = vmatmul.f32.gmra.mxu0 %v563
    %v582 = vpop.f32.mrf.mxu0
    %v583 = vadd.f32 %v154, %v582
    %584 = vdwg.mxu0
    %v585 = vadd.f32 %v351, %v583
    %v586 = vxor.u32 %v585, 2147483648
    %v587 = vmul.f32 %v586, 1.442695
    %v588 = vpow.pop %v587
    %v589 = vadd.f32 %v588, 1.0
    %v590 = vrcp.pop %v589
    %v591 = vmul.f32 %v589, %v590
    %v592 = vsub.f32 1.0, %v591
    %v593 = vmul.f32 %v590, %v592
    %v594 = vadd.f32 %v590, %v593
    %vm595 = vweird.f32 %v589
    %vm596 = vweird.f32 %v590
    %vm597 = vmor %vm595, %vm596
    %v598 = vsel %vm597, %v590, %v594
    %v599 = vand.u32 2147483647, %v589
    %vm600 = vcmp.eq.f32.partialorder %v599, 8.507059e+37
    %v601 = vand.u32 %v589, 2147483648
    %v602 = vor.u32 1.1754944e-38, %v601
    %v603 = vsel %vm600, %v602, %v598
    %v604 = vmul.f32 1.0, %v603
    %606 = vrot.lane.b32.xlu0 %v583, 64
    %v607 = vpop.permute.xlu0 %606
    %v609 = vmul.f32 %v604, %v607
    %611 = vrot.lane.b32.xlu0 %v609, 64
    %v612 = vpop.permute.xlu0 %611
    %v614 = vadd.f32 %v351, %v612
    %v615 = vtanh.pop %v614
    %v616 = vsub.f32 1.0, %v604
    %618 = vrot.lane.b32.xlu0 %v615, 96
    %v619 = vpop.permute.xlu0 %618
    %v621 = vmul.f32 %v616, %v619
    %v622 = vmul.f32 %v604, %v423
    %v623 = vadd.f32 %v621, %v622
    %v624 = vrot.slane %v551, 4
    %v626 = vsel %vm428, %v623, %v624
    %628 = vrot.lane.b32.xlu0 %v626, 96
    %v629 = vpop.permute.xlu0 %628
    %v630 = vsel %vm186, %v629, 0
    %632 = vmatpush.msra.mxu0 0.0
    %633 = vmatpush.msra.mxu0 0.0
    %634 = vmatpush.msra.mxu0 0.0
    %635 = vmatpush.msra.mxu0 0.0
    %636 = vmatpush.msra.mxu0 0.0
    %637 = vmatpush.msra.mxu0 0.0
    %638 = vmatpush.msra.mxu0 0.0
    %639 = vmatpush.msra.mxu0 0.0
    %640 = vmatpush.msra.mxu0 0.0
    %641 = vmatpush.msra.mxu0 0.0
    %642 = vmatpush.msra.mxu0 0.0
    %643 = vmatpush.msra.mxu0 0.0
    %644 = vmatpush.msra.mxu0 %v162
    %645 = vmatpush.msra.mxu0 %v160
    %646 = vmatpush.msra.mxu0 %v158
    %647 = vmatpush.msra.mxu0 %v156
    %648 = vmatmul.f32.gmra.mxu0 %v630
    %v649 = vpop.f32.mrf.mxu0
    %v650 = vadd.f32 0.0, %v649
    %651 = vdwg.mxu0
    %652 = vmatpush.msra.mxu0 0.0
    %653 = vmatpush.msra.mxu0 0.0
    %654 = vmatpush.msra.mxu0 0.0
    %655 = vmatpush.msra.mxu0 0.0
    %656 = vmatpush.msra.mxu0 0.0
    %657 = vmatpush.msra.mxu0 0.0
    %658 = vmatpush.msra.mxu0 0.0
    %659 = vmatpush.msra.mxu0 0.0
    %660 = vmatpush.msra.mxu0 0.0
    %661 = vmatpush.msra.mxu0 0.0
    %662 = vmatpush.msra.mxu0 0.0
    %663 = vmatpush.msra.mxu0 0.0
    %664 = vmatpush.msra.mxu0 %v163
    %665 = vmatpush.msra.mxu0 %v161
    %666 = vmatpush.msra.mxu0 %v159
    %667 = vmatpush.msra.mxu0 %v157
    %668 = vmatmul.f32.gmra.mxu0 %v630
    %v669 = vpop.f32.mrf.mxu0
    %v670 = vadd.f32 0.0, %v669
    %671 = vdwg.mxu0
    %v672 = vadd.f32 %v650, %v166
    %v673 = vadd.f32 %v650, %v477
    %v674 = vadd.f32 %v670, %v477
    %v676 = vrot.slane %v673, 4
    %677 = vrot.lane.b32.xlu0 %v676, 32
    %v678 = vpop.permute.xlu0 %677
    %v680 = vadd.f32 %v672, %v678
    %v681 = vxor.u32 %v680, 2147483648
    %v682 = vmul.f32 %v681, 1.442695
    %v683 = vpow.pop %v682
    %v684 = vadd.f32 %v683, 1.0
    %v685 = vrcp.pop %v684
    %v686 = vmul.f32 %v684, %v685
    %v687 = vsub.f32 1.0, %v686
    %v688 = vmul.f32 %v685, %v687
    %v689 = vadd.f32 %v685, %v688
    %vm690 = vweird.f32 %v684
    %vm691 = vweird.f32 %v685
    %vm692 = vmor %vm690, %vm691
    %v693 = vsel %vm692, %v685, %v689
    %v694 = vand.u32 2147483647, %v684
    %vm695 = vcmp.eq.f32.partialorder %v694, 8.507059e+37
    %v696 = vand.u32 %v684, 2147483648
    %v697 = vor.u32 1.1754944e-38, %v696
    %v698 = vsel %vm695, %v697, %v693
    %v699 = vmul.f32 1.0, %v698
    %v701 = vrot.slane %v674, 4
    %702 = vrot.lane.b32.xlu0 %v701, 32
    %v703 = vpop.permute.xlu0 %702
    %v705 = vadd.f32 %v672, %v703
    %v706 = vxor.u32 %v705, 2147483648
    %v707 = vmul.f32 %v706, 1.442695
    %v708 = vpow.pop %v707
    %v709 = vadd.f32 %v708, 1.0
    %v710 = vrcp.pop %v709
    %v711 = vmul.f32 %v709, %v710
    %v712 = vsub.f32 1.0, %v711
    %v713 = vmul.f32 %v710, %v712
    %v714 = vadd.f32 %v710, %v713
    %vm715 = vweird.f32 %v709
    %vm716 = vweird.f32 %v710
    %vm717 = vmor %vm715, %vm716
    %v718 = vsel %vm717, %v710, %v714
    %v719 = vand.u32 2147483647, %v709
    %vm720 = vcmp.eq.f32.partialorder %v719, 8.507059e+37
    %v721 = vand.u32 %v709, 2147483648
    %v722 = vor.u32 1.1754944e-38, %v721
    %v723 = vsel %vm720, %v722, %v718
    %v724 = vmul.f32 1.0, %v723
    %725 = vrot.lane.b32.xlu0 %v701, 96
    %v726 = vpop.permute.xlu0 %725
    %v728 = vmul.f32 %v699, %v726
    %730 = vrot.lane.b32.xlu0 %v728, 64
    %v731 = vpop.permute.xlu0 %730
    %v733 = vadd.f32 %v672, %v731
    %v734 = vtanh.pop %v733
    %v735 = vsub.f32 1.0, %v724
    %737 = vrot.lane.b32.xlu0 %v734, 96
    %v738 = vpop.permute.xlu0 %737
    %v740 = vmul.f32 %v735, %v738
    %v741 = vmul.f32 %v724, %v551
    %v742 = vadd.f32 %v740, %v741
    %744 = vrot.lane.b32.xlu0 %v742, 96
    %v745 = vpop.permute.xlu0 %744
    %s747 = scalar_lea.vmem [#allocation2], 4
    %748 = vst.msk [vmem:[%s747] sm:$0xf] %vm556, %v745
    %750 = vst [vmem:[#allocation1] ss:$2 sm:$0xff] %v623
    %v751 = vld.sshfl [vmem:[#allocation1] sm:$0xff pattern:$0x75316420]
    %752 = vrot.lane.b32.xlu0 %v751, 96
    %v753 = vpop.permute.xlu0 %752
    %v754 = vsel %vm186, %v753, 0
    %756 = vmatpush.msra.mxu0 0.0
    %757 = vmatpush.msra.mxu0 0.0
    %758 = vmatpush.msra.mxu0 0.0
    %759 = vmatpush.msra.mxu0 0.0
    %760 = vmatpush.msra.mxu0 0.0
    %761 = vmatpush.msra.mxu0 0.0
    %762 = vmatpush.msra.mxu0 0.0
    %763 = vmatpush.msra.mxu0 0.0
    %764 = vmatpush.msra.mxu0 0.0
    %765 = vmatpush.msra.mxu0 0.0
    %766 = vmatpush.msra.mxu0 0.0
    %767 = vmatpush.msra.mxu0 0.0
    %768 = vmatpush.msra.mxu0 %v151
    %769 = vmatpush.msra.mxu0 %v150
    %770 = vmatpush.msra.mxu0 %v149
    %771 = vmatpush.msra.mxu0 %v148
    %772 = vmatmul.f32.gmra.mxu0 %v754
    %v773 = vpop.f32.mrf.mxu0
    %v774 = vadd.f32 %v154, %v773
    %775 = vdwg.mxu0
    %v776 = vadd.f32 %v352, %v774
    %v777 = vxor.u32 %v776, 2147483648
    %v778 = vmul.f32 %v777, 1.442695
    %v779 = vpow.pop %v778
    %v780 = vadd.f32 %v779, 1.0
    %v781 = vrcp.pop %v780
    %v782 = vmul.f32 %v780, %v781
    %v783 = vsub.f32 1.0, %v782
    %v784 = vmul.f32 %v781, %v783
    %v785 = vadd.f32 %v781, %v784
    %vm786 = vweird.f32 %v780
    %vm787 = vweird.f32 %v781
    %vm788 = vmor %vm786, %vm787
    %v789 = vsel %vm788, %v781, %v785
    %v790 = vand.u32 2147483647, %v780
    %vm791 = vcmp.eq.f32.partialorder %v790, 8.507059e+37
    %v792 = vand.u32 %v780, 2147483648
    %v793 = vor.u32 1.1754944e-38, %v792
    %v794 = vsel %vm791, %v793, %v789
    %v795 = vmul.f32 1.0, %v794
    %797 = vrot.lane.b32.xlu0 %v774, 64
    %v798 = vpop.permute.xlu0 %797
    %v800 = vmul.f32 %v795, %v798
    %802 = vrot.lane.b32.xlu0 %v800, 64
    %v803 = vpop.permute.xlu0 %802
    %v805 = vadd.f32 %v352, %v803
    %v806 = vtanh.pop %v805
    %v807 = vsub.f32 1.0, %v795
    %809 = vrot.lane.b32.xlu0 %v806, 96
    %v810 = vpop.permute.xlu0 %809
    %v812 = vmul.f32 %v807, %v810
    %v813 = vmul.f32 %v795, %v623
    %v814 = vadd.f32 %v812, %v813
    %v815 = vrot.slane %v742, 4
    %v817 = vsel %vm428, %v814, %v815
    %819 = vrot.lane.b32.xlu0 %v817, 96
    %v820 = vpop.permute.xlu0 %819
    %v821 = vsel %vm186, %v820, 0
    %823 = vmatpush.msra.mxu0 0.0
    %824 = vmatpush.msra.mxu0 0.0
    %825 = vmatpush.msra.mxu0 0.0
    %826 = vmatpush.msra.mxu0 0.0
    %827 = vmatpush.msra.mxu0 0.0
    %828 = vmatpush.msra.mxu0 0.0
    %829 = vmatpush.msra.mxu0 0.0
    %830 = vmatpush.msra.mxu0 0.0
    %831 = vmatpush.msra.mxu0 0.0
    %832 = vmatpush.msra.mxu0 0.0
    %833 = vmatpush.msra.mxu0 0.0
    %834 = vmatpush.msra.mxu0 0.0
    %835 = vmatpush.msra.mxu0 %v162
    %836 = vmatpush.msra.mxu0 %v160
    %837 = vmatpush.msra.mxu0 %v158
    %838 = vmatpush.msra.mxu0 %v156
    %839 = vmatmul.f32.gmra.mxu0 %v821
    %v840 = vpop.f32.mrf.mxu0
    %v841 = vadd.f32 0.0, %v840
    %842 = vdwg.mxu0
    %843 = vmatpush.msra.mxu0 0.0
    %844 = vmatpush.msra.mxu0 0.0
    %845 = vmatpush.msra.mxu0 0.0
    %846 = vmatpush.msra.mxu0 0.0
    %847 = vmatpush.msra.mxu0 0.0
    %848 = vmatpush.msra.mxu0 0.0
    %849 = vmatpush.msra.mxu0 0.0
    %850 = vmatpush.msra.mxu0 0.0
    %851 = vmatpush.msra.mxu0 0.0
    %852 = vmatpush.msra.mxu0 0.0
    %853 = vmatpush.msra.mxu0 0.0
    %854 = vmatpush.msra.mxu0 0.0
    %855 = vmatpush.msra.mxu0 %v163
    %856 = vmatpush.msra.mxu0 %v161
    %857 = vmatpush.msra.mxu0 %v159
    %858 = vmatpush.msra.mxu0 %v157
    %859 = vmatmul.f32.gmra.mxu0 %v821
    %v860 = vpop.f32.mrf.mxu0
    %v861 = vadd.f32 0.0, %v860
    %862 = vdwg.mxu0
    %v863 = vadd.f32 %v841, %v166
    %v864 = vadd.f32 %v841, %v477
    %v865 = vadd.f32 %v861, %v477
    %v867 = vrot.slane %v864, 4
    %868 = vrot.lane.b32.xlu0 %v867, 32
    %v869 = vpop.permute.xlu0 %868
    %v871 = vadd.f32 %v863, %v869
    %v872 = vxor.u32 %v871, 2147483648
    %v873 = vmul.f32 %v872, 1.442695
    %v874 = vpow.pop %v873
    %v875 = vadd.f32 %v874, 1.0
    %v876 = vrcp.pop %v875
    %v877 = vmul.f32 %v875, %v876
    %v878 = vsub.f32 1.0, %v877
    %v879 = vmul.f32 %v876, %v878
    %v880 = vadd.f32 %v876, %v879
    %vm881 = vweird.f32 %v875
    %vm882 = vweird.f32 %v876
    %vm883 = vmor %vm881, %vm882
    %v884 = vsel %vm883, %v876, %v880
    %v885 = vand.u32 2147483647, %v875
    %vm886 = vcmp.eq.f32.partialorder %v885, 8.507059e+37
    %v887 = vand.u32 %v875, 2147483648
    %v888 = vor.u32 1.1754944e-38, %v887
    %v889 = vsel %vm886, %v888, %v884
    %v890 = vmul.f32 1.0, %v889
    %v892 = vrot.slane %v865, 4
    %893 = vrot.lane.b32.xlu0 %v892, 32
    %v894 = vpop.permute.xlu0 %893
    %v896 = vadd.f32 %v863, %v894
    %v897 = vxor.u32 %v896, 2147483648
    %v898 = vmul.f32 %v897, 1.442695
    %v899 = vpow.pop %v898
    %v900 = vadd.f32 %v899, 1.0
    %v901 = vrcp.pop %v900
    %v902 = vmul.f32 %v900, %v901
    %v903 = vsub.f32 1.0, %v902
    %v904 = vmul.f32 %v901, %v903
    %v905 = vadd.f32 %v901, %v904
    %vm906 = vweird.f32 %v900
    %vm907 = vweird.f32 %v901
    %vm908 = vmor %vm906, %vm907
    %v909 = vsel %vm908, %v901, %v905
    %v910 = vand.u32 2147483647, %v900
    %vm911 = vcmp.eq.f32.partialorder %v910, 8.507059e+37
    %v912 = vand.u32 %v900, 2147483648
    %v913 = vor.u32 1.1754944e-38, %v912
    %v914 = vsel %vm911, %v913, %v909
    %v915 = vmul.f32 1.0, %v914
    %916 = vrot.lane.b32.xlu0 %v892, 96
    %v917 = vpop.permute.xlu0 %916
    %v919 = vmul.f32 %v890, %v917
    %921 = vrot.lane.b32.xlu0 %v919, 64
    %v922 = vpop.permute.xlu0 %921
    %v924 = vadd.f32 %v863, %v922
    %v925 = vtanh.pop %v924
    %v926 = vsub.f32 1.0, %v915
    %928 = vrot.lane.b32.xlu0 %v925, 96
    %v929 = vpop.permute.xlu0 %928
    %v931 = vmul.f32 %v926, %v929
    %v932 = vmul.f32 %v915, %v742
    %v933 = vadd.f32 %v931, %v932
    %935 = vrot.lane.b32.xlu0 %v933, 96
    %v936 = vpop.permute.xlu0 %935
    %s938 = scalar_lea.vmem [#allocation2], 8
    %939 = vst.msk [vmem:[%s938] sm:$0xf] %vm556, %v936
    %941 = vst [vmem:[#allocation1] ss:$2 sm:$0xff] %v814
    %v942 = vld.sshfl [vmem:[#allocation1] sm:$0xff pattern:$0x75316420]
    %943 = vrot.lane.b32.xlu0 %v942, 96
    %v944 = vpop.permute.xlu0 %943
    %v945 = vsel %vm186, %v944, 0
    %947 = vmatpush.msra.mxu0 0.0
    %948 = vmatpush.msra.mxu0 0.0
    %949 = vmatpush.msra.mxu0 0.0
    %950 = vmatpush.msra.mxu0 0.0
    %951 = vmatpush.msra.mxu0 0.0
    %952 = vmatpush.msra.mxu0 0.0
    %953 = vmatpush.msra.mxu0 0.0
    %954 = vmatpush.msra.mxu0 0.0
    %955 = vmatpush.msra.mxu0 0.0
    %956 = vmatpush.msra.mxu0 0.0
    %957 = vmatpush.msra.mxu0 0.0
    %958 = vmatpush.msra.mxu0 0.0
    %959 = vmatpush.msra.mxu0 %v151
    %960 = vmatpush.msra.mxu0 %v150
    %961 = vmatpush.msra.mxu0 %v149
    %962 = vmatpush.msra.mxu0 %v148
    %963 = vmatmul.f32.gmra.mxu0 %v945
    %v964 = vpop.f32.mrf.mxu0
    %v965 = vadd.f32 %v154, %v964
    %966 = vdwg.mxu0
    %v967 = vadd.f32 %v353, %v965
    %v968 = vxor.u32 %v967, 2147483648
    %v969 = vmul.f32 %v968, 1.442695
    %v970 = vpow.pop %v969
    %v971 = vadd.f32 %v970, 1.0
    %v972 = vrcp.pop %v971
    %v973 = vmul.f32 %v971, %v972
    %v974 = vsub.f32 1.0, %v973
    %v975 = vmul.f32 %v972, %v974
    %v976 = vadd.f32 %v972, %v975
    %vm977 = vweird.f32 %v971
    %vm978 = vweird.f32 %v972
    %vm979 = vmor %vm977, %vm978
    %v980 = vsel %vm979, %v972, %v976
    %v981 = vand.u32 2147483647, %v971
    %vm982 = vcmp.eq.f32.partialorder %v981, 8.507059e+37
    %v983 = vand.u32 %v971, 2147483648
    %v984 = vor.u32 1.1754944e-38, %v983
    %v985 = vsel %vm982, %v984, %v980
    %v986 = vmul.f32 1.0, %v985
    %988 = vrot.lane.b32.xlu0 %v965, 64
    %v989 = vpop.permute.xlu0 %988
    %v991 = vmul.f32 %v986, %v989
    %993 = vrot.lane.b32.xlu0 %v991, 64
    %v994 = vpop.permute.xlu0 %993
    %v996 = vadd.f32 %v353, %v994
    %v997 = vtanh.pop %v996
    %v998 = vsub.f32 1.0, %v986
    %1000 = vrot.lane.b32.xlu0 %v997, 96
    %v1001 = vpop.permute.xlu0 %1000
    %v1003 = vmul.f32 %v998, %v1001
    %v1004 = vmul.f32 %v986, %v814
    %v1005 = vadd.f32 %v1003, %v1004
    %v1006 = vrot.slane %v933, 4
    %v1008 = vsel %vm428, %v1005, %v1006
    %1010 = vrot.lane.b32.xlu0 %v1008, 96
    %v1011 = vpop.permute.xlu0 %1010
    %v1012 = vsel %vm186, %v1011, 0
    %1014 = vmatpush.msra.mxu0 0.0
    %1015 = vmatpush.msra.mxu0 0.0
    %1016 = vmatpush.msra.mxu0 0.0
    %1017 = vmatpush.msra.mxu0 0.0
    %1018 = vmatpush.msra.mxu0 0.0
    %1019 = vmatpush.msra.mxu0 0.0
    %1020 = vmatpush.msra.mxu0 0.0
    %1021 = vmatpush.msra.mxu0 0.0
    %1022 = vmatpush.msra.mxu0 0.0
    %1023 = vmatpush.msra.mxu0 0.0
    %1024 = vmatpush.msra.mxu0 0.0
    %1025 = vmatpush.msra.mxu0 0.0
    %1026 = vmatpush.msra.mxu0 %v162
    %1027 = vmatpush.msra.mxu0 %v160
    %1028 = vmatpush.msra.mxu0 %v158
    %1029 = vmatpush.msra.mxu0 %v156
    %1030 = vmatmul.f32.gmra.mxu0 %v1012
    %v1031 = vpop.f32.mrf.mxu0
    %v1032 = vadd.f32 0.0, %v1031
    %1033 = vdwg.mxu0
    %1034 = vmatpush.msra.mxu0 0.0
    %1035 = vmatpush.msra.mxu0 0.0
    %1036 = vmatpush.msra.mxu0 0.0
    %1037 = vmatpush.msra.mxu0 0.0
    %1038 = vmatpush.msra.mxu0 0.0
    %1039 = vmatpush.msra.mxu0 0.0
    %1040 = vmatpush.msra.mxu0 0.0
    %1041 = vmatpush.msra.mxu0 0.0
    %1042 = vmatpush.msra.mxu0 0.0
    %1043 = vmatpush.msra.mxu0 0.0
    %1044 = vmatpush.msra.mxu0 0.0
    %1045 = vmatpush.msra.mxu0 0.0
    %1046 = vmatpush.msra.mxu0 %v163
    %1047 = vmatpush.msra.mxu0 %v161
    %1048 = vmatpush.msra.mxu0 %v159
    %1049 = vmatpush.msra.mxu0 %v157
    %1050 = vmatmul.f32.gmra.mxu0 %v1012
    %v1051 = vpop.f32.mrf.mxu0
    %v1052 = vadd.f32 0.0, %v1051
    %1053 = vdwg.mxu0
    %v1054 = vadd.f32 %v1032, %v166
    %v1055 = vadd.f32 %v1032, %v477
    %v1056 = vadd.f32 %v1052, %v477
    %v1058 = vrot.slane %v1055, 4
    %1059 = vrot.lane.b32.xlu0 %v1058, 32
    %v1060 = vpop.permute.xlu0 %1059
    %v1062 = vadd.f32 %v1054, %v1060
    %v1063 = vxor.u32 %v1062, 2147483648
    %v1064 = vmul.f32 %v1063, 1.442695
    %v1065 = vpow.pop %v1064
    %v1066 = vadd.f32 %v1065, 1.0
    %v1067 = vrcp.pop %v1066
    %v1068 = vmul.f32 %v1066, %v1067
    %v1069 = vsub.f32 1.0, %v1068
    %v1070 = vmul.f32 %v1067, %v1069
    %v1071 = vadd.f32 %v1067, %v1070
    %vm1072 = vweird.f32 %v1066
    %vm1073 = vweird.f32 %v1067
    %vm1074 = vmor %vm1072, %vm1073
    %v1075 = vsel %vm1074, %v1067, %v1071
    %v1076 = vand.u32 2147483647, %v1066
    %vm1077 = vcmp.eq.f32.partialorder %v1076, 8.507059e+37
    %v1078 = vand.u32 %v1066, 2147483648
    %v1079 = vor.u32 1.1754944e-38, %v1078
    %v1080 = vsel %vm1077, %v1079, %v1075
    %v1081 = vmul.f32 1.0, %v1080
    %v1083 = vrot.slane %v1056, 4
    %1084 = vrot.lane.b32.xlu0 %v1083, 32
    %v1085 = vpop.permute.xlu0 %1084
    %v1087 = vadd.f32 %v1054, %v1085
    %v1088 = vxor.u32 %v1087, 2147483648
    %v1089 = vmul.f32 %v1088, 1.442695
    %v1090 = vpow.pop %v1089
    %v1091 = vadd.f32 %v1090, 1.0
    %v1092 = vrcp.pop %v1091
    %v1093 = vmul.f32 %v1091, %v1092
    %v1094 = vsub.f32 1.0, %v1093
    %v1095 = vmul.f32 %v1092, %v1094
    %v1096 = vadd.f32 %v1092, %v1095
    %vm1097 = vweird.f32 %v1091
    %vm1098 = vweird.f32 %v1092
    %vm1099 = vmor %vm1097, %vm1098
    %v1100 = vsel %vm1099, %v1092, %v1096
    %v1101 = vand.u32 2147483647, %v1091
    %vm1102 = vcmp.eq.f32.partialorder %v1101, 8.507059e+37
    %v1103 = vand.u32 %v1091, 2147483648
    %v1104 = vor.u32 1.1754944e-38, %v1103
    %v1105 = vsel %vm1102, %v1104, %v1100
    %v1106 = vmul.f32 1.0, %v1105
    %1107 = vrot.lane.b32.xlu0 %v1083, 96
    %v1108 = vpop.permute.xlu0 %1107
    %v1110 = vmul.f32 %v1081, %v1108
    %1112 = vrot.lane.b32.xlu0 %v1110, 64
    %v1113 = vpop.permute.xlu0 %1112
    %v1115 = vadd.f32 %v1054, %v1113
    %v1116 = vtanh.pop %v1115
    %v1117 = vsub.f32 1.0, %v1106
    %1119 = vrot.lane.b32.xlu0 %v1116, 96
    %v1120 = vpop.permute.xlu0 %1119
    %v1122 = vmul.f32 %v1117, %v1120
    %v1123 = vmul.f32 %v1106, %v933
    %v1124 = vadd.f32 %v1122, %v1123
    %1126 = vrot.lane.b32.xlu0 %v1124, 96
    %v1127 = vpop.permute.xlu0 %1126
    %s1129 = scalar_lea.vmem [#allocation2], 12
    %1130 = vst.msk [vmem:[%s1129] sm:$0xf] %vm556, %v1127
    %1132 = vst [vmem:[#allocation1] ss:$2 sm:$0xff] %v1005
    %v1133 = vld.sshfl [vmem:[#allocation1] sm:$0xff pattern:$0x75316420]
    %1134 = vrot.lane.b32.xlu0 %v1133, 96
    %v1135 = vpop.permute.xlu0 %1134
    %v1136 = vsel %vm186, %v1135, 0
    %1138 = vmatpush.msra.mxu0 0.0
    %1139 = vmatpush.msra.mxu0 0.0
    %1140 = vmatpush.msra.mxu0 0.0
    %1141 = vmatpush.msra.mxu0 0.0
    %1142 = vmatpush.msra.mxu0 0.0
    %1143 = vmatpush.msra.mxu0 0.0
    %1144 = vmatpush.msra.mxu0 0.0
    %1145 = vmatpush.msra.mxu0 0.0
    %1146 = vmatpush.msra.mxu0 0.0
    %1147 = vmatpush.msra.mxu0 0.0
    %1148 = vmatpush.msra.mxu0 0.0
    %1149 = vmatpush.msra.mxu0 0.0
    %1150 = vmatpush.msra.mxu0 %v151
    %1151 = vmatpush.msra.mxu0 %v150
    %1152 = vmatpush.msra.mxu0 %v149
    %1153 = vmatpush.msra.mxu0 %v148
    %1154 = vmatmul.f32.gmra.mxu0 %v1136
    %v1155 = vpop.f32.mrf.mxu0
    %v1156 = vadd.f32 %v154, %v1155
    %1157 = vdwg.mxu0
    %v1158 = vadd.f32 %v354, %v1156
    %v1159 = vxor.u32 %v1158, 2147483648
    %v1160 = vmul.f32 %v1159, 1.442695
    %v1161 = vpow.pop %v1160
    %v1162 = vadd.f32 %v1161, 1.0
    %v1163 = vrcp.pop %v1162
    %v1164 = vmul.f32 %v1162, %v1163
    %v1165 = vsub.f32 1.0, %v1164
    %v1166 = vmul.f32 %v1163, %v1165
    %v1167 = vadd.f32 %v1163, %v1166
    %vm1168 = vweird.f32 %v1162
    %vm1169 = vweird.f32 %v1163
    %vm1170 = vmor %vm1168, %vm1169
    %v1171 = vsel %vm1170, %v1163, %v1167
    %v1172 = vand.u32 2147483647, %v1162
    %vm1173 = vcmp.eq.f32.partialorder %v1172, 8.507059e+37
    %v1174 = vand.u32 %v1162, 2147483648
    %v1175 = vor.u32 1.1754944e-38, %v1174
    %v1176 = vsel %vm1173, %v1175, %v1171
    %v1177 = vmul.f32 1.0, %v1176
    %1179 = vrot.lane.b32.xlu0 %v1156, 64
    %v1180 = vpop.permute.xlu0 %1179
    %v1182 = vmul.f32 %v1177, %v1180
    %1184 = vrot.lane.b32.xlu0 %v1182, 64
    %v1185 = vpop.permute.xlu0 %1184
    %v1187 = vadd.f32 %v354, %v1185
    %v1188 = vtanh.pop %v1187
    %v1189 = vsub.f32 1.0, %v1177
    %1191 = vrot.lane.b32.xlu0 %v1188, 96
    %v1192 = vpop.permute.xlu0 %1191
    %v1194 = vmul.f32 %v1189, %v1192
    %v1195 = vmul.f32 %v1177, %v1005
    %v1196 = vadd.f32 %v1194, %v1195
    %v1197 = vrot.slane %v1124, 4
    %v1199 = vsel %vm428, %v1196, %v1197
    %1201 = vrot.lane.b32.xlu0 %v1199, 96
    %v1202 = vpop.permute.xlu0 %1201
    %v1203 = vsel %vm186, %v1202, 0
    %1205 = vmatpush.msra.mxu0 0.0
    %1206 = vmatpush.msra.mxu0 0.0
    %1207 = vmatpush.msra.mxu0 0.0
    %1208 = vmatpush.msra.mxu0 0.0
    %1209 = vmatpush.msra.mxu0 0.0
    %1210 = vmatpush.msra.mxu0 0.0
    %1211 = vmatpush.msra.mxu0 0.0
    %1212 = vmatpush.msra.mxu0 0.0
    %1213 = vmatpush.msra.mxu0 0.0
    %1214 = vmatpush.msra.mxu0 0.0
    %1215 = vmatpush.msra.mxu0 0.0
    %1216 = vmatpush.msra.mxu0 0.0
    %1217 = vmatpush.msra.mxu0 %v162
    %1218 = vmatpush.msra.mxu0 %v160
    %1219 = vmatpush.msra.mxu0 %v158
    %1220 = vmatpush.msra.mxu0 %v156
    %1221 = vmatmul.f32.gmra.mxu0 %v1203
    %v1222 = vpop.f32.mrf.mxu0
    %v1223 = vadd.f32 0.0, %v1222
    %1224 = vdwg.mxu0
    %1225 = vmatpush.msra.mxu0 0.0
    %1226 = vmatpush.msra.mxu0 0.0
    %1227 = vmatpush.msra.mxu0 0.0
    %1228 = vmatpush.msra.mxu0 0.0
    %1229 = vmatpush.msra.mxu0 0.0
    %1230 = vmatpush.msra.mxu0 0.0
    %1231 = vmatpush.msra.mxu0 0.0
    %1232 = vmatpush.msra.mxu0 0.0
    %1233 = vmatpush.msra.mxu0 0.0
    %1234 = vmatpush.msra.mxu0 0.0
    %1235 = vmatpush.msra.mxu0 0.0
    %1236 = vmatpush.msra.mxu0 0.0
    %1237 = vmatpush.msra.mxu0 %v163
    %1238 = vmatpush.msra.mxu0 %v161
    %1239 = vmatpush.msra.mxu0 %v159
    %1240 = vmatpush.msra.mxu0 %v157
    %1241 = vmatmul.f32.gmra.mxu0 %v1203
    %v1242 = vpop.f32.mrf.mxu0
    %v1243 = vadd.f32 0.0, %v1242
    %1244 = vdwg.mxu0
    %v1245 = vadd.f32 %v1223, %v166
    %v1246 = vadd.f32 %v1223, %v477
    %v1247 = vadd.f32 %v1243, %v477
    %v1249 = vrot.slane %v1246, 4
    %1250 = vrot.lane.b32.xlu0 %v1249, 32
    %v1251 = vpop.permute.xlu0 %1250
    %v1253 = vadd.f32 %v1245, %v1251
    %v1254 = vxor.u32 %v1253, 2147483648
    %v1255 = vmul.f32 %v1254, 1.442695
    %v1256 = vpow.pop %v1255
    %v1257 = vadd.f32 %v1256, 1.0
    %v1258 = vrcp.pop %v1257
    %v1259 = vmul.f32 %v1257, %v1258
    %v1260 = vsub.f32 1.0, %v1259
    %v1261 = vmul.f32 %v1258, %v1260
    %v1262 = vadd.f32 %v1258, %v1261
    %vm1263 = vweird.f32 %v1257
    %vm1264 = vweird.f32 %v1258
    %vm1265 = vmor %vm1263, %vm1264
    %v1266 = vsel %vm1265, %v1258, %v1262
    %v1267 = vand.u32 2147483647, %v1257
    %vm1268 = vcmp.eq.f32.partialorder %v1267, 8.507059e+37
    %v1269 = vand.u32 %v1257, 2147483648
    %v1270 = vor.u32 1.1754944e-38, %v1269
    %v1271 = vsel %vm1268, %v1270, %v1266
    %v1272 = vmul.f32 1.0, %v1271
    %v1274 = vrot.slane %v1247, 4
    %1275 = vrot.lane.b32.xlu0 %v1274, 32
    %v1276 = vpop.permute.xlu0 %1275
    %v1278 = vadd.f32 %v1245, %v1276
    %v1279 = vxor.u32 %v1278, 2147483648
    %v1280 = vmul.f32 %v1279, 1.442695
    %v1281 = vpow.pop %v1280
    %v1282 = vadd.f32 %v1281, 1.0
    %v1283 = vrcp.pop %v1282
    %v1284 = vmul.f32 %v1282, %v1283
    %v1285 = vsub.f32 1.0, %v1284
    %v1286 = vmul.f32 %v1283, %v1285
    %v1287 = vadd.f32 %v1283, %v1286
    %vm1288 = vweird.f32 %v1282
    %vm1289 = vweird.f32 %v1283
    %vm1290 = vmor %vm1288, %vm1289
    %v1291 = vsel %vm1290, %v1283, %v1287
    %v1292 = vand.u32 2147483647, %v1282
    %vm1293 = vcmp.eq.f32.partialorder %v1292, 8.507059e+37
    %v1294 = vand.u32 %v1282, 2147483648
    %v1295 = vor.u32 1.1754944e-38, %v1294
    %v1296 = vsel %vm1293, %v1295, %v1291
    %v1297 = vmul.f32 1.0, %v1296
    %1298 = vrot.lane.b32.xlu0 %v1274, 96
    %v1299 = vpop.permute.xlu0 %1298
    %v1301 = vmul.f32 %v1272, %v1299
    %1303 = vrot.lane.b32.xlu0 %v1301, 64
    %v1304 = vpop.permute.xlu0 %1303
    %v1306 = vadd.f32 %v1245, %v1304
    %v1307 = vtanh.pop %v1306
    %v1308 = vsub.f32 1.0, %v1297
    %1310 = vrot.lane.b32.xlu0 %v1307, 96
    %v1311 = vpop.permute.xlu0 %1310
    %v1313 = vmul.f32 %v1308, %v1311
    %v1314 = vmul.f32 %v1297, %v1124
    %v1315 = vadd.f32 %v1313, %v1314
    %1317 = vrot.lane.b32.xlu0 %v1315, 96
    %v1318 = vpop.permute.xlu0 %1317
    %s1320 = scalar_lea.vmem [#allocation2], 16
    %1321 = vst.msk [vmem:[%s1320] sm:$0xf] %vm556, %v1318
    %1323 = vst [vmem:[#allocation1] ss:$2 sm:$0xff] %v1196
    %v1324 = vld.sshfl [vmem:[#allocation1] sm:$0xff pattern:$0x75316420]
    %1325 = vrot.lane.b32.xlu0 %v1324, 96
    %v1326 = vpop.permute.xlu0 %1325
    %v1327 = vsel %vm186, %v1326, 0
    %1329 = vmatpush.msra.mxu0 0.0
    %1330 = vmatpush.msra.mxu0 0.0
    %1331 = vmatpush.msra.mxu0 0.0
    %1332 = vmatpush.msra.mxu0 0.0
    %1333 = vmatpush.msra.mxu0 0.0
    %1334 = vmatpush.msra.mxu0 0.0
    %1335 = vmatpush.msra.mxu0 0.0
    %1336 = vmatpush.msra.mxu0 0.0
    %1337 = vmatpush.msra.mxu0 0.0
    %1338 = vmatpush.msra.mxu0 0.0
    %1339 = vmatpush.msra.mxu0 0.0
    %1340 = vmatpush.msra.mxu0 0.0
    %1341 = vmatpush.msra.mxu0 %v151
    %1342 = vmatpush.msra.mxu0 %v150
    %1343 = vmatpush.msra.mxu0 %v149
    %1344 = vmatpush.msra.mxu0 %v148
    %1345 = vmatmul.f32.gmra.mxu0 %v1327
    %v1346 = vpop.f32.mrf.mxu0
    %v1347 = vadd.f32 %v154, %v1346
    %1348 = vdwg.mxu0
    %v1349 = vadd.f32 %v355, %v1347
    %v1350 = vxor.u32 %v1349, 2147483648
    %v1351 = vmul.f32 %v1350, 1.442695
    %v1352 = vpow.pop %v1351
    %v1353 = vadd.f32 %v1352, 1.0
    %v1354 = vrcp.pop %v1353
    %v1355 = vmul.f32 %v1353, %v1354
    %v1356 = vsub.f32 1.0, %v1355
    %v1357 = vmul.f32 %v1354, %v1356
    %v1358 = vadd.f32 %v1354, %v1357
    %vm1359 = vweird.f32 %v1353
    %vm1360 = vweird.f32 %v1354
    %vm1361 = vmor %vm1359, %vm1360
    %v1362 = vsel %vm1361, %v1354, %v1358
    %v1363 = vand.u32 2147483647, %v1353
    %vm1364 = vcmp.eq.f32.partialorder %v1363, 8.507059e+37
    %v1365 = vand.u32 %v1353, 2147483648
    %v1366 = vor.u32 1.1754944e-38, %v1365
    %v1367 = vsel %vm1364, %v1366, %v1362
    %v1368 = vmul.f32 1.0, %v1367
    %1370 = vrot.lane.b32.xlu0 %v1347, 64
    %v1371 = vpop.permute.xlu0 %1370
    %v1373 = vmul.f32 %v1368, %v1371
    %1375 = vrot.lane.b32.xlu0 %v1373, 64
    %v1376 = vpop.permute.xlu0 %1375
    %v1378 = vadd.f32 %v355, %v1376
    %v1379 = vtanh.pop %v1378
    %v1380 = vsub.f32 1.0, %v1368
    %1382 = vrot.lane.b32.xlu0 %v1379, 96
    %v1383 = vpop.permute.xlu0 %1382
    %v1385 = vmul.f32 %v1380, %v1383
    %v1386 = vmul.f32 %v1368, %v1196
    %v1387 = vadd.f32 %v1385, %v1386
    %v1388 = vrot.slane %v1315, 4
    %v1390 = vsel %vm428, %v1387, %v1388
    %1392 = vrot.lane.b32.xlu0 %v1390, 96
    %v1393 = vpop.permute.xlu0 %1392
    %v1394 = vsel %vm186, %v1393, 0
    %1396 = vmatpush.msra.mxu0 0.0
    %1397 = vmatpush.msra.mxu0 0.0
    %1398 = vmatpush.msra.mxu0 0.0
    %1399 = vmatpush.msra.mxu0 0.0
    %1400 = vmatpush.msra.mxu0 0.0
    %1401 = vmatpush.msra.mxu0 0.0
    %1402 = vmatpush.msra.mxu0 0.0
    %1403 = vmatpush.msra.mxu0 0.0
    %1404 = vmatpush.msra.mxu0 0.0
    %1405 = vmatpush.msra.mxu0 0.0
    %1406 = vmatpush.msra.mxu0 0.0
    %1407 = vmatpush.msra.mxu0 0.0
    %1408 = vmatpush.msra.mxu0 %v162
    %1409 = vmatpush.msra.mxu0 %v160
    %1410 = vmatpush.msra.mxu0 %v158
    %1411 = vmatpush.msra.mxu0 %v156
    %1412 = vmatmul.f32.gmra.mxu0 %v1394
    %v1413 = vpop.f32.mrf.mxu0
    %v1414 = vadd.f32 0.0, %v1413
    %1415 = vdwg.mxu0
    %1416 = vmatpush.msra.mxu0 0.0
    %1417 = vmatpush.msra.mxu0 0.0
    %1418 = vmatpush.msra.mxu0 0.0
    %1419 = vmatpush.msra.mxu0 0.0
    %1420 = vmatpush.msra.mxu0 0.0
    %1421 = vmatpush.msra.mxu0 0.0
    %1422 = vmatpush.msra.mxu0 0.0
    %1423 = vmatpush.msra.mxu0 0.0
    %1424 = vmatpush.msra.mxu0 0.0
    %1425 = vmatpush.msra.mxu0 0.0
    %1426 = vmatpush.msra.mxu0 0.0
    %1427 = vmatpush.msra.mxu0 0.0
    %1428 = vmatpush.msra.mxu0 %v163
    %1429 = vmatpush.msra.mxu0 %v161
    %1430 = vmatpush.msra.mxu0 %v159
    %1431 = vmatpush.msra.mxu0 %v157
    %1432 = vmatmul.f32.gmra.mxu0 %v1394
    %v1433 = vpop.f32.mrf.mxu0
    %v1434 = vadd.f32 0.0, %v1433
    %1435 = vdwg.mxu0
    %v1436 = vadd.f32 %v1414, %v166
    %v1437 = vadd.f32 %v1414, %v477
    %v1438 = vadd.f32 %v1434, %v477
    %v1440 = vrot.slane %v1437, 4
    %1441 = vrot.lane.b32.xlu0 %v1440, 32
    %v1442 = vpop.permute.xlu0 %1441
    %v1444 = vadd.f32 %v1436, %v1442
    %v1445 = vxor.u32 %v1444, 2147483648
    %v1446 = vmul.f32 %v1445, 1.442695
    %v1447 = vpow.pop %v1446
    %v1448 = vadd.f32 %v1447, 1.0
    %v1449 = vrcp.pop %v1448
    %v1450 = vmul.f32 %v1448, %v1449
    %v1451 = vsub.f32 1.0, %v1450
    %v1452 = vmul.f32 %v1449, %v1451
    %v1453 = vadd.f32 %v1449, %v1452
    %vm1454 = vweird.f32 %v1448
    %vm1455 = vweird.f32 %v1449
    %vm1456 = vmor %vm1454, %vm1455
    %v1457 = vsel %vm1456, %v1449, %v1453
    %v1458 = vand.u32 2147483647, %v1448
    %vm1459 = vcmp.eq.f32.partialorder %v1458, 8.507059e+37
    %v1460 = vand.u32 %v1448, 2147483648
    %v1461 = vor.u32 1.1754944e-38, %v1460
    %v1462 = vsel %vm1459, %v1461, %v1457
    %v1463 = vmul.f32 1.0, %v1462
    %v1465 = vrot.slane %v1438, 4
    %1466 = vrot.lane.b32.xlu0 %v1465, 32
    %v1467 = vpop.permute.xlu0 %1466
    %v1469 = vadd.f32 %v1436, %v1467
    %v1470 = vxor.u32 %v1469, 2147483648
    %v1471 = vmul.f32 %v1470, 1.442695
    %v1472 = vpow.pop %v1471
    %v1473 = vadd.f32 %v1472, 1.0
    %v1474 = vrcp.pop %v1473
    %v1475 = vmul.f32 %v1473, %v1474
    %v1476 = vsub.f32 1.0, %v1475
    %v1477 = vmul.f32 %v1474, %v1476
    %v1478 = vadd.f32 %v1474, %v1477
    %vm1479 = vweird.f32 %v1473
    %vm1480 = vweird.f32 %v1474
    %vm1481 = vmor %vm1479, %vm1480
    %v1482 = vsel %vm1481, %v1474, %v1478
    %v1483 = vand.u32 2147483647, %v1473
    %vm1484 = vcmp.eq.f32.partialorder %v1483, 8.507059e+37
    %v1485 = vand.u32 %v1473, 2147483648
    %v1486 = vor.u32 1.1754944e-38, %v1485
    %v1487 = vsel %vm1484, %v1486, %v1482
    %v1488 = vmul.f32 1.0, %v1487
    %1489 = vrot.lane.b32.xlu0 %v1465, 96
    %v1490 = vpop.permute.xlu0 %1489
    %v1492 = vmul.f32 %v1463, %v1490
    %1494 = vrot.lane.b32.xlu0 %v1492, 64
    %v1495 = vpop.permute.xlu0 %1494
    %v1497 = vadd.f32 %v1436, %v1495
    %v1498 = vtanh.pop %v1497
    %v1499 = vsub.f32 1.0, %v1488
    %1501 = vrot.lane.b32.xlu0 %v1498, 96
    %v1502 = vpop.permute.xlu0 %1501
    %v1504 = vmul.f32 %v1499, %v1502
    %v1505 = vmul.f32 %v1488, %v1315
    %v1506 = vadd.f32 %v1504, %v1505
    %1508 = vrot.lane.b32.xlu0 %v1506, 96
    %v1509 = vpop.permute.xlu0 %1508
    %s1511 = scalar_lea.vmem [#allocation2], 20
    %1512 = vst.msk [vmem:[%s1511] sm:$0xf] %vm556, %v1509
    %1514 = vst [vmem:[#allocation1] ss:$2 sm:$0xff] %v1387
    %v1515 = vld.sshfl [vmem:[#allocation1] sm:$0xff pattern:$0x75316420]
    %1516 = vrot.lane.b32.xlu0 %v1515, 96
    %v1517 = vpop.permute.xlu0 %1516
    %v1518 = vsel %vm186, %v1517, 0
    %1520 = vmatpush.msra.mxu0 0.0
    %1521 = vmatpush.msra.mxu0 0.0
    %1522 = vmatpush.msra.mxu0 0.0
    %1523 = vmatpush.msra.mxu0 0.0
    %1524 = vmatpush.msra.mxu0 0.0
    %1525 = vmatpush.msra.mxu0 0.0
    %1526 = vmatpush.msra.mxu0 0.0
    %1527 = vmatpush.msra.mxu0 0.0
    %1528 = vmatpush.msra.mxu0 0.0
    %1529 = vmatpush.msra.mxu0 0.0
    %1530 = vmatpush.msra.mxu0 0.0
    %1531 = vmatpush.msra.mxu0 0.0
    %1532 = vmatpush.msra.mxu0 %v151
    %1533 = vmatpush.msra.mxu0 %v150
    %1534 = vmatpush.msra.mxu0 %v149
    %1535 = vmatpush.msra.mxu0 %v148
    %1536 = vmatmul.f32.gmra.mxu0 %v1518
    %v1537 = vpop.f32.mrf.mxu0
    %v1538 = vadd.f32 %v154, %v1537
    %1539 = vdwg.mxu0
    %v1540 = vadd.f32 %v356, %v1538
    %v1541 = vxor.u32 %v1540, 2147483648
    %v1542 = vmul.f32 %v1541, 1.442695
    %v1543 = vpow.pop %v1542
    %v1544 = vadd.f32 %v1543, 1.0
    %v1545 = vrcp.pop %v1544
    %v1546 = vmul.f32 %v1544, %v1545
    %v1547 = vsub.f32 1.0, %v1546
    %v1548 = vmul.f32 %v1545, %v1547
    %v1549 = vadd.f32 %v1545, %v1548
    %vm1550 = vweird.f32 %v1544
    %vm1551 = vweird.f32 %v1545
    %vm1552 = vmor %vm1550, %vm1551
    %v1553 = vsel %vm1552, %v1545, %v1549
    %v1554 = vand.u32 2147483647, %v1544
    %vm1555 = vcmp.eq.f32.partialorder %v1554, 8.507059e+37
    %v1556 = vand.u32 %v1544, 2147483648
    %v1557 = vor.u32 1.1754944e-38, %v1556
    %v1558 = vsel %vm1555, %v1557, %v1553
    %v1559 = vmul.f32 1.0, %v1558
    %1561 = vrot.lane.b32.xlu0 %v1538, 64
    %v1562 = vpop.permute.xlu0 %1561
    %v1564 = vmul.f32 %v1559, %v1562
    %1566 = vrot.lane.b32.xlu0 %v1564, 64
    %v1567 = vpop.permute.xlu0 %1566
    %v1569 = vadd.f32 %v356, %v1567
    %v1570 = vtanh.pop %v1569
    %v1571 = vsub.f32 1.0, %v1559
    %1573 = vrot.lane.b32.xlu0 %v1570, 96
    %v1574 = vpop.permute.xlu0 %1573
    %v1576 = vmul.f32 %v1571, %v1574
    %v1577 = vmul.f32 %v1559, %v1387
    %v1578 = vadd.f32 %v1576, %v1577
    %v1579 = vrot.slane %v1506, 4
    %v1581 = vsel %vm428, %v1578, %v1579
    %1583 = vrot.lane.b32.xlu0 %v1581, 96
    %v1584 = vpop.permute.xlu0 %1583
    %v1585 = vsel %vm186, %v1584, 0
    %1587 = vmatpush.msra.mxu0 0.0
    %1588 = vmatpush.msra.mxu0 0.0
    %1589 = vmatpush.msra.mxu0 0.0
    %1590 = vmatpush.msra.mxu0 0.0
    %1591 = vmatpush.msra.mxu0 0.0
    %1592 = vmatpush.msra.mxu0 0.0
    %1593 = vmatpush.msra.mxu0 0.0
    %1594 = vmatpush.msra.mxu0 0.0
    %1595 = vmatpush.msra.mxu0 0.0
    %1596 = vmatpush.msra.mxu0 0.0
    %1597 = vmatpush.msra.mxu0 0.0
    %1598 = vmatpush.msra.mxu0 0.0
    %1599 = vmatpush.msra.mxu0 %v162
    %1600 = vmatpush.msra.mxu0 %v160
    %1601 = vmatpush.msra.mxu0 %v158
    %1602 = vmatpush.msra.mxu0 %v156
    %1603 = vmatmul.f32.gmra.mxu0 %v1585
    %v1604 = vpop.f32.mrf.mxu0
    %v1605 = vadd.f32 0.0, %v1604
    %1606 = vdwg.mxu0
    %1607 = vmatpush.msra.mxu0 0.0
    %1608 = vmatpush.msra.mxu0 0.0
    %1609 = vmatpush.msra.mxu0 0.0
    %1610 = vmatpush.msra.mxu0 0.0
    %1611 = vmatpush.msra.mxu0 0.0
    %1612 = vmatpush.msra.mxu0 0.0
    %1613 = vmatpush.msra.mxu0 0.0
    %1614 = vmatpush.msra.mxu0 0.0
    %1615 = vmatpush.msra.mxu0 0.0
    %1616 = vmatpush.msra.mxu0 0.0
    %1617 = vmatpush.msra.mxu0 0.0
    %1618 = vmatpush.msra.mxu0 0.0
    %1619 = vmatpush.msra.mxu0 %v163
    %1620 = vmatpush.msra.mxu0 %v161
    %1621 = vmatpush.msra.mxu0 %v159
    %1622 = vmatpush.msra.mxu0 %v157
    %1623 = vmatmul.f32.gmra.mxu0 %v1585
    %v1624 = vpop.f32.mrf.mxu0
    %v1625 = vadd.f32 0.0, %v1624
    %1626 = vdwg.mxu0
    %v1627 = vadd.f32 %v1605, %v166
    %v1628 = vadd.f32 %v1605, %v477
    %v1629 = vadd.f32 %v1625, %v477
    %v1631 = vrot.slane %v1628, 4
    %1632 = vrot.lane.b32.xlu0 %v1631, 32
    %v1633 = vpop.permute.xlu0 %1632
    %v1635 = vadd.f32 %v1627, %v1633
    %v1636 = vxor.u32 %v1635, 2147483648
    %v1637 = vmul.f32 %v1636, 1.442695
    %v1638 = vpow.pop %v1637
    %v1639 = vadd.f32 %v1638, 1.0
    %v1640 = vrcp.pop %v1639
    %v1641 = vmul.f32 %v1639, %v1640
    %v1642 = vsub.f32 1.0, %v1641
    %v1643 = vmul.f32 %v1640, %v1642
    %v1644 = vadd.f32 %v1640, %v1643
    %vm1645 = vweird.f32 %v1639
    %vm1646 = vweird.f32 %v1640
    %vm1647 = vmor %vm1645, %vm1646
    %v1648 = vsel %vm1647, %v1640, %v1644
    %v1649 = vand.u32 2147483647, %v1639
    %vm1650 = vcmp.eq.f32.partialorder %v1649, 8.507059e+37
    %v1651 = vand.u32 %v1639, 2147483648
    %v1652 = vor.u32 1.1754944e-38, %v1651
    %v1653 = vsel %vm1650, %v1652, %v1648
    %v1654 = vmul.f32 1.0, %v1653
    %v1656 = vrot.slane %v1629, 4
    %1657 = vrot.lane.b32.xlu0 %v1656, 32
    %v1658 = vpop.permute.xlu0 %1657
    %v1660 = vadd.f32 %v1627, %v1658
    %v1661 = vxor.u32 %v1660, 2147483648
    %v1662 = vmul.f32 %v1661, 1.442695
    %v1663 = vpow.pop %v1662
    %v1664 = vadd.f32 %v1663, 1.0
    %v1665 = vrcp.pop %v1664
    %v1666 = vmul.f32 %v1664, %v1665
    %v1667 = vsub.f32 1.0, %v1666
    %v1668 = vmul.f32 %v1665, %v1667
    %v1669 = vadd.f32 %v1665, %v1668
    %vm1670 = vweird.f32 %v1664
    %vm1671 = vweird.f32 %v1665
    %vm1672 = vmor %vm1670, %vm1671
    %v1673 = vsel %vm1672, %v1665, %v1669
    %v1674 = vand.u32 2147483647, %v1664
    %vm1675 = vcmp.eq.f32.partialorder %v1674, 8.507059e+37
    %v1676 = vand.u32 %v1664, 2147483648
    %v1677 = vor.u32 1.1754944e-38, %v1676
    %v1678 = vsel %vm1675, %v1677, %v1673
    %v1679 = vmul.f32 1.0, %v1678
    %1680 = vrot.lane.b32.xlu0 %v1656, 96
    %v1681 = vpop.permute.xlu0 %1680
    %v1683 = vmul.f32 %v1654, %v1681
    %1685 = vrot.lane.b32.xlu0 %v1683, 64
    %v1686 = vpop.permute.xlu0 %1685
    %v1688 = vadd.f32 %v1627, %v1686
    %v1689 = vtanh.pop %v1688
    %v1690 = vsub.f32 1.0, %v1679
    %1692 = vrot.lane.b32.xlu0 %v1689, 96
    %v1693 = vpop.permute.xlu0 %1692
    %v1695 = vmul.f32 %v1690, %v1693
    %v1696 = vmul.f32 %v1679, %v1506
    %v1697 = vadd.f32 %v1695, %v1696
    %1699 = vrot.lane.b32.xlu0 %v1697, 96
    %v1700 = vpop.permute.xlu0 %1699
    %s1702 = scalar_lea.vmem [#allocation2], 24
    %1703 = vst.msk [vmem:[%s1702] sm:$0xf] %vm556, %v1700
    %1705 = vst [vmem:[#allocation1] ss:$2 sm:$0xff] %v1578
    %v1706 = vld.sshfl [vmem:[#allocation1] sm:$0xff pattern:$0x75316420]
    %1707 = vrot.lane.b32.xlu0 %v1706, 96
    %v1708 = vpop.permute.xlu0 %1707
    %v1709 = vsel %vm186, %v1708, 0
    %1711 = vmatpush.msra.mxu0 0.0
    %1712 = vmatpush.msra.mxu0 0.0
    %1713 = vmatpush.msra.mxu0 0.0
    %1714 = vmatpush.msra.mxu0 0.0
    %1715 = vmatpush.msra.mxu0 0.0
    %1716 = vmatpush.msra.mxu0 0.0
    %1717 = vmatpush.msra.mxu0 0.0
    %1718 = vmatpush.msra.mxu0 0.0
    %1719 = vmatpush.msra.mxu0 0.0
    %1720 = vmatpush.msra.mxu0 0.0
    %1721 = vmatpush.msra.mxu0 0.0
    %1722 = vmatpush.msra.mxu0 0.0
    %1723 = vmatpush.msra.mxu0 %v151
    %1724 = vmatpush.msra.mxu0 %v150
    %1725 = vmatpush.msra.mxu0 %v149
    %1726 = vmatpush.msra.mxu0 %v148
    %1727 = vmatmul.f32.gmra.mxu0 %v1709
    %v1728 = vpop.f32.mrf.mxu0
    %v1729 = vadd.f32 %v154, %v1728
    %1730 = vdwg.mxu0
    %v1731 = vadd.f32 %v357, %v1729
    %v1732 = vxor.u32 %v1731, 2147483648
    %v1733 = vmul.f32 %v1732, 1.442695
    %v1734 = vpow.pop %v1733
    %v1735 = vadd.f32 %v1734, 1.0
    %v1736 = vrcp.pop %v1735
    %v1737 = vmul.f32 %v1735, %v1736
    %v1738 = vsub.f32 1.0, %v1737
    %v1739 = vmul.f32 %v1736, %v1738
    %v1740 = vadd.f32 %v1736, %v1739
    %vm1741 = vweird.f32 %v1735
    %vm1742 = vweird.f32 %v1736
    %vm1743 = vmor %vm1741, %vm1742
    %v1744 = vsel %vm1743, %v1736, %v1740
    %v1745 = vand.u32 2147483647, %v1735
    %vm1746 = vcmp.eq.f32.partialorder %v1745, 8.507059e+37
    %v1747 = vand.u32 %v1735, 2147483648
    %v1748 = vor.u32 1.1754944e-38, %v1747
    %v1749 = vsel %vm1746, %v1748, %v1744
    %v1750 = vmul.f32 1.0, %v1749
    %1752 = vrot.lane.b32.xlu0 %v1729, 64
    %v1753 = vpop.permute.xlu0 %1752
    %v1755 = vmul.f32 %v1750, %v1753
    %1757 = vrot.lane.b32.xlu0 %v1755, 64
    %v1758 = vpop.permute.xlu0 %1757
    %v1760 = vadd.f32 %v357, %v1758
    %v1761 = vtanh.pop %v1760
    %v1762 = vsub.f32 1.0, %v1750
    %1764 = vrot.lane.b32.xlu0 %v1761, 96
    %v1765 = vpop.permute.xlu0 %1764
    %v1767 = vmul.f32 %v1762, %v1765
    %v1768 = vmul.f32 %v1750, %v1578
    %v1769 = vadd.f32 %v1767, %v1768
    %v1770 = vrot.slane %v1697, 4
    %v1772 = vsel %vm428, %v1769, %v1770
    %1774 = vrot.lane.b32.xlu0 %v1772, 96
    %v1775 = vpop.permute.xlu0 %1774
    %v1776 = vsel %vm186, %v1775, 0
    %1778 = vmatpush.msra.mxu0 0.0
    %1779 = vmatpush.msra.mxu0 0.0
    %1780 = vmatpush.msra.mxu0 0.0
    %1781 = vmatpush.msra.mxu0 0.0
    %1782 = vmatpush.msra.mxu0 0.0
    %1783 = vmatpush.msra.mxu0 0.0
    %1784 = vmatpush.msra.mxu0 0.0
    %1785 = vmatpush.msra.mxu0 0.0
    %1786 = vmatpush.msra.mxu0 0.0
    %1787 = vmatpush.msra.mxu0 0.0
    %1788 = vmatpush.msra.mxu0 0.0
    %1789 = vmatpush.msra.mxu0 0.0
    %1790 = vmatpush.msra.mxu0 %v162
    %1791 = vmatpush.msra.mxu0 %v160
    %1792 = vmatpush.msra.mxu0 %v158
    %1793 = vmatpush.msra.mxu0 %v156
    %1794 = vmatmul.f32.gmra.mxu0 %v1776
    %v1795 = vpop.f32.mrf.mxu0
    %v1796 = vadd.f32 0.0, %v1795
    %1797 = vdwg.mxu0
    %1798 = vmatpush.msra.mxu0 0.0
    %1799 = vmatpush.msra.mxu0 0.0
    %1800 = vmatpush.msra.mxu0 0.0
    %1801 = vmatpush.msra.mxu0 0.0
    %1802 = vmatpush.msra.mxu0 0.0
    %1803 = vmatpush.msra.mxu0 0.0
    %1804 = vmatpush.msra.mxu0 0.0
    %1805 = vmatpush.msra.mxu0 0.0
    %1806 = vmatpush.msra.mxu0 0.0
    %1807 = vmatpush.msra.mxu0 0.0
    %1808 = vmatpush.msra.mxu0 0.0
    %1809 = vmatpush.msra.mxu0 0.0
    %1810 = vmatpush.msra.mxu0 %v163
    %1811 = vmatpush.msra.mxu0 %v161
    %1812 = vmatpush.msra.mxu0 %v159
    %1813 = vmatpush.msra.mxu0 %v157
    %1814 = vmatmul.f32.gmra.mxu0 %v1776
    %v1815 = vpop.f32.mrf.mxu0
    %v1816 = vadd.f32 0.0, %v1815
    %1817 = vdwg.mxu0
    %v1818 = vadd.f32 %v1796, %v166
    %v1819 = vadd.f32 %v1796, %v477
    %v1820 = vadd.f32 %v1816, %v477
    %v1822 = vrot.slane %v1819, 4
    %1823 = vrot.lane.b32.xlu0 %v1822, 32
    %v1824 = vpop.permute.xlu0 %1823
    %v1826 = vadd.f32 %v1818, %v1824
    %v1827 = vxor.u32 %v1826, 2147483648
    %v1828 = vmul.f32 %v1827, 1.442695
    %v1829 = vpow.pop %v1828
    %v1830 = vadd.f32 %v1829, 1.0
    %v1831 = vrcp.pop %v1830
    %v1832 = vmul.f32 %v1830, %v1831
    %v1833 = vsub.f32 1.0, %v1832
    %v1834 = vmul.f32 %v1831, %v1833
    %v1835 = vadd.f32 %v1831, %v1834
    %vm1836 = vweird.f32 %v1830
    %vm1837 = vweird.f32 %v1831
    %vm1838 = vmor %vm1836, %vm1837
    %v1839 = vsel %vm1838, %v1831, %v1835
    %v1840 = vand.u32 2147483647, %v1830
    %vm1841 = vcmp.eq.f32.partialorder %v1840, 8.507059e+37
    %v1842 = vand.u32 %v1830, 2147483648
    %v1843 = vor.u32 1.1754944e-38, %v1842
    %v1844 = vsel %vm1841, %v1843, %v1839
    %v1845 = vmul.f32 1.0, %v1844
    %v1847 = vrot.slane %v1820, 4
    %1848 = vrot.lane.b32.xlu0 %v1847, 32
    %v1849 = vpop.permute.xlu0 %1848
    %v1851 = vadd.f32 %v1818, %v1849
    %v1852 = vxor.u32 %v1851, 2147483648
    %v1853 = vmul.f32 %v1852, 1.442695
    %v1854 = vpow.pop %v1853
    %v1855 = vadd.f32 %v1854, 1.0
    %v1856 = vrcp.pop %v1855
    %v1857 = vmul.f32 %v1855, %v1856
    %v1858 = vsub.f32 1.0, %v1857
    %v1859 = vmul.f32 %v1856, %v1858
    %v1860 = vadd.f32 %v1856, %v1859
    %vm1861 = vweird.f32 %v1855
    %vm1862 = vweird.f32 %v1856
    %vm1863 = vmor %vm1861, %vm1862
    %v1864 = vsel %vm1863, %v1856, %v1860
    %v1865 = vand.u32 2147483647, %v1855
    %vm1866 = vcmp.eq.f32.partialorder %v1865, 8.507059e+37
    %v1867 = vand.u32 %v1855, 2147483648
    %v1868 = vor.u32 1.1754944e-38, %v1867
    %v1869 = vsel %vm1866, %v1868, %v1864
    %v1870 = vmul.f32 1.0, %v1869
    %1871 = vrot.lane.b32.xlu0 %v1847, 96
    %v1872 = vpop.permute.xlu0 %1871
    %v1874 = vmul.f32 %v1845, %v1872
    %1876 = vrot.lane.b32.xlu0 %v1874, 64
    %v1877 = vpop.permute.xlu0 %1876
    %v1879 = vadd.f32 %v1818, %v1877
    %v1880 = vtanh.pop %v1879
    %v1881 = vsub.f32 1.0, %v1870
    %1883 = vrot.lane.b32.xlu0 %v1880, 96
    %v1884 = vpop.permute.xlu0 %1883
    %v1886 = vmul.f32 %v1881, %v1884
    %v1887 = vmul.f32 %v1870, %v1697
    %v1888 = vadd.f32 %v1886, %v1887
    %1890 = vrot.lane.b32.xlu0 %v1888, 96
    %v1891 = vpop.permute.xlu0 %1890
    %s1893 = scalar_lea.vmem [#allocation2], 28
    %1894 = vst.msk [vmem:[%s1893] sm:$0xf] %vm556, %v1891
    %v1895 = vld [vmem:[#allocation2] sm:$0xf]
    %v1896 = vld [vmem:[#allocation2 + $0x4] sm:$0xf]
    %v1897 = vld [vmem:[#allocation2 + $0x8] sm:$0xf]
    %v1898 = vld [vmem:[#allocation2 + $0xc] sm:$0xf]
    %v1899 = vld [vmem:[#allocation2 + $0x10] sm:$0xf]
    %v1900 = vld [vmem:[#allocation2 + $0x14] sm:$0xf]
    %v1901 = vld [vmem:[#allocation2 + $0x18] sm:$0xf]
    %v1902 = vld [vmem:[#allocation2 + $0x1c] sm:$0xf]
    %v1904 = vperm.slane %v175, 0
    %1914 = vst [vmem:[#allocation1] ss:$2 sm:$0xff] %v1895
    %s1915 = scalar_lea.vmem [#allocation1], 1
    %1916 = vst [vmem:[%s1915] ss:$2 sm:$0xff] %v1896
    %s1917 = scalar_lea.vmem [#allocation1], 16
    %1918 = vst [vmem:[%s1917] ss:$2 sm:$0xff] %v1897
    %s1919 = scalar_lea.vmem [#allocation1], 17
    %1920 = vst [vmem:[%s1919] ss:$2 sm:$0xff] %v1898
    %s1921 = scalar_lea.vmem [#allocation1], 32
    %1922 = vst [vmem:[%s1921] ss:$2 sm:$0xff] %v1899
    %s1923 = scalar_lea.vmem [#allocation1], 33
    %1924 = vst [vmem:[%s1923] ss:$2 sm:$0xff] %v1900
    %s1925 = scalar_lea.vmem [#allocation1], 48
    %1926 = vst [vmem:[%s1925] ss:$2 sm:$0xff] %v1901
    %s1927 = scalar_lea.vmem [#allocation1], 49
    %1928 = vst [vmem:[%s1927] ss:$2 sm:$0xff] %v1902
    %v1929 = vld.sshfl [vmem:[#allocation1] sm:$0xff pattern:$0x75316420]
    %v1930 = vld.sshfl [vmem:[#allocation1 + $0x10] sm:$0xff pattern:$0x75316420]
    %v1931 = vld.sshfl [vmem:[#allocation1 + $0x20] sm:$0xff pattern:$0x75316420]
    %v1932 = vld.sshfl [vmem:[#allocation1 + $0x30] sm:$0xff pattern:$0x75316420]
    %v1933 = vsel %vm186, %v1929, 0
    %v1935 = vsel %vm186, %v1930, 0
    %v1937 = vsel %vm186, %v1931, 0
    %v1939 = vsel %vm186, %v1932, 0
    %1941 = vmatpush.msra.mxu0 0.0
    %1942 = vmatpush.msra.mxu0 0.0
    %1943 = vmatpush.msra.mxu0 0.0
    %1944 = vmatpush.msra.mxu0 0.0
    %1945 = vmatpush.msra.mxu0 0.0
    %1946 = vmatpush.msra.mxu0 0.0
    %1947 = vmatpush.msra.mxu0 0.0
    %1948 = vmatpush.msra.mxu0 0.0
    %1949 = vmatpush.msra.mxu0 0.0
    %1950 = vmatpush.msra.mxu0 0.0
    %1951 = vmatpush.msra.mxu0 0.0
    %1952 = vmatpush.msra.mxu0 0.0
    %1953 = vmatpush.msra.mxu0 %v174
    %1954 = vmatpush.msra.mxu0 %v173
    %1955 = vmatpush.msra.mxu0 %v172
    %1956 = vmatpush.msra.mxu0 %v171
    %1957 = vmatmul.f32.gmra.mxu0 %v1933
    %v1958 = vpop.f32.mrf.mxu0
    %v1959 = vadd.f32 %v1904, %v1958
    %1960 = vmatmul.f32.gmra.mxu0 %v1935
    %v1961 = vpop.f32.mrf.mxu0
    %v1962 = vadd.f32 %v1904, %v1961
    %1963 = vmatmul.f32.gmra.mxu0 %v1937
    %v1964 = vpop.f32.mrf.mxu0
    %v1965 = vadd.f32 %v1904, %v1964
    %1966 = vmatmul.f32.gmra.mxu0 %v1939
    %v1967 = vpop.f32.mrf.mxu0
    %v1968 = vadd.f32 %v1904, %v1967
    %1969 = vdwg.mxu0
    %v1974 = vrot.slane %v1959, 4
    %v1975 = vrot.slane %v1962, 4
    %v1976 = vrot.slane %v1965, 4
    %v1977 = vrot.slane %v1968, 4
    %v1982 = vrot.slane %v1962, 4
    %v1983 = vsel %vm215, %v1982, %v1959
    %v1985 = vunpack.c.l.s4 1983009808
    %v1986 = vunpack.c.0.s8 %v1985
    %v1987 = vperm.slane %v1983, %v1986
    %v1988 = vrot.slane %v1975, 4
    %v1989 = vsel %vm215, %v1988, %v1974
    %v1991 = vunpack.c.l.s4 1983009808
    %v1992 = vunpack.c.0.s8 %v1991
    %v1993 = vperm.slane %v1989, %v1992
    %v1994 = vrot.slane %v1993, 4
    %v1995 = vsel %vm215, %v1994, %v1987
    %v1996 = vrot.slane %v1987, 4
    %v1997 = vsel %vm215, %v1993, %v1996
    %v1999 = vunpack.c.l.s4 1934713408
    %v2000 = vunpack.c.0.s8 %v1999
    %v2001 = vperm.slane %v1995, %v2000
    %v2003 = vunpack.c.l.s4 1934713408
    %v2004 = vunpack.c.0.s8 %v2003
    %v2005 = vperm.slane %v1997, %v2004
    %v2006 = vrot.slane %v2001, 4
    %v2007 = vsel %vm215, 0.0, %v2006
    %v2008 = vrot.slane %v2005, 4
    %v2009 = vsel %vm215, 0.0, %v2008
    %v2010 = vrot.slane %v1968, 4
    %v2011 = vsel %vm215, %v2010, %v1965
    %v2013 = vunpack.c.l.s4 1983009808
    %v2014 = vunpack.c.0.s8 %v2013
    %v2015 = vperm.slane %v2011, %v2014
    %v2016 = vrot.slane %v1977, 4
    %v2017 = vsel %vm215, %v2016, %v1976
    %v2019 = vunpack.c.l.s4 1983009808
    %v2020 = vunpack.c.0.s8 %v2019
    %v2021 = vperm.slane %v2017, %v2020
    %v2022 = vrot.slane %v2021, 4
    %v2023 = vsel %vm215, %v2022, %v2015
    %v2024 = vrot.slane %v2015, 4
    %v2025 = vsel %vm215, %v2021, %v2024
    %v2027 = vunpack.c.l.s4 1934713408
    %v2028 = vunpack.c.0.s8 %v2027
    %v2029 = vperm.slane %v2023, %v2028
    %v2031 = vunpack.c.l.s4 1934713408
    %v2032 = vunpack.c.0.s8 %v2031
    %v2033 = vperm.slane %v2025, %v2032
    %v2034 = vrot.slane %v2029, 4
    %v2035 = vsel %vm215, 0.0, %v2034
    %v2036 = vrot.slane %v2033, 4
    %v2037 = vsel %vm215, 0.0, %v2036
    %2046 = vst [vmem:[#allocation1] ss:$2 sm:$0xff] %v2001
    %s2047 = scalar_lea.vmem [#allocation1], 1
    %2048 = vst [vmem:[%s2047] ss:$2 sm:$0xff] %v2029
    %v2049 = vld.sshfl [vmem:[#allocation1] sm:$0xff pattern:$0x75316420]
    %s2050 = scalar_lea.vmem [#allocation1], 16
    %2051 = vst [vmem:[%s2050] ss:$2 sm:$0xff] %v2007
    %s2052 = scalar_lea.vmem [#allocation1], 17
    %2053 = vst [vmem:[%s2052] ss:$2 sm:$0xff] %v2035
    %v2054 = vld.sshfl [vmem:[#allocation1 + $0x10] sm:$0xff pattern:$0x75316420]
    %s2055 = scalar_lea.vmem [#allocation1], 32
    %2056 = vst [vmem:[%s2055] ss:$2 sm:$0xff] %v2005
    %s2057 = scalar_lea.vmem [#allocation1], 33
    %2058 = vst [vmem:[%s2057] ss:$2 sm:$0xff] %v2033
    %v2059 = vld.sshfl [vmem:[#allocation1 + $0x20] sm:$0xff pattern:$0x75316420]
    %s2060 = scalar_lea.vmem [#allocation1], 48
    %2061 = vst [vmem:[%s2060] ss:$2 sm:$0xff] %v2009
    %s2062 = scalar_lea.vmem [#allocation1], 49
    %2063 = vst [vmem:[%s2062] ss:$2 sm:$0xff] %v2037
    %v2064 = vld.sshfl [vmem:[#allocation1 + $0x30] sm:$0xff pattern:$0x75316420]
    %vm2069 = vcmask 64512
    %2070 = vst.msk [vmem:[#allocation15] sm:$0xff] %vm2069, %v2049
    %2071 = vst.msk [vmem:[#allocation15 + $0x8] sm:$0xff] %vm2069, %v2054
    %2072 = vst.msk [vmem:[#allocation15 + $0x10] sm:$0xff] %vm2069, %v2059
    %2073 = vst.msk [vmem:[#allocation15 + $0x18] sm:$0xff] %vm2069, %v2064
    %2075 = vst [vmem:[#allocation1] ss:$2 sm:$0xff] %v1769
    %v2076 = vld.sshfl [vmem:[#allocation1] sm:$0xff pattern:$0x75316420]
    %2077 = vrot.lane.b32.xlu0 %v2076, 96
    %v2078 = vpop.permute.xlu0 %2077
    %2080 = vst.msk [vmem:[#allocation16] sm:$0xf] %vm556, %v2078
    %s2081 = scalar_lea.vmem [#allocation16], 4
    %2082 = vst.msk [vmem:[%s2081] sm:$0xf] %vm556, %v1891
    // Predicated region
    $region78: #{tpu_custom_call.1} parent=1 // pred_check
      _
    $region79: #{tpu_custom_call.1} parent=1 // pred_check_branch
      %2084 = sbr.rel (0) target = $region81
    $region80: #{tpu_custom_call.1} parent=1 // pred_region
      %2086 = vsyncadd [#allocation5], 0
      %s2087 = sshll.u32 [#allocation15], 4
      %s2088 = int_to_ptr.vmem [resolvable:$true] %s2087
      %s2089 = sshll.u32 %s12, 4
      %s2090 = int_to_ptr.hbm [resolvable:$true] %s2089
      %2095 = dma.vmem_to_hbm [thread:$0]  %s2088, 512, %s2090, [#allocation5], 128, 128, 8
    $region81: #{tpu_custom_call.1} parent=1 // pred_fallthru
      _
    // Predicated region
    $region82: #{tpu_custom_call.1} parent=1 // pred_check
      _
    $region83: #{tpu_custom_call.1} parent=1 // pred_check_branch
      %2097 = sbr.rel (0) target = $region85
    $region84: #{tpu_custom_call.1} parent=1 // pred_region
      %2099 = vsyncadd [#allocation17], 0
      %s2100 = sshll.u32 [#allocation16], 4
      %s2101 = int_to_ptr.vmem [resolvable:$true] %s2100
      %s2102 = sshll.u32 %s13, 4
      %s2103 = int_to_ptr.hbm [resolvable:$true] %s2102
      %2108 = dma.vmem_to_hbm [thread:$0]  %s2101, 128, %s2103, [#allocation17], 64, 64, 4
    $region85: #{tpu_custom_call.1} parent=1 // pred_fallthru
      _
    // Predicated region
    $region86: #{tpu_custom_call.1} parent=1 // pred_check
      _
    $region87: #{tpu_custom_call.1} parent=1 // pred_check_branch
      %2110 = sbr.rel (0) target = $region89
    $region88: #{tpu_custom_call.1} parent=1 // pred_region
      %2112 = dma.done [#allocation5], 512
    $region89: #{tpu_custom_call.1} parent=1 // pred_fallthru
      _
    // Predicated region
    $region90: #{tpu_custom_call.1} parent=1 // pred_check
      _
    $region91: #{tpu_custom_call.1} parent=1 // pred_check_branch
      %2114 = sbr.rel (0) target = $region93
    $region92: #{tpu_custom_call.1} parent=1 // pred_region
      %2116 = dma.done [#allocation17], 128
    $region93: #{tpu_custom_call.1} parent=1 // pred_fallthru
      _
    %2117 = vsyncpa [#allocation4], 1
    %2118 = vsyncpa [#allocation7], 1
    %2119 = vsyncpa [#allocation10], 1
    %2120 = vsyncpa [#allocation13], 1
    %2121 = vsyncpa [#allocation5], 1
    %2122 = vsyncpa [#allocation17], 1

</llo_original>
